<compile_context>
chip_gen: v7x
topology: tpu7x:2x2x1
jax: 0.10.0
libtpu: 0.0.40
codegen_flags: <defaults>
</compile_context>

<pallas_src>
import functools
import math

import jax
import jax.numpy as jnp
from jax.experimental import pallas as pl
from jax.experimental.pallas import tpu as pltpu  # noqa: F401  (TPU backend)

MXU_DTYPE = jnp.bfloat16       # matmul-operand dtype; accumulation stays f32
LN_EPS = 1e-5


def _mxu(a, b):
    """2-D matmul on the MXU: bf16 operands, f32 accumulation."""
    return jnp.dot(a.astype(MXU_DTYPE), b.astype(MXU_DTYPE),
                   preferred_element_type=jnp.float32)


def _layernorm(s, g, b):
    mu = jnp.mean(s, axis=-1, keepdims=True)
    var = jnp.mean(jnp.square(s - mu), axis=-1, keepdims=True)
    return (s - mu) * jax.lax.rsqrt(var + LN_EPS) * g + b


def fused_kernel(src_ref, pos_ref,
                 wqkv_ref, bqkv_ref, wo_ref, bo_ref,
                 g1_ref, be1_ref, w1_ref, b1_ref, w2_ref, b2_ref,
                 g2_ref, be2_ref,
                 fw1_ref, fb1_ref, fw2_ref, fb2_ref,
                 out_ref, *, nhead):
    B, L, _ = src_ref.shape
    n_layer, D, _ = wo_ref.shape
    d_k = D // nhead
    scale = 1.0 / math.sqrt(d_k)

    # ---- input concat: (B,L,vis) ++ (B,L,pos) -> (B*L, D), all in VMEM ----
    x3 = jnp.concatenate([src_ref[...], pos_ref[...]], axis=-1).astype(jnp.float32)
    x = x3.reshape(B * L, D)

    cats = []
    for li in range(n_layer):                       # static unroll (n_layer small)
        wo_l = wo_ref[li]                           # (D, D)

        # -- packed Q/K/V projection: one (B*L, D) x (D, 3D) MXU op --
        qkv = _mxu(x, wqkv_ref[li]) + bqkv_ref[li]  # (B*L, 3D) f32

        # -- per-head attention; head concat folded into W_O (no lane concat) --
        attn = jnp.zeros((B * L, D), jnp.float32)
        for h in range(nhead):                      # static unroll
            o = h * d_k
            qs = qkv[:, o:o + d_k].reshape(B, L, d_k)
            ks = qkv[:, D + o:D + o + d_k].reshape(B, L, d_k)
            vs = qkv[:, 2 * D + o:2 * D + o + d_k].reshape(B, L, d_k)

            s = jnp.einsum('bld,bmd->blm',
                           qs.astype(MXU_DTYPE), ks.astype(MXU_DTYPE),
                           preferred_element_type=jnp.float32) * scale
            s = s - jnp.max(s, axis=-1, keepdims=True)
            e = jnp.exp(s)
            p = e * pl.reciprocal(jnp.sum(e, axis=-1, keepdims=True), approx=True)

            ctx = jnp.einsum('blm,bmd->bld',
                             p.astype(MXU_DTYPE), vs.astype(MXU_DTYPE),
                             preferred_element_type=jnp.float32)
            # fold this head straight into the output projection
            attn = attn + _mxu(ctx.reshape(B * L, d_k), wo_l[o:o + d_k, :])
        attn = attn + bo_ref[li]

        # -- residual + LayerNorm 1 --
        x = _layernorm(x + attn, g1_ref[li], be1_ref[li])

        # -- MLP (Linear -> ReLU -> Linear) + residual + LayerNorm 2 --
        h1 = jnp.maximum(_mxu(x, w1_ref[li]) + b1_ref[li], 0.0)
        m = _mxu(h1, w2_ref[li]) + b2_ref[li]
        x = _layernorm(x + m, g2_ref[li], be2_ref[li])

        # -- per-layer sum over the sequence axis, kept in VMEM --
        cats.append(jnp.sum(x.reshape(B, L, D), axis=1))       # (B, D)

    cats = jnp.concatenate(cats, axis=-1)                       # (B, n_layer*D)

    # ---- final MLP: Linear -> ReLU -> Linear ----
    hf = jnp.maximum(_mxu(cats, fw1_ref[...]) + fb1_ref[...], 0.0)
    y = _mxu(hf, fw2_ref[...]) + fb2_ref[...]
    out_ref[...] = y.astype(out_ref.dtype)


def global_transform_v2_forward(src, pos, layer_params, mlp_params, *, nhead):
    """src: (B, L, f1), pos: (B, L, f2); f1 + f2 = in_dim. Returns (B, out_dim)."""
    B, L, _ = src.shape
    (wqkv, bqkv, wo, bo, g1, be1, w1, b1, w2, b2, g2, be2) = layer_params
    fw1, fb1, fw2, fb2 = mlp_params
    n_layer, D, _ = wo.shape
    H = w1.shape[-1]
    F = fw1.shape[0]
    out_dim = fw2.shape[-1]

    # advisory cost estimate for XLA scheduling around the fused custom call
    flops = n_layer * (2 * B * L * D * 3 * D        # packed QKV projection
                       + 4 * B * L * L * D          # scores + context (all heads)
                       + 2 * B * L * D * D          # output projection
                       + 4 * B * L * D * H)         # MLP
    flops += 2 * B * F * F + 2 * B * F * out_dim    # final MLP
    transcendentals = n_layer * nhead * B * L * (L + 1) + 2 * n_layer * B * L

    args = (src, pos, wqkv, bqkv, wo, bo, g1, be1, w1, b1, w2, b2,
            g2, be2, fw1, fb1, fw2, fb2)
    bytes_accessed = sum(int(a.size) * a.dtype.itemsize for a in args) \
        + B * out_dim * 4

    return pl.pallas_call(
        functools.partial(fused_kernel, nhead=nhead),
        out_shape=jax.ShapeDtypeStruct((B, out_dim), src.dtype),
        cost_estimate=pl.CostEstimate(flops=flops,
                                      transcendentals=transcendentals,
                                      bytes_accessed=bytes_accessed),
    )(*args)


# ---------------------------------------------------------------------------
# Deterministic synthetic parameters (stacked per layer along a leading axis)
# ---------------------------------------------------------------------------
def init_params(key, n_layer, in_dim, hidden_dim, out_dim):
    def lin(k, fan_in, fan_out):
        kw, kb = jax.random.split(k)
        s = 1.0 / math.sqrt(fan_in)
        w = jax.random.uniform(kw, (fan_in, fan_out), jnp.float32, -s, s)
        b = jax.random.uniform(kb, (1, fan_out), jnp.float32, -s, s)
        return w, b

    names = ('wqkv', 'bqkv', 'wo', 'bo', 'g1', 'be1',
             'w1', 'b1', 'w2', 'b2', 'g2', 'be2')
    acc = {n: [] for n in names}
    keys = jax.random.split(key, n_layer + 1)
    for li in range(n_layer):
        ks = jax.random.split(keys[li], 6)
        wq, bq = lin(ks[0], in_dim, in_dim)
        wk, bk = lin(ks[1], in_dim, in_dim)
        wv, bv = lin(ks[2], in_dim, in_dim)
        wo, bo = lin(ks[3], in_dim, in_dim)
        w1, b1 = lin(ks[4], in_dim, hidden_dim)
        w2, b2 = lin(ks[5], hidden_dim, in_dim)
        acc['wqkv'].append(jnp.concatenate([wq, wk, wv], axis=1))   # (D, 3D)
        acc['bqkv'].append(jnp.concatenate([bq, bk, bv], axis=1))   # (1, 3D)
        acc['wo'].append(wo); acc['bo'].append(bo)
        acc['g1'].append(jnp.ones((1, in_dim), jnp.float32))
        acc['be1'].append(jnp.zeros((1, in_dim), jnp.float32))
        acc['w1'].append(w1); acc['b1'].append(b1)
        acc['w2'].append(w2); acc['b2'].append(b2)
        acc['g2'].append(jnp.ones((1, in_dim), jnp.float32))
        acc['be2'].append(jnp.zeros((1, in_dim), jnp.float32))
    layer_params = tuple(jnp.stack(acc[n]) for n in names)

    final_in_dim = n_layer * in_dim
    kf1, kf2 = jax.random.split(keys[-1])
    fw1, fb1 = lin(kf1, final_in_dim, final_in_dim)
    fw2, fb2 = lin(kf2, final_in_dim, out_dim)
    return layer_params, (fw1, fb1, fw2, fb2)


if __name__ == "__main__":
    # Small shapes consistent with the module.
    n_layer, vis_dim, pos_dim = 2, 24, 8
    in_dim = vis_dim + pos_dim                   # 32
    hidden_dim, nhead, out_dim = 64, 4, 8
    B, L = 2, 8

    key = jax.random.PRNGKey(0)
    k_src, k_pos, k_par = jax.random.split(key, 3)
    src = jax.random.normal(k_src, (B, L, vis_dim), jnp.float32)
    pos = jax.random.normal(k_pos, (B, L, pos_dim), jnp.float32)

    layer_params, mlp_params = init_params(k_par, n_layer, in_dim, hidden_dim,
                                           out_dim)

    fwd = jax.jit(functools.partial(global_transform_v2_forward, nhead=nhead))
    out = fwd(src, pos, layer_params, mlp_params)
    out = jax.block_until_ready(out)
    assert out.shape == (B, out_dim), out.shape
    print("KERNEL_OK")
</pallas_src>

<mosaic_0001>
module attributes {stable_mosaic.version = 11 : i64} {
  func.func @fused_kernel(%arg0: memref<2x8x24xf32, #tpu.memory_space<vmem>>, %arg1: memref<2x8x8xf32, #tpu.memory_space<vmem>>, %arg2: memref<2x32x96xf32, #tpu.memory_space<vmem>>, %arg3: memref<2x1x96xf32, #tpu.memory_space<vmem>>, %arg4: memref<2x32x32xf32, #tpu.memory_space<vmem>>, %arg5: memref<2x1x32xf32, #tpu.memory_space<vmem>>, %arg6: memref<2x1x32xf32, #tpu.memory_space<vmem>>, %arg7: memref<2x1x32xf32, #tpu.memory_space<vmem>>, %arg8: memref<2x32x64xf32, #tpu.memory_space<vmem>>, %arg9: memref<2x1x64xf32, #tpu.memory_space<vmem>>, %arg10: memref<2x64x32xf32, #tpu.memory_space<vmem>>, %arg11: memref<2x1x32xf32, #tpu.memory_space<vmem>>, %arg12: memref<2x1x32xf32, #tpu.memory_space<vmem>>, %arg13: memref<2x1x32xf32, #tpu.memory_space<vmem>>, %arg14: memref<64x64xf32, #tpu.memory_space<vmem>>, %arg15: memref<1x64xf32, #tpu.memory_space<vmem>>, %arg16: memref<64x8xf32, #tpu.memory_space<vmem>>, %arg17: memref<1x8xf32, #tpu.memory_space<vmem>>, %arg18: memref<2x8xf32, #tpu.memory_space<vmem>>) attributes {dimension_semantics = [], scalar_prefetch = 0 : i64, scratch_operands = 0 : i64, tpu.core_type = #tpu.core_type<tc>} {
    %c0 = arith.constant 0 : index
    %c0_0 = arith.constant 0 : index
    %c0_1 = arith.constant 0 : index
    %0 = vector.load %arg0[%c0, %c0_0, %c0_1] : memref<2x8x24xf32, #tpu.memory_space<vmem>>, vector<2x8x24xf32>
    %c0_2 = arith.constant 0 : index
    %c0_3 = arith.constant 0 : index
    %c0_4 = arith.constant 0 : index
    %1 = vector.load %arg1[%c0_2, %c0_3, %c0_4] : memref<2x8x8xf32, #tpu.memory_space<vmem>>, vector<2x8x8xf32>
    %2 = tpu.concatenate %0, %1 in 2 : vector<2x8x24xf32>, vector<2x8x8xf32> -> vector<2x8x32xf32>
    %3 = vector.shape_cast %2 : vector<2x8x32xf32> to vector<16x32xf32>
    %c0_5 = arith.constant 0 : index
    %c0_6 = arith.constant 0 : index
    %c0_7 = arith.constant 0 : index
    %4 = vector.load %arg4[%c0_5, %c0_6, %c0_7] : memref<2x32x32xf32, #tpu.memory_space<vmem>>, vector<1x32x32xf32>
    %5 = vector.shape_cast %4 : vector<1x32x32xf32> to vector<32x32xf32>
    %c0_8 = arith.constant 0 : index
    %c0_9 = arith.constant 0 : index
    %c0_10 = arith.constant 0 : index
    %6 = vector.load %arg2[%c0_8, %c0_9, %c0_10] : memref<2x32x96xf32, #tpu.memory_space<vmem>>, vector<1x32x96xf32>
    %7 = vector.shape_cast %6 : vector<1x32x96xf32> to vector<32x96xf32>
    %8 = arith.truncf %3 : vector<16x32xf32> to vector<16x32xbf16>
    %9 = arith.truncf %7 : vector<32x96xf32> to vector<32x96xbf16>
    %cst = arith.constant dense<0.000000e+00> : vector<16x96xf32>
    %10 = tpu.matmul %8, %9, %cst {dimension_numbers = #tpu.dot_dimension_numbers<[1], [0], [0], [1], [0, 0, 1, 1], [], []>} : vector<16x32xbf16>, vector<32x96xbf16>, vector<16x96xf32> -> vector<16x96xf32>
    %c0_11 = arith.constant 0 : index
    %c0_12 = arith.constant 0 : index
    %c0_13 = arith.constant 0 : index
    %11 = vector.load %arg3[%c0_11, %c0_12, %c0_13] : memref<2x1x96xf32, #tpu.memory_space<vmem>>, vector<1x1x96xf32>
    %12 = vector.shape_cast %11 : vector<1x1x96xf32> to vector<1x96xf32>
    %13 = vector.broadcast %12 : vector<1x96xf32> to vector<16x96xf32>
    %14 = arith.addf %10, %13 : vector<16x96xf32>
    %cst_14 = arith.constant 0.000000e+00 : f32
    %15 = vector.broadcast %cst_14 : f32 to vector<16x32xf32>
    %16 = vector.extract_strided_slice %14 {offsets = [0, 0], sizes = [16, 8], strides = [1, 1]} : vector<16x96xf32> to vector<16x8xf32>
    %17 = vector.shape_cast %16 : vector<16x8xf32> to vector<2x8x8xf32>
    %18 = vector.extract_strided_slice %14 {offsets = [0, 32], sizes = [16, 8], strides = [1, 1]} : vector<16x96xf32> to vector<16x8xf32>
    %19 = vector.shape_cast %18 : vector<16x8xf32> to vector<2x8x8xf32>
    %20 = vector.extract_strided_slice %14 {offsets = [0, 64], sizes = [16, 8], strides = [1, 1]} : vector<16x96xf32> to vector<16x8xf32>
    %21 = vector.shape_cast %20 : vector<16x8xf32> to vector<2x8x8xf32>
    %22 = arith.truncf %17 : vector<2x8x8xf32> to vector<2x8x8xbf16>
    %23 = arith.truncf %19 : vector<2x8x8xf32> to vector<2x8x8xbf16>
    "tpu.trace_start"() <{level = 10 : i32, message = "bld,bmd->blm"}> : () -> ()
    %cst_15 = arith.constant dense<0.000000e+00> : vector<2x8x8xf32>
    %24 = tpu.matmul %22, %23, %cst_15 {dimension_numbers = #tpu.dot_dimension_numbers<[2], [2], [1], [1], [0, 0, 0, 1, 1, 1], [0], [0]>} : vector<2x8x8xbf16>, vector<2x8x8xbf16>, vector<2x8x8xf32> -> vector<2x8x8xf32>
    "tpu.trace_stop"() : () -> ()
    %cst_16 = arith.constant 0.353553385 : f32
    %25 = vector.broadcast %cst_16 : f32 to vector<2x8x8xf32>
    %26 = arith.mulf %24, %25 : vector<2x8x8xf32>
    %cst_17 = arith.constant dense<0xFF800000> : vector<2x8xf32>
    %27 = vector.multi_reduction <maximumf>, %26, %cst_17 [2] : vector<2x8x8xf32> to vector<2x8xf32>
    %28 = vector.shape_cast %27 : vector<2x8xf32> to vector<2x8x1xf32>
    %29 = vector.broadcast %28 : vector<2x8x1xf32> to vector<2x8x8xf32>
    %30 = arith.subf %26, %29 : vector<2x8x8xf32>
    %31 = math.exp %30 : vector<2x8x8xf32>
    %cst_18 = arith.constant dense<0.000000e+00> : vector<2x8xf32>
    %32 = vector.multi_reduction <add>, %31, %cst_18 [2] : vector<2x8x8xf32> to vector<2x8xf32>
    %33 = vector.shape_cast %32 : vector<2x8xf32> to vector<2x8x1xf32>
    %34 = tpu.reciprocal %33 {approx = true} : vector<2x8x1xf32> -> vector<2x8x1xf32>
    %35 = vector.broadcast %34 : vector<2x8x1xf32> to vector<2x8x8xf32>
    %36 = arith.mulf %31, %35 : vector<2x8x8xf32>
    %37 = arith.truncf %36 : vector<2x8x8xf32> to vector<2x8x8xbf16>
    %38 = arith.truncf %21 : vector<2x8x8xf32> to vector<2x8x8xbf16>
    "tpu.trace_start"() <{level = 10 : i32, message = "blm,bmd->bld"}> : () -> ()
    %cst_19 = arith.constant dense<0.000000e+00> : vector<2x8x8xf32>
    %39 = tpu.matmul %37, %38, %cst_19 {dimension_numbers = #tpu.dot_dimension_numbers<[2], [1], [1], [2], [0, 0, 0, 1, 1, 2], [0], [0]>} : vector<2x8x8xbf16>, vector<2x8x8xbf16>, vector<2x8x8xf32> -> vector<2x8x8xf32>
    "tpu.trace_stop"() : () -> ()
    %40 = vector.shape_cast %39 : vector<2x8x8xf32> to vector<16x8xf32>
    %41 = vector.extract_strided_slice %5 {offsets = [0, 0], sizes = [8, 32], strides = [1, 1]} : vector<32x32xf32> to vector<8x32xf32>
    %42 = arith.truncf %40 : vector<16x8xf32> to vector<16x8xbf16>
    %43 = arith.truncf %41 : vector<8x32xf32> to vector<8x32xbf16>
    %cst_20 = arith.constant dense<0.000000e+00> : vector<16x32xf32>
    %44 = tpu.matmul %42, %43, %cst_20 {dimension_numbers = #tpu.dot_dimension_numbers<[1], [0], [0], [1], [0, 0, 1, 1], [], []>} : vector<16x8xbf16>, vector<8x32xbf16>, vector<16x32xf32> -> vector<16x32xf32>
    %45 = arith.addf %15, %44 : vector<16x32xf32>
    %46 = vector.extract_strided_slice %14 {offsets = [0, 8], sizes = [16, 8], strides = [1, 1]} : vector<16x96xf32> to vector<16x8xf32>
    %47 = vector.shape_cast %46 : vector<16x8xf32> to vector<2x8x8xf32>
    %48 = vector.extract_strided_slice %14 {offsets = [0, 40], sizes = [16, 8], strides = [1, 1]} : vector<16x96xf32> to vector<16x8xf32>
    %49 = vector.shape_cast %48 : vector<16x8xf32> to vector<2x8x8xf32>
    %50 = vector.extract_strided_slice %14 {offsets = [0, 72], sizes = [16, 8], strides = [1, 1]} : vector<16x96xf32> to vector<16x8xf32>
    %51 = vector.shape_cast %50 : vector<16x8xf32> to vector<2x8x8xf32>
    %52 = arith.truncf %47 : vector<2x8x8xf32> to vector<2x8x8xbf16>
    %53 = arith.truncf %49 : vector<2x8x8xf32> to vector<2x8x8xbf16>
    "tpu.trace_start"() <{level = 10 : i32, message = "bld,bmd->blm"}> : () -> ()
    %cst_21 = arith.constant dense<0.000000e+00> : vector<2x8x8xf32>
    %54 = tpu.matmul %52, %53, %cst_21 {dimension_numbers = #tpu.dot_dimension_numbers<[2], [2], [1], [1], [0, 0, 0, 1, 1, 1], [0], [0]>} : vector<2x8x8xbf16>, vector<2x8x8xbf16>, vector<2x8x8xf32> -> vector<2x8x8xf32>
    "tpu.trace_stop"() : () -> ()
    %cst_22 = arith.constant 0.353553385 : f32
    %55 = vector.broadcast %cst_22 : f32 to vector<2x8x8xf32>
    %56 = arith.mulf %54, %55 : vector<2x8x8xf32>
    %cst_23 = arith.constant dense<0xFF800000> : vector<2x8xf32>
    %57 = vector.multi_reduction <maximumf>, %56, %cst_23 [2] : vector<2x8x8xf32> to vector<2x8xf32>
    %58 = vector.shape_cast %57 : vector<2x8xf32> to vector<2x8x1xf32>
    %59 = vector.broadcast %58 : vector<2x8x1xf32> to vector<2x8x8xf32>
    %60 = arith.subf %56, %59 : vector<2x8x8xf32>
    %61 = math.exp %60 : vector<2x8x8xf32>
    %cst_24 = arith.constant dense<0.000000e+00> : vector<2x8xf32>
    %62 = vector.multi_reduction <add>, %61, %cst_24 [2] : vector<2x8x8xf32> to vector<2x8xf32>
    %63 = vector.shape_cast %62 : vector<2x8xf32> to vector<2x8x1xf32>
    %64 = tpu.reciprocal %63 {approx = true} : vector<2x8x1xf32> -> vector<2x8x1xf32>
    %65 = vector.broadcast %64 : vector<2x8x1xf32> to vector<2x8x8xf32>
    %66 = arith.mulf %61, %65 : vector<2x8x8xf32>
    %67 = arith.truncf %66 : vector<2x8x8xf32> to vector<2x8x8xbf16>
    %68 = arith.truncf %51 : vector<2x8x8xf32> to vector<2x8x8xbf16>
    "tpu.trace_start"() <{level = 10 : i32, message = "blm,bmd->bld"}> : () -> ()
    %cst_25 = arith.constant dense<0.000000e+00> : vector<2x8x8xf32>
    %69 = tpu.matmul %67, %68, %cst_25 {dimension_numbers = #tpu.dot_dimension_numbers<[2], [1], [1], [2], [0, 0, 0, 1, 1, 2], [0], [0]>} : vector<2x8x8xbf16>, vector<2x8x8xbf16>, vector<2x8x8xf32> -> vector<2x8x8xf32>
    "tpu.trace_stop"() : () -> ()
    %70 = vector.shape_cast %69 : vector<2x8x8xf32> to vector<16x8xf32>
    %71 = vector.extract_strided_slice %5 {offsets = [8, 0], sizes = [8, 32], strides = [1, 1]} : vector<32x32xf32> to vector<8x32xf32>
    %72 = arith.truncf %70 : vector<16x8xf32> to vector<16x8xbf16>
    %73 = arith.truncf %71 : vector<8x32xf32> to vector<8x32xbf16>
    %cst_26 = arith.constant dense<0.000000e+00> : vector<16x32xf32>
    %74 = tpu.matmul %72, %73, %cst_26 {dimension_numbers = #tpu.dot_dimension_numbers<[1], [0], [0], [1], [0, 0, 1, 1], [], []>} : vector<16x8xbf16>, vector<8x32xbf16>, vector<16x32xf32> -> vector<16x32xf32>
    %75 = arith.addf %45, %74 : vector<16x32xf32>
    %76 = vector.extract_strided_slice %14 {offsets = [0, 16], sizes = [16, 8], strides = [1, 1]} : vector<16x96xf32> to vector<16x8xf32>
    %77 = vector.shape_cast %76 : vector<16x8xf32> to vector<2x8x8xf32>
    %78 = vector.extract_strided_slice %14 {offsets = [0, 48], sizes = [16, 8], strides = [1, 1]} : vector<16x96xf32> to vector<16x8xf32>
    %79 = vector.shape_cast %78 : vector<16x8xf32> to vector<2x8x8xf32>
    %80 = vector.extract_strided_slice %14 {offsets = [0, 80], sizes = [16, 8], strides = [1, 1]} : vector<16x96xf32> to vector<16x8xf32>
    %81 = vector.shape_cast %80 : vector<16x8xf32> to vector<2x8x8xf32>
    %82 = arith.truncf %77 : vector<2x8x8xf32> to vector<2x8x8xbf16>
    %83 = arith.truncf %79 : vector<2x8x8xf32> to vector<2x8x8xbf16>
    "tpu.trace_start"() <{level = 10 : i32, message = "bld,bmd->blm"}> : () -> ()
    %cst_27 = arith.constant dense<0.000000e+00> : vector<2x8x8xf32>
    %84 = tpu.matmul %82, %83, %cst_27 {dimension_numbers = #tpu.dot_dimension_numbers<[2], [2], [1], [1], [0, 0, 0, 1, 1, 1], [0], [0]>} : vector<2x8x8xbf16>, vector<2x8x8xbf16>, vector<2x8x8xf32> -> vector<2x8x8xf32>
    "tpu.trace_stop"() : () -> ()
    %cst_28 = arith.constant 0.353553385 : f32
    %85 = vector.broadcast %cst_28 : f32 to vector<2x8x8xf32>
    %86 = arith.mulf %84, %85 : vector<2x8x8xf32>
    %cst_29 = arith.constant dense<0xFF800000> : vector<2x8xf32>
    %87 = vector.multi_reduction <maximumf>, %86, %cst_29 [2] : vector<2x8x8xf32> to vector<2x8xf32>
    %88 = vector.shape_cast %87 : vector<2x8xf32> to vector<2x8x1xf32>
    %89 = vector.broadcast %88 : vector<2x8x1xf32> to vector<2x8x8xf32>
    %90 = arith.subf %86, %89 : vector<2x8x8xf32>
    %91 = math.exp %90 : vector<2x8x8xf32>
    %cst_30 = arith.constant dense<0.000000e+00> : vector<2x8xf32>
    %92 = vector.multi_reduction <add>, %91, %cst_30 [2] : vector<2x8x8xf32> to vector<2x8xf32>
    %93 = vector.shape_cast %92 : vector<2x8xf32> to vector<2x8x1xf32>
    %94 = tpu.reciprocal %93 {approx = true} : vector<2x8x1xf32> -> vector<2x8x1xf32>
    %95 = vector.broadcast %94 : vector<2x8x1xf32> to vector<2x8x8xf32>
    %96 = arith.mulf %91, %95 : vector<2x8x8xf32>
    %97 = arith.truncf %96 : vector<2x8x8xf32> to vector<2x8x8xbf16>
    %98 = arith.truncf %81 : vector<2x8x8xf32> to vector<2x8x8xbf16>
    "tpu.trace_start"() <{level = 10 : i32, message = "blm,bmd->bld"}> : () -> ()
    %cst_31 = arith.constant dense<0.000000e+00> : vector<2x8x8xf32>
    %99 = tpu.matmul %97, %98, %cst_31 {dimension_numbers = #tpu.dot_dimension_numbers<[2], [1], [1], [2], [0, 0, 0, 1, 1, 2], [0], [0]>} : vector<2x8x8xbf16>, vector<2x8x8xbf16>, vector<2x8x8xf32> -> vector<2x8x8xf32>
    "tpu.trace_stop"() : () -> ()
    %100 = vector.shape_cast %99 : vector<2x8x8xf32> to vector<16x8xf32>
    %101 = vector.extract_strided_slice %5 {offsets = [16, 0], sizes = [8, 32], strides = [1, 1]} : vector<32x32xf32> to vector<8x32xf32>
    %102 = arith.truncf %100 : vector<16x8xf32> to vector<16x8xbf16>
    %103 = arith.truncf %101 : vector<8x32xf32> to vector<8x32xbf16>
    %cst_32 = arith.constant dense<0.000000e+00> : vector<16x32xf32>
    %104 = tpu.matmul %102, %103, %cst_32 {dimension_numbers = #tpu.dot_dimension_numbers<[1], [0], [0], [1], [0, 0, 1, 1], [], []>} : vector<16x8xbf16>, vector<8x32xbf16>, vector<16x32xf32> -> vector<16x32xf32>
    %105 = arith.addf %75, %104 : vector<16x32xf32>
    %106 = vector.extract_strided_slice %14 {offsets = [0, 24], sizes = [16, 8], strides = [1, 1]} : vector<16x96xf32> to vector<16x8xf32>
    %107 = vector.shape_cast %106 : vector<16x8xf32> to vector<2x8x8xf32>
    %108 = vector.extract_strided_slice %14 {offsets = [0, 56], sizes = [16, 8], strides = [1, 1]} : vector<16x96xf32> to vector<16x8xf32>
    %109 = vector.shape_cast %108 : vector<16x8xf32> to vector<2x8x8xf32>
    %110 = vector.extract_strided_slice %14 {offsets = [0, 88], sizes = [16, 8], strides = [1, 1]} : vector<16x96xf32> to vector<16x8xf32>
    %111 = vector.shape_cast %110 : vector<16x8xf32> to vector<2x8x8xf32>
    %112 = arith.truncf %107 : vector<2x8x8xf32> to vector<2x8x8xbf16>
    %113 = arith.truncf %109 : vector<2x8x8xf32> to vector<2x8x8xbf16>
    "tpu.trace_start"() <{level = 10 : i32, message = "bld,bmd->blm"}> : () -> ()
    %cst_33 = arith.constant dense<0.000000e+00> : vector<2x8x8xf32>
    %114 = tpu.matmul %112, %113, %cst_33 {dimension_numbers = #tpu.dot_dimension_numbers<[2], [2], [1], [1], [0, 0, 0, 1, 1, 1], [0], [0]>} : vector<2x8x8xbf16>, vector<2x8x8xbf16>, vector<2x8x8xf32> -> vector<2x8x8xf32>
    "tpu.trace_stop"() : () -> ()
    %cst_34 = arith.constant 0.353553385 : f32
    %115 = vector.broadcast %cst_34 : f32 to vector<2x8x8xf32>
    %116 = arith.mulf %114, %115 : vector<2x8x8xf32>
    %cst_35 = arith.constant dense<0xFF800000> : vector<2x8xf32>
    %117 = vector.multi_reduction <maximumf>, %116, %cst_35 [2] : vector<2x8x8xf32> to vector<2x8xf32>
    %118 = vector.shape_cast %117 : vector<2x8xf32> to vector<2x8x1xf32>
    %119 = vector.broadcast %118 : vector<2x8x1xf32> to vector<2x8x8xf32>
    %120 = arith.subf %116, %119 : vector<2x8x8xf32>
    %121 = math.exp %120 : vector<2x8x8xf32>
    %cst_36 = arith.constant dense<0.000000e+00> : vector<2x8xf32>
    %122 = vector.multi_reduction <add>, %121, %cst_36 [2] : vector<2x8x8xf32> to vector<2x8xf32>
    %123 = vector.shape_cast %122 : vector<2x8xf32> to vector<2x8x1xf32>
    %124 = tpu.reciprocal %123 {approx = true} : vector<2x8x1xf32> -> vector<2x8x1xf32>
    %125 = vector.broadcast %124 : vector<2x8x1xf32> to vector<2x8x8xf32>
    %126 = arith.mulf %121, %125 : vector<2x8x8xf32>
    %127 = arith.truncf %126 : vector<2x8x8xf32> to vector<2x8x8xbf16>
    %128 = arith.truncf %111 : vector<2x8x8xf32> to vector<2x8x8xbf16>
    "tpu.trace_start"() <{level = 10 : i32, message = "blm,bmd->bld"}> : () -> ()
    %cst_37 = arith.constant dense<0.000000e+00> : vector<2x8x8xf32>
    %129 = tpu.matmul %127, %128, %cst_37 {dimension_numbers = #tpu.dot_dimension_numbers<[2], [1], [1], [2], [0, 0, 0, 1, 1, 2], [0], [0]>} : vector<2x8x8xbf16>, vector<2x8x8xbf16>, vector<2x8x8xf32> -> vector<2x8x8xf32>
    "tpu.trace_stop"() : () -> ()
    %130 = vector.shape_cast %129 : vector<2x8x8xf32> to vector<16x8xf32>
    %131 = vector.extract_strided_slice %5 {offsets = [24, 0], sizes = [8, 32], strides = [1, 1]} : vector<32x32xf32> to vector<8x32xf32>
    %132 = arith.truncf %130 : vector<16x8xf32> to vector<16x8xbf16>
    %133 = arith.truncf %131 : vector<8x32xf32> to vector<8x32xbf16>
    %cst_38 = arith.constant dense<0.000000e+00> : vector<16x32xf32>
    %134 = tpu.matmul %132, %133, %cst_38 {dimension_numbers = #tpu.dot_dimension_numbers<[1], [0], [0], [1], [0, 0, 1, 1], [], []>} : vector<16x8xbf16>, vector<8x32xbf16>, vector<16x32xf32> -> vector<16x32xf32>
    %135 = arith.addf %105, %134 : vector<16x32xf32>
    %c0_39 = arith.constant 0 : index
    %c0_40 = arith.constant 0 : index
    %c0_41 = arith.constant 0 : index
    %136 = vector.load %arg5[%c0_39, %c0_40, %c0_41] : memref<2x1x32xf32, #tpu.memory_space<vmem>>, vector<1x1x32xf32>
    %137 = vector.shape_cast %136 : vector<1x1x32xf32> to vector<1x32xf32>
    %138 = vector.broadcast %137 : vector<1x32xf32> to vector<16x32xf32>
    %139 = arith.addf %135, %138 : vector<16x32xf32>
    %140 = arith.addf %3, %139 : vector<16x32xf32>
    %c0_42 = arith.constant 0 : index
    %c0_43 = arith.constant 0 : index
    %c0_44 = arith.constant 0 : index
    %141 = vector.load %arg6[%c0_42, %c0_43, %c0_44] : memref<2x1x32xf32, #tpu.memory_space<vmem>>, vector<1x1x32xf32>
    %142 = vector.shape_cast %141 : vector<1x1x32xf32> to vector<1x32xf32>
    %c0_45 = arith.constant 0 : index
    %c0_46 = arith.constant 0 : index
    %c0_47 = arith.constant 0 : index
    %143 = vector.load %arg7[%c0_45, %c0_46, %c0_47] : memref<2x1x32xf32, #tpu.memory_space<vmem>>, vector<1x1x32xf32>
    %144 = vector.shape_cast %143 : vector<1x1x32xf32> to vector<1x32xf32>
    %cst_48 = arith.constant dense<0.000000e+00> : vector<16xf32>
    %145 = vector.multi_reduction <add>, %140, %cst_48 [1] : vector<16x32xf32> to vector<16xf32>
    %146 = vector.shape_cast %145 : vector<16xf32> to vector<16x1xf32>
    %cst_49 = arith.constant 3.200000e+01 : f32
    %147 = vector.broadcast %cst_49 : f32 to vector<16x1xf32>
    %148 = arith.divf %146, %147 : vector<16x1xf32>
    %149 = vector.broadcast %148 : vector<16x1xf32> to vector<16x32xf32>
    %150 = arith.subf %140, %149 : vector<16x32xf32>
    %151 = arith.mulf %150, %150 : vector<16x32xf32>
    %cst_50 = arith.constant dense<0.000000e+00> : vector<16xf32>
    %152 = vector.multi_reduction <add>, %151, %cst_50 [1] : vector<16x32xf32> to vector<16xf32>
    %153 = vector.shape_cast %152 : vector<16xf32> to vector<16x1xf32>
    %cst_51 = arith.constant 3.200000e+01 : f32
    %154 = vector.broadcast %cst_51 : f32 to vector<16x1xf32>
    %155 = arith.divf %153, %154 : vector<16x1xf32>
    %156 = vector.broadcast %148 : vector<16x1xf32> to vector<16x32xf32>
    %157 = arith.subf %140, %156 : vector<16x32xf32>
    %cst_52 = arith.constant 9.99999974E-6 : f32
    %158 = vector.broadcast %cst_52 : f32 to vector<16x1xf32>
    %159 = arith.addf %155, %158 : vector<16x1xf32>
    %160 = math.rsqrt %159 : vector<16x1xf32>
    %161 = vector.broadcast %160 : vector<16x1xf32> to vector<16x32xf32>
    %162 = arith.mulf %157, %161 : vector<16x32xf32>
    %163 = vector.broadcast %142 : vector<1x32xf32> to vector<16x32xf32>
    %164 = arith.mulf %162, %163 : vector<16x32xf32>
    %165 = vector.broadcast %144 : vector<1x32xf32> to vector<16x32xf32>
    %166 = arith.addf %164, %165 : vector<16x32xf32>
    %c0_53 = arith.constant 0 : index
    %c0_54 = arith.constant 0 : index
    %c0_55 = arith.constant 0 : index
    %167 = vector.load %arg8[%c0_53, %c0_54, %c0_55] : memref<2x32x64xf32, #tpu.memory_space<vmem>>, vector<1x32x64xf32>
    %168 = vector.shape_cast %167 : vector<1x32x64xf32> to vector<32x64xf32>
    %169 = arith.truncf %166 : vector<16x32xf32> to vector<16x32xbf16>
    %170 = arith.truncf %168 : vector<32x64xf32> to vector<32x64xbf16>
    %cst_56 = arith.constant dense<0.000000e+00> : vector<16x64xf32>
    %171 = tpu.matmul %169, %170, %cst_56 {dimension_numbers = #tpu.dot_dimension_numbers<[1], [0], [0], [1], [0, 0, 1, 1], [], []>} : vector<16x32xbf16>, vector<32x64xbf16>, vector<16x64xf32> -> vector<16x64xf32>
    %c0_57 = arith.constant 0 : index
    %c0_58 = arith.constant 0 : index
    %c0_59 = arith.constant 0 : index
    %172 = vector.load %arg9[%c0_57, %c0_58, %c0_59] : memref<2x1x64xf32, #tpu.memory_space<vmem>>, vector<1x1x64xf32>
    %173 = vector.shape_cast %172 : vector<1x1x64xf32> to vector<1x64xf32>
    %174 = vector.broadcast %173 : vector<1x64xf32> to vector<16x64xf32>
    %175 = arith.addf %171, %174 : vector<16x64xf32>
    %cst_60 = arith.constant 0.000000e+00 : f32
    %176 = vector.broadcast %cst_60 : f32 to vector<16x64xf32>
    %177 = arith.maximumf %175, %176 : vector<16x64xf32>
    %c0_61 = arith.constant 0 : index
    %c0_62 = arith.constant 0 : index
    %c0_63 = arith.constant 0 : index
    %178 = vector.load %arg10[%c0_61, %c0_62, %c0_63] : memref<2x64x32xf32, #tpu.memory_space<vmem>>, vector<1x64x32xf32>
    %179 = vector.shape_cast %178 : vector<1x64x32xf32> to vector<64x32xf32>
    %180 = arith.truncf %177 : vector<16x64xf32> to vector<16x64xbf16>
    %181 = arith.truncf %179 : vector<64x32xf32> to vector<64x32xbf16>
    %cst_64 = arith.constant dense<0.000000e+00> : vector<16x32xf32>
    %182 = tpu.matmul %180, %181, %cst_64 {dimension_numbers = #tpu.dot_dimension_numbers<[1], [0], [0], [1], [0, 0, 1, 1], [], []>} : vector<16x64xbf16>, vector<64x32xbf16>, vector<16x32xf32> -> vector<16x32xf32>
    %c0_65 = arith.constant 0 : index
    %c0_66 = arith.constant 0 : index
    %c0_67 = arith.constant 0 : index
    %183 = vector.load %arg11[%c0_65, %c0_66, %c0_67] : memref<2x1x32xf32, #tpu.memory_space<vmem>>, vector<1x1x32xf32>
    %184 = vector.shape_cast %183 : vector<1x1x32xf32> to vector<1x32xf32>
    %185 = vector.broadcast %184 : vector<1x32xf32> to vector<16x32xf32>
    %186 = arith.addf %182, %185 : vector<16x32xf32>
    %187 = arith.addf %166, %186 : vector<16x32xf32>
    %c0_68 = arith.constant 0 : index
    %c0_69 = arith.constant 0 : index
    %c0_70 = arith.constant 0 : index
    %188 = vector.load %arg12[%c0_68, %c0_69, %c0_70] : memref<2x1x32xf32, #tpu.memory_space<vmem>>, vector<1x1x32xf32>
    %189 = vector.shape_cast %188 : vector<1x1x32xf32> to vector<1x32xf32>
    %c0_71 = arith.constant 0 : index
    %c0_72 = arith.constant 0 : index
    %c0_73 = arith.constant 0 : index
    %190 = vector.load %arg13[%c0_71, %c0_72, %c0_73] : memref<2x1x32xf32, #tpu.memory_space<vmem>>, vector<1x1x32xf32>
    %191 = vector.shape_cast %190 : vector<1x1x32xf32> to vector<1x32xf32>
    %cst_74 = arith.constant dense<0.000000e+00> : vector<16xf32>
    %192 = vector.multi_reduction <add>, %187, %cst_74 [1] : vector<16x32xf32> to vector<16xf32>
    %193 = vector.shape_cast %192 : vector<16xf32> to vector<16x1xf32>
    %cst_75 = arith.constant 3.200000e+01 : f32
    %194 = vector.broadcast %cst_75 : f32 to vector<16x1xf32>
    %195 = arith.divf %193, %194 : vector<16x1xf32>
    %196 = vector.broadcast %195 : vector<16x1xf32> to vector<16x32xf32>
    %197 = arith.subf %187, %196 : vector<16x32xf32>
    %198 = arith.mulf %197, %197 : vector<16x32xf32>
    %cst_76 = arith.constant dense<0.000000e+00> : vector<16xf32>
    %199 = vector.multi_reduction <add>, %198, %cst_76 [1] : vector<16x32xf32> to vector<16xf32>
    %200 = vector.shape_cast %199 : vector<16xf32> to vector<16x1xf32>
    %cst_77 = arith.constant 3.200000e+01 : f32
    %201 = vector.broadcast %cst_77 : f32 to vector<16x1xf32>
    %202 = arith.divf %200, %201 : vector<16x1xf32>
    %203 = vector.broadcast %195 : vector<16x1xf32> to vector<16x32xf32>
    %204 = arith.subf %187, %203 : vector<16x32xf32>
    %cst_78 = arith.constant 9.99999974E-6 : f32
    %205 = vector.broadcast %cst_78 : f32 to vector<16x1xf32>
    %206 = arith.addf %202, %205 : vector<16x1xf32>
    %207 = math.rsqrt %206 : vector<16x1xf32>
    %208 = vector.broadcast %207 : vector<16x1xf32> to vector<16x32xf32>
    %209 = arith.mulf %204, %208 : vector<16x32xf32>
    %210 = vector.broadcast %189 : vector<1x32xf32> to vector<16x32xf32>
    %211 = arith.mulf %209, %210 : vector<16x32xf32>
    %212 = vector.broadcast %191 : vector<1x32xf32> to vector<16x32xf32>
    %213 = arith.addf %211, %212 : vector<16x32xf32>
    %214 = vector.shape_cast %213 : vector<16x32xf32> to vector<2x8x32xf32>
    %cst_79 = arith.constant dense<0.000000e+00> : vector<2x32xf32>
    %215 = vector.multi_reduction <add>, %214, %cst_79 [1] : vector<2x8x32xf32> to vector<2x32xf32>
    %c1 = arith.constant 1 : index
    %c0_80 = arith.constant 0 : index
    %c0_81 = arith.constant 0 : index
    %216 = vector.load %arg4[%c1, %c0_80, %c0_81] : memref<2x32x32xf32, #tpu.memory_space<vmem>>, vector<1x32x32xf32>
    %217 = vector.shape_cast %216 : vector<1x32x32xf32> to vector<32x32xf32>
    %c1_82 = arith.constant 1 : index
    %c0_83 = arith.constant 0 : index
    %c0_84 = arith.constant 0 : index
    %218 = vector.load %arg2[%c1_82, %c0_83, %c0_84] : memref<2x32x96xf32, #tpu.memory_space<vmem>>, vector<1x32x96xf32>
    %219 = vector.shape_cast %218 : vector<1x32x96xf32> to vector<32x96xf32>
    %220 = arith.truncf %213 : vector<16x32xf32> to vector<16x32xbf16>
    %221 = arith.truncf %219 : vector<32x96xf32> to vector<32x96xbf16>
    %cst_85 = arith.constant dense<0.000000e+00> : vector<16x96xf32>
    %222 = tpu.matmul %220, %221, %cst_85 {dimension_numbers = #tpu.dot_dimension_numbers<[1], [0], [0], [1], [0, 0, 1, 1], [], []>} : vector<16x32xbf16>, vector<32x96xbf16>, vector<16x96xf32> -> vector<16x96xf32>
    %c1_86 = arith.constant 1 : index
    %c0_87 = arith.constant 0 : index
    %c0_88 = arith.constant 0 : index
    %223 = vector.load %arg3[%c1_86, %c0_87, %c0_88] : memref<2x1x96xf32, #tpu.memory_space<vmem>>, vector<1x1x96xf32>
    %224 = vector.shape_cast %223 : vector<1x1x96xf32> to vector<1x96xf32>
    %225 = vector.broadcast %224 : vector<1x96xf32> to vector<16x96xf32>
    %226 = arith.addf %222, %225 : vector<16x96xf32>
    %cst_89 = arith.constant 0.000000e+00 : f32
    %227 = vector.broadcast %cst_89 : f32 to vector<16x32xf32>
    %228 = vector.extract_strided_slice %226 {offsets = [0, 0], sizes = [16, 8], strides = [1, 1]} : vector<16x96xf32> to vector<16x8xf32>
    %229 = vector.shape_cast %228 : vector<16x8xf32> to vector<2x8x8xf32>
    %230 = vector.extract_strided_slice %226 {offsets = [0, 32], sizes = [16, 8], strides = [1, 1]} : vector<16x96xf32> to vector<16x8xf32>
    %231 = vector.shape_cast %230 : vector<16x8xf32> to vector<2x8x8xf32>
    %232 = vector.extract_strided_slice %226 {offsets = [0, 64], sizes = [16, 8], strides = [1, 1]} : vector<16x96xf32> to vector<16x8xf32>
    %233 = vector.shape_cast %232 : vector<16x8xf32> to vector<2x8x8xf32>
    %234 = arith.truncf %229 : vector<2x8x8xf32> to vector<2x8x8xbf16>
    %235 = arith.truncf %231 : vector<2x8x8xf32> to vector<2x8x8xbf16>
    "tpu.trace_start"() <{level = 10 : i32, message = "bld,bmd->blm"}> : () -> ()
    %cst_90 = arith.constant dense<0.000000e+00> : vector<2x8x8xf32>
    %236 = tpu.matmul %234, %235, %cst_90 {dimension_numbers = #tpu.dot_dimension_numbers<[2], [2], [1], [1], [0, 0, 0, 1, 1, 1], [0], [0]>} : vector<2x8x8xbf16>, vector<2x8x8xbf16>, vector<2x8x8xf32> -> vector<2x8x8xf32>
    "tpu.trace_stop"() : () -> ()
    %cst_91 = arith.constant 0.353553385 : f32
    %237 = vector.broadcast %cst_91 : f32 to vector<2x8x8xf32>
    %238 = arith.mulf %236, %237 : vector<2x8x8xf32>
    %cst_92 = arith.constant dense<0xFF800000> : vector<2x8xf32>
    %239 = vector.multi_reduction <maximumf>, %238, %cst_92 [2] : vector<2x8x8xf32> to vector<2x8xf32>
    %240 = vector.shape_cast %239 : vector<2x8xf32> to vector<2x8x1xf32>
    %241 = vector.broadcast %240 : vector<2x8x1xf32> to vector<2x8x8xf32>
    %242 = arith.subf %238, %241 : vector<2x8x8xf32>
    %243 = math.exp %242 : vector<2x8x8xf32>
    %cst_93 = arith.constant dense<0.000000e+00> : vector<2x8xf32>
    %244 = vector.multi_reduction <add>, %243, %cst_93 [2] : vector<2x8x8xf32> to vector<2x8xf32>
    %245 = vector.shape_cast %244 : vector<2x8xf32> to vector<2x8x1xf32>
    %246 = tpu.reciprocal %245 {approx = true} : vector<2x8x1xf32> -> vector<2x8x1xf32>
    %247 = vector.broadcast %246 : vector<2x8x1xf32> to vector<2x8x8xf32>
    %248 = arith.mulf %243, %247 : vector<2x8x8xf32>
    %249 = arith.truncf %248 : vector<2x8x8xf32> to vector<2x8x8xbf16>
    %250 = arith.truncf %233 : vector<2x8x8xf32> to vector<2x8x8xbf16>
    "tpu.trace_start"() <{level = 10 : i32, message = "blm,bmd->bld"}> : () -> ()
    %cst_94 = arith.constant dense<0.000000e+00> : vector<2x8x8xf32>
    %251 = tpu.matmul %249, %250, %cst_94 {dimension_numbers = #tpu.dot_dimension_numbers<[2], [1], [1], [2], [0, 0, 0, 1, 1, 2], [0], [0]>} : vector<2x8x8xbf16>, vector<2x8x8xbf16>, vector<2x8x8xf32> -> vector<2x8x8xf32>
    "tpu.trace_stop"() : () -> ()
    %252 = vector.shape_cast %251 : vector<2x8x8xf32> to vector<16x8xf32>
    %253 = vector.extract_strided_slice %217 {offsets = [0, 0], sizes = [8, 32], strides = [1, 1]} : vector<32x32xf32> to vector<8x32xf32>
    %254 = arith.truncf %252 : vector<16x8xf32> to vector<16x8xbf16>
    %255 = arith.truncf %253 : vector<8x32xf32> to vector<8x32xbf16>
    %cst_95 = arith.constant dense<0.000000e+00> : vector<16x32xf32>
    %256 = tpu.matmul %254, %255, %cst_95 {dimension_numbers = #tpu.dot_dimension_numbers<[1], [0], [0], [1], [0, 0, 1, 1], [], []>} : vector<16x8xbf16>, vector<8x32xbf16>, vector<16x32xf32> -> vector<16x32xf32>
    %257 = arith.addf %227, %256 : vector<16x32xf32>
    %258 = vector.extract_strided_slice %226 {offsets = [0, 8], sizes = [16, 8], strides = [1, 1]} : vector<16x96xf32> to vector<16x8xf32>
    %259 = vector.shape_cast %258 : vector<16x8xf32> to vector<2x8x8xf32>
    %260 = vector.extract_strided_slice %226 {offsets = [0, 40], sizes = [16, 8], strides = [1, 1]} : vector<16x96xf32> to vector<16x8xf32>
    %261 = vector.shape_cast %260 : vector<16x8xf32> to vector<2x8x8xf32>
    %262 = vector.extract_strided_slice %226 {offsets = [0, 72], sizes = [16, 8], strides = [1, 1]} : vector<16x96xf32> to vector<16x8xf32>
    %263 = vector.shape_cast %262 : vector<16x8xf32> to vector<2x8x8xf32>
    %264 = arith.truncf %259 : vector<2x8x8xf32> to vector<2x8x8xbf16>
    %265 = arith.truncf %261 : vector<2x8x8xf32> to vector<2x8x8xbf16>
    "tpu.trace_start"() <{level = 10 : i32, message = "bld,bmd->blm"}> : () -> ()
    %cst_96 = arith.constant dense<0.000000e+00> : vector<2x8x8xf32>
    %266 = tpu.matmul %264, %265, %cst_96 {dimension_numbers = #tpu.dot_dimension_numbers<[2], [2], [1], [1], [0, 0, 0, 1, 1, 1], [0], [0]>} : vector<2x8x8xbf16>, vector<2x8x8xbf16>, vector<2x8x8xf32> -> vector<2x8x8xf32>
    "tpu.trace_stop"() : () -> ()
    %cst_97 = arith.constant 0.353553385 : f32
    %267 = vector.broadcast %cst_97 : f32 to vector<2x8x8xf32>
    %268 = arith.mulf %266, %267 : vector<2x8x8xf32>
    %cst_98 = arith.constant dense<0xFF800000> : vector<2x8xf32>
    %269 = vector.multi_reduction <maximumf>, %268, %cst_98 [2] : vector<2x8x8xf32> to vector<2x8xf32>
    %270 = vector.shape_cast %269 : vector<2x8xf32> to vector<2x8x1xf32>
    %271 = vector.broadcast %270 : vector<2x8x1xf32> to vector<2x8x8xf32>
    %272 = arith.subf %268, %271 : vector<2x8x8xf32>
    %273 = math.exp %272 : vector<2x8x8xf32>
    %cst_99 = arith.constant dense<0.000000e+00> : vector<2x8xf32>
    %274 = vector.multi_reduction <add>, %273, %cst_99 [2] : vector<2x8x8xf32> to vector<2x8xf32>
    %275 = vector.shape_cast %274 : vector<2x8xf32> to vector<2x8x1xf32>
    %276 = tpu.reciprocal %275 {approx = true} : vector<2x8x1xf32> -> vector<2x8x1xf32>
    %277 = vector.broadcast %276 : vector<2x8x1xf32> to vector<2x8x8xf32>
    %278 = arith.mulf %273, %277 : vector<2x8x8xf32>
    %279 = arith.truncf %278 : vector<2x8x8xf32> to vector<2x8x8xbf16>
    %280 = arith.truncf %263 : vector<2x8x8xf32> to vector<2x8x8xbf16>
    "tpu.trace_start"() <{level = 10 : i32, message = "blm,bmd->bld"}> : () -> ()
    %cst_100 = arith.constant dense<0.000000e+00> : vector<2x8x8xf32>
    %281 = tpu.matmul %279, %280, %cst_100 {dimension_numbers = #tpu.dot_dimension_numbers<[2], [1], [1], [2], [0, 0, 0, 1, 1, 2], [0], [0]>} : vector<2x8x8xbf16>, vector<2x8x8xbf16>, vector<2x8x8xf32> -> vector<2x8x8xf32>
    "tpu.trace_stop"() : () -> ()
    %282 = vector.shape_cast %281 : vector<2x8x8xf32> to vector<16x8xf32>
    %283 = vector.extract_strided_slice %217 {offsets = [8, 0], sizes = [8, 32], strides = [1, 1]} : vector<32x32xf32> to vector<8x32xf32>
    %284 = arith.truncf %282 : vector<16x8xf32> to vector<16x8xbf16>
    %285 = arith.truncf %283 : vector<8x32xf32> to vector<8x32xbf16>
    %cst_101 = arith.constant dense<0.000000e+00> : vector<16x32xf32>
    %286 = tpu.matmul %284, %285, %cst_101 {dimension_numbers = #tpu.dot_dimension_numbers<[1], [0], [0], [1], [0, 0, 1, 1], [], []>} : vector<16x8xbf16>, vector<8x32xbf16>, vector<16x32xf32> -> vector<16x32xf32>
    %287 = arith.addf %257, %286 : vector<16x32xf32>
    %288 = vector.extract_strided_slice %226 {offsets = [0, 16], sizes = [16, 8], strides = [1, 1]} : vector<16x96xf32> to vector<16x8xf32>
    %289 = vector.shape_cast %288 : vector<16x8xf32> to vector<2x8x8xf32>
    %290 = vector.extract_strided_slice %226 {offsets = [0, 48], sizes = [16, 8], strides = [1, 1]} : vector<16x96xf32> to vector<16x8xf32>
    %291 = vector.shape_cast %290 : vector<16x8xf32> to vector<2x8x8xf32>
    %292 = vector.extract_strided_slice %226 {offsets = [0, 80], sizes = [16, 8], strides = [1, 1]} : vector<16x96xf32> to vector<16x8xf32>
    %293 = vector.shape_cast %292 : vector<16x8xf32> to vector<2x8x8xf32>
    %294 = arith.truncf %289 : vector<2x8x8xf32> to vector<2x8x8xbf16>
    %295 = arith.truncf %291 : vector<2x8x8xf32> to vector<2x8x8xbf16>
    "tpu.trace_start"() <{level = 10 : i32, message = "bld,bmd->blm"}> : () -> ()
    %cst_102 = arith.constant dense<0.000000e+00> : vector<2x8x8xf32>
    %296 = tpu.matmul %294, %295, %cst_102 {dimension_numbers = #tpu.dot_dimension_numbers<[2], [2], [1], [1], [0, 0, 0, 1, 1, 1], [0], [0]>} : vector<2x8x8xbf16>, vector<2x8x8xbf16>, vector<2x8x8xf32> -> vector<2x8x8xf32>
    "tpu.trace_stop"() : () -> ()
    %cst_103 = arith.constant 0.353553385 : f32
    %297 = vector.broadcast %cst_103 : f32 to vector<2x8x8xf32>
    %298 = arith.mulf %296, %297 : vector<2x8x8xf32>
    %cst_104 = arith.constant dense<0xFF800000> : vector<2x8xf32>
    %299 = vector.multi_reduction <maximumf>, %298, %cst_104 [2] : vector<2x8x8xf32> to vector<2x8xf32>
    %300 = vector.shape_cast %299 : vector<2x8xf32> to vector<2x8x1xf32>
    %301 = vector.broadcast %300 : vector<2x8x1xf32> to vector<2x8x8xf32>
    %302 = arith.subf %298, %301 : vector<2x8x8xf32>
    %303 = math.exp %302 : vector<2x8x8xf32>
    %cst_105 = arith.constant dense<0.000000e+00> : vector<2x8xf32>
    %304 = vector.multi_reduction <add>, %303, %cst_105 [2] : vector<2x8x8xf32> to vector<2x8xf32>
    %305 = vector.shape_cast %304 : vector<2x8xf32> to vector<2x8x1xf32>
    %306 = tpu.reciprocal %305 {approx = true} : vector<2x8x1xf32> -> vector<2x8x1xf32>
    %307 = vector.broadcast %306 : vector<2x8x1xf32> to vector<2x8x8xf32>
    %308 = arith.mulf %303, %307 : vector<2x8x8xf32>
    %309 = arith.truncf %308 : vector<2x8x8xf32> to vector<2x8x8xbf16>
    %310 = arith.truncf %293 : vector<2x8x8xf32> to vector<2x8x8xbf16>
    "tpu.trace_start"() <{level = 10 : i32, message = "blm,bmd->bld"}> : () -> ()
    %cst_106 = arith.constant dense<0.000000e+00> : vector<2x8x8xf32>
    %311 = tpu.matmul %309, %310, %cst_106 {dimension_numbers = #tpu.dot_dimension_numbers<[2], [1], [1], [2], [0, 0, 0, 1, 1, 2], [0], [0]>} : vector<2x8x8xbf16>, vector<2x8x8xbf16>, vector<2x8x8xf32> -> vector<2x8x8xf32>
    "tpu.trace_stop"() : () -> ()
    %312 = vector.shape_cast %311 : vector<2x8x8xf32> to vector<16x8xf32>
    %313 = vector.extract_strided_slice %217 {offsets = [16, 0], sizes = [8, 32], strides = [1, 1]} : vector<32x32xf32> to vector<8x32xf32>
    %314 = arith.truncf %312 : vector<16x8xf32> to vector<16x8xbf16>
    %315 = arith.truncf %313 : vector<8x32xf32> to vector<8x32xbf16>
    %cst_107 = arith.constant dense<0.000000e+00> : vector<16x32xf32>
    %316 = tpu.matmul %314, %315, %cst_107 {dimension_numbers = #tpu.dot_dimension_numbers<[1], [0], [0], [1], [0, 0, 1, 1], [], []>} : vector<16x8xbf16>, vector<8x32xbf16>, vector<16x32xf32> -> vector<16x32xf32>
    %317 = arith.addf %287, %316 : vector<16x32xf32>
    %318 = vector.extract_strided_slice %226 {offsets = [0, 24], sizes = [16, 8], strides = [1, 1]} : vector<16x96xf32> to vector<16x8xf32>
    %319 = vector.shape_cast %318 : vector<16x8xf32> to vector<2x8x8xf32>
    %320 = vector.extract_strided_slice %226 {offsets = [0, 56], sizes = [16, 8], strides = [1, 1]} : vector<16x96xf32> to vector<16x8xf32>
    %321 = vector.shape_cast %320 : vector<16x8xf32> to vector<2x8x8xf32>
    %322 = vector.extract_strided_slice %226 {offsets = [0, 88], sizes = [16, 8], strides = [1, 1]} : vector<16x96xf32> to vector<16x8xf32>
    %323 = vector.shape_cast %322 : vector<16x8xf32> to vector<2x8x8xf32>
    %324 = arith.truncf %319 : vector<2x8x8xf32> to vector<2x8x8xbf16>
    %325 = arith.truncf %321 : vector<2x8x8xf32> to vector<2x8x8xbf16>
    "tpu.trace_start"() <{level = 10 : i32, message = "bld,bmd->blm"}> : () -> ()
    %cst_108 = arith.constant dense<0.000000e+00> : vector<2x8x8xf32>
    %326 = tpu.matmul %324, %325, %cst_108 {dimension_numbers = #tpu.dot_dimension_numbers<[2], [2], [1], [1], [0, 0, 0, 1, 1, 1], [0], [0]>} : vector<2x8x8xbf16>, vector<2x8x8xbf16>, vector<2x8x8xf32> -> vector<2x8x8xf32>
    "tpu.trace_stop"() : () -> ()
    %cst_109 = arith.constant 0.353553385 : f32
    %327 = vector.broadcast %cst_109 : f32 to vector<2x8x8xf32>
    %328 = arith.mulf %326, %327 : vector<2x8x8xf32>
    %cst_110 = arith.constant dense<0xFF800000> : vector<2x8xf32>
    %329 = vector.multi_reduction <maximumf>, %328, %cst_110 [2] : vector<2x8x8xf32> to vector<2x8xf32>
    %330 = vector.shape_cast %329 : vector<2x8xf32> to vector<2x8x1xf32>
    %331 = vector.broadcast %330 : vector<2x8x1xf32> to vector<2x8x8xf32>
    %332 = arith.subf %328, %331 : vector<2x8x8xf32>
    %333 = math.exp %332 : vector<2x8x8xf32>
    %cst_111 = arith.constant dense<0.000000e+00> : vector<2x8xf32>
    %334 = vector.multi_reduction <add>, %333, %cst_111 [2] : vector<2x8x8xf32> to vector<2x8xf32>
    %335 = vector.shape_cast %334 : vector<2x8xf32> to vector<2x8x1xf32>
    %336 = tpu.reciprocal %335 {approx = true} : vector<2x8x1xf32> -> vector<2x8x1xf32>
    %337 = vector.broadcast %336 : vector<2x8x1xf32> to vector<2x8x8xf32>
    %338 = arith.mulf %333, %337 : vector<2x8x8xf32>
    %339 = arith.truncf %338 : vector<2x8x8xf32> to vector<2x8x8xbf16>
    %340 = arith.truncf %323 : vector<2x8x8xf32> to vector<2x8x8xbf16>
    "tpu.trace_start"() <{level = 10 : i32, message = "blm,bmd->bld"}> : () -> ()
    %cst_112 = arith.constant dense<0.000000e+00> : vector<2x8x8xf32>
    %341 = tpu.matmul %339, %340, %cst_112 {dimension_numbers = #tpu.dot_dimension_numbers<[2], [1], [1], [2], [0, 0, 0, 1, 1, 2], [0], [0]>} : vector<2x8x8xbf16>, vector<2x8x8xbf16>, vector<2x8x8xf32> -> vector<2x8x8xf32>
    "tpu.trace_stop"() : () -> ()
    %342 = vector.shape_cast %341 : vector<2x8x8xf32> to vector<16x8xf32>
    %343 = vector.extract_strided_slice %217 {offsets = [24, 0], sizes = [8, 32], strides = [1, 1]} : vector<32x32xf32> to vector<8x32xf32>
    %344 = arith.truncf %342 : vector<16x8xf32> to vector<16x8xbf16>
    %345 = arith.truncf %343 : vector<8x32xf32> to vector<8x32xbf16>
    %cst_113 = arith.constant dense<0.000000e+00> : vector<16x32xf32>
    %346 = tpu.matmul %344, %345, %cst_113 {dimension_numbers = #tpu.dot_dimension_numbers<[1], [0], [0], [1], [0, 0, 1, 1], [], []>} : vector<16x8xbf16>, vector<8x32xbf16>, vector<16x32xf32> -> vector<16x32xf32>
    %347 = arith.addf %317, %346 : vector<16x32xf32>
    %c1_114 = arith.constant 1 : index
    %c0_115 = arith.constant 0 : index
    %c0_116 = arith.constant 0 : index
    %348 = vector.load %arg5[%c1_114, %c0_115, %c0_116] : memref<2x1x32xf32, #tpu.memory_space<vmem>>, vector<1x1x32xf32>
    %349 = vector.shape_cast %348 : vector<1x1x32xf32> to vector<1x32xf32>
    %350 = vector.broadcast %349 : vector<1x32xf32> to vector<16x32xf32>
    %351 = arith.addf %347, %350 : vector<16x32xf32>
    %352 = arith.addf %213, %351 : vector<16x32xf32>
    %c1_117 = arith.constant 1 : index
    %c0_118 = arith.constant 0 : index
    %c0_119 = arith.constant 0 : index
    %353 = vector.load %arg6[%c1_117, %c0_118, %c0_119] : memref<2x1x32xf32, #tpu.memory_space<vmem>>, vector<1x1x32xf32>
    %354 = vector.shape_cast %353 : vector<1x1x32xf32> to vector<1x32xf32>
    %c1_120 = arith.constant 1 : index
    %c0_121 = arith.constant 0 : index
    %c0_122 = arith.constant 0 : index
    %355 = vector.load %arg7[%c1_120, %c0_121, %c0_122] : memref<2x1x32xf32, #tpu.memory_space<vmem>>, vector<1x1x32xf32>
    %356 = vector.shape_cast %355 : vector<1x1x32xf32> to vector<1x32xf32>
    %cst_123 = arith.constant dense<0.000000e+00> : vector<16xf32>
    %357 = vector.multi_reduction <add>, %352, %cst_123 [1] : vector<16x32xf32> to vector<16xf32>
    %358 = vector.shape_cast %357 : vector<16xf32> to vector<16x1xf32>
    %cst_124 = arith.constant 3.200000e+01 : f32
    %359 = vector.broadcast %cst_124 : f32 to vector<16x1xf32>
    %360 = arith.divf %358, %359 : vector<16x1xf32>
    %361 = vector.broadcast %360 : vector<16x1xf32> to vector<16x32xf32>
    %362 = arith.subf %352, %361 : vector<16x32xf32>
    %363 = arith.mulf %362, %362 : vector<16x32xf32>
    %cst_125 = arith.constant dense<0.000000e+00> : vector<16xf32>
    %364 = vector.multi_reduction <add>, %363, %cst_125 [1] : vector<16x32xf32> to vector<16xf32>
    %365 = vector.shape_cast %364 : vector<16xf32> to vector<16x1xf32>
    %cst_126 = arith.constant 3.200000e+01 : f32
    %366 = vector.broadcast %cst_126 : f32 to vector<16x1xf32>
    %367 = arith.divf %365, %366 : vector<16x1xf32>
    %368 = vector.broadcast %360 : vector<16x1xf32> to vector<16x32xf32>
    %369 = arith.subf %352, %368 : vector<16x32xf32>
    %cst_127 = arith.constant 9.99999974E-6 : f32
    %370 = vector.broadcast %cst_127 : f32 to vector<16x1xf32>
    %371 = arith.addf %367, %370 : vector<16x1xf32>
    %372 = math.rsqrt %371 : vector<16x1xf32>
    %373 = vector.broadcast %372 : vector<16x1xf32> to vector<16x32xf32>
    %374 = arith.mulf %369, %373 : vector<16x32xf32>
    %375 = vector.broadcast %354 : vector<1x32xf32> to vector<16x32xf32>
    %376 = arith.mulf %374, %375 : vector<16x32xf32>
    %377 = vector.broadcast %356 : vector<1x32xf32> to vector<16x32xf32>
    %378 = arith.addf %376, %377 : vector<16x32xf32>
    %c1_128 = arith.constant 1 : index
    %c0_129 = arith.constant 0 : index
    %c0_130 = arith.constant 0 : index
    %379 = vector.load %arg8[%c1_128, %c0_129, %c0_130] : memref<2x32x64xf32, #tpu.memory_space<vmem>>, vector<1x32x64xf32>
    %380 = vector.shape_cast %379 : vector<1x32x64xf32> to vector<32x64xf32>
    %381 = arith.truncf %378 : vector<16x32xf32> to vector<16x32xbf16>
    %382 = arith.truncf %380 : vector<32x64xf32> to vector<32x64xbf16>
    %cst_131 = arith.constant dense<0.000000e+00> : vector<16x64xf32>
    %383 = tpu.matmul %381, %382, %cst_131 {dimension_numbers = #tpu.dot_dimension_numbers<[1], [0], [0], [1], [0, 0, 1, 1], [], []>} : vector<16x32xbf16>, vector<32x64xbf16>, vector<16x64xf32> -> vector<16x64xf32>
    %c1_132 = arith.constant 1 : index
    %c0_133 = arith.constant 0 : index
    %c0_134 = arith.constant 0 : index
    %384 = vector.load %arg9[%c1_132, %c0_133, %c0_134] : memref<2x1x64xf32, #tpu.memory_space<vmem>>, vector<1x1x64xf32>
    %385 = vector.shape_cast %384 : vector<1x1x64xf32> to vector<1x64xf32>
    %386 = vector.broadcast %385 : vector<1x64xf32> to vector<16x64xf32>
    %387 = arith.addf %383, %386 : vector<16x64xf32>
    %cst_135 = arith.constant 0.000000e+00 : f32
    %388 = vector.broadcast %cst_135 : f32 to vector<16x64xf32>
    %389 = arith.maximumf %387, %388 : vector<16x64xf32>
    %c1_136 = arith.constant 1 : index
    %c0_137 = arith.constant 0 : index
    %c0_138 = arith.constant 0 : index
    %390 = vector.load %arg10[%c1_136, %c0_137, %c0_138] : memref<2x64x32xf32, #tpu.memory_space<vmem>>, vector<1x64x32xf32>
    %391 = vector.shape_cast %390 : vector<1x64x32xf32> to vector<64x32xf32>
    %392 = arith.truncf %389 : vector<16x64xf32> to vector<16x64xbf16>
    %393 = arith.truncf %391 : vector<64x32xf32> to vector<64x32xbf16>
    %cst_139 = arith.constant dense<0.000000e+00> : vector<16x32xf32>
    %394 = tpu.matmul %392, %393, %cst_139 {dimension_numbers = #tpu.dot_dimension_numbers<[1], [0], [0], [1], [0, 0, 1, 1], [], []>} : vector<16x64xbf16>, vector<64x32xbf16>, vector<16x32xf32> -> vector<16x32xf32>
    %c1_140 = arith.constant 1 : index
    %c0_141 = arith.constant 0 : index
    %c0_142 = arith.constant 0 : index
    %395 = vector.load %arg11[%c1_140, %c0_141, %c0_142] : memref<2x1x32xf32, #tpu.memory_space<vmem>>, vector<1x1x32xf32>
    %396 = vector.shape_cast %395 : vector<1x1x32xf32> to vector<1x32xf32>
    %397 = vector.broadcast %396 : vector<1x32xf32> to vector<16x32xf32>
    %398 = arith.addf %394, %397 : vector<16x32xf32>
    %399 = arith.addf %378, %398 : vector<16x32xf32>
    %c1_143 = arith.constant 1 : index
    %c0_144 = arith.constant 0 : index
    %c0_145 = arith.constant 0 : index
    %400 = vector.load %arg12[%c1_143, %c0_144, %c0_145] : memref<2x1x32xf32, #tpu.memory_space<vmem>>, vector<1x1x32xf32>
    %401 = vector.shape_cast %400 : vector<1x1x32xf32> to vector<1x32xf32>
    %c1_146 = arith.constant 1 : index
    %c0_147 = arith.constant 0 : index
    %c0_148 = arith.constant 0 : index
    %402 = vector.load %arg13[%c1_146, %c0_147, %c0_148] : memref<2x1x32xf32, #tpu.memory_space<vmem>>, vector<1x1x32xf32>
    %403 = vector.shape_cast %402 : vector<1x1x32xf32> to vector<1x32xf32>
    %cst_149 = arith.constant dense<0.000000e+00> : vector<16xf32>
    %404 = vector.multi_reduction <add>, %399, %cst_149 [1] : vector<16x32xf32> to vector<16xf32>
    %405 = vector.shape_cast %404 : vector<16xf32> to vector<16x1xf32>
    %cst_150 = arith.constant 3.200000e+01 : f32
    %406 = vector.broadcast %cst_150 : f32 to vector<16x1xf32>
    %407 = arith.divf %405, %406 : vector<16x1xf32>
    %408 = vector.broadcast %407 : vector<16x1xf32> to vector<16x32xf32>
    %409 = arith.subf %399, %408 : vector<16x32xf32>
    %410 = arith.mulf %409, %409 : vector<16x32xf32>
    %cst_151 = arith.constant dense<0.000000e+00> : vector<16xf32>
    %411 = vector.multi_reduction <add>, %410, %cst_151 [1] : vector<16x32xf32> to vector<16xf32>
    %412 = vector.shape_cast %411 : vector<16xf32> to vector<16x1xf32>
    %cst_152 = arith.constant 3.200000e+01 : f32
    %413 = vector.broadcast %cst_152 : f32 to vector<16x1xf32>
    %414 = arith.divf %412, %413 : vector<16x1xf32>
    %415 = vector.broadcast %407 : vector<16x1xf32> to vector<16x32xf32>
    %416 = arith.subf %399, %415 : vector<16x32xf32>
    %cst_153 = arith.constant 9.99999974E-6 : f32
    %417 = vector.broadcast %cst_153 : f32 to vector<16x1xf32>
    %418 = arith.addf %414, %417 : vector<16x1xf32>
    %419 = math.rsqrt %418 : vector<16x1xf32>
    %420 = vector.broadcast %419 : vector<16x1xf32> to vector<16x32xf32>
    %421 = arith.mulf %416, %420 : vector<16x32xf32>
    %422 = vector.broadcast %401 : vector<1x32xf32> to vector<16x32xf32>
    %423 = arith.mulf %421, %422 : vector<16x32xf32>
    %424 = vector.broadcast %403 : vector<1x32xf32> to vector<16x32xf32>
    %425 = arith.addf %423, %424 : vector<16x32xf32>
    %426 = vector.shape_cast %425 : vector<16x32xf32> to vector<2x8x32xf32>
    %cst_154 = arith.constant dense<0.000000e+00> : vector<2x32xf32>
    %427 = vector.multi_reduction <add>, %426, %cst_154 [1] : vector<2x8x32xf32> to vector<2x32xf32>
    %428 = tpu.concatenate %215, %427 in 1 : vector<2x32xf32>, vector<2x32xf32> -> vector<2x64xf32>
    %c0_155 = arith.constant 0 : index
    %c0_156 = arith.constant 0 : index
    %429 = vector.load %arg14[%c0_155, %c0_156] : memref<64x64xf32, #tpu.memory_space<vmem>>, vector<64x64xf32>
    %430 = arith.truncf %428 : vector<2x64xf32> to vector<2x64xbf16>
    %431 = arith.truncf %429 : vector<64x64xf32> to vector<64x64xbf16>
    %cst_157 = arith.constant dense<0.000000e+00> : vector<2x64xf32>
    %432 = tpu.matmul %430, %431, %cst_157 {dimension_numbers = #tpu.dot_dimension_numbers<[1], [0], [0], [1], [0, 0, 1, 1], [], []>} : vector<2x64xbf16>, vector<64x64xbf16>, vector<2x64xf32> -> vector<2x64xf32>
    %c0_158 = arith.constant 0 : index
    %c0_159 = arith.constant 0 : index
    %433 = vector.load %arg15[%c0_158, %c0_159] : memref<1x64xf32, #tpu.memory_space<vmem>>, vector<1x64xf32>
    %434 = vector.broadcast %433 : vector<1x64xf32> to vector<2x64xf32>
    %435 = arith.addf %432, %434 : vector<2x64xf32>
    %cst_160 = arith.constant 0.000000e+00 : f32
    %436 = vector.broadcast %cst_160 : f32 to vector<2x64xf32>
    %437 = arith.maximumf %435, %436 : vector<2x64xf32>
    %c0_161 = arith.constant 0 : index
    %c0_162 = arith.constant 0 : index
    %438 = vector.load %arg16[%c0_161, %c0_162] : memref<64x8xf32, #tpu.memory_space<vmem>>, vector<64x8xf32>
    %439 = arith.truncf %437 : vector<2x64xf32> to vector<2x64xbf16>
    %440 = arith.truncf %438 : vector<64x8xf32> to vector<64x8xbf16>
    %cst_163 = arith.constant dense<0.000000e+00> : vector<2x8xf32>
    %441 = tpu.matmul %439, %440, %cst_163 {dimension_numbers = #tpu.dot_dimension_numbers<[1], [0], [0], [1], [0, 0, 1, 1], [], []>} : vector<2x64xbf16>, vector<64x8xbf16>, vector<2x8xf32> -> vector<2x8xf32>
    %c0_164 = arith.constant 0 : index
    %c0_165 = arith.constant 0 : index
    %442 = vector.load %arg17[%c0_164, %c0_165] : memref<1x8xf32, #tpu.memory_space<vmem>>, vector<1x8xf32>
    %443 = vector.broadcast %442 : vector<1x8xf32> to vector<2x8xf32>
    %444 = arith.addf %441, %443 : vector<2x8xf32>
    %c0_166 = arith.constant 0 : index
    %c0_167 = arith.constant 0 : index
    %445 = vector.load %arg18[%c0_166, %c0_167] : memref<2x8xf32, #tpu.memory_space<vmem>>, vector<2x8xf32>
    tpu.vector_store %arg18[%c0_166, %c0_167], %444 {strides = array<i32>} : memref<2x8xf32, #tpu.memory_space<vmem>>, vector<2x8xf32>,
    return
  }
}

</mosaic_0001>

<llo_original>
// kernel: global_transform_v2_forward.1
$region0: #{global_transform_v2_forward.1}
  #allocation0 [shape = 'u32[]', space=smem, size = 0x4, offset = 0x4, fixed_abs, tag = 'smem constant byte address 0x4 - core index']
  #allocation1 [shape = 'u32[144,128]{1,0:T(1,128)}', space=vmem, size = 0x12000, scoped, tag = 'internal scratch']
  %s0 = inlined_call_operand.vmem [shape: f32[2,8,24], index: 0, kind: input, shape index: {}]
  %s1 = inlined_call_operand.vmem [shape: f32[2,8,8], index: 1, kind: input, shape index: {}]
  %s2 = inlined_call_operand.vmem [shape: f32[2,32,96], index: 2, kind: input, shape index: {}]
  %s3 = inlined_call_operand.vmem [shape: f32[2,1,96], index: 3, kind: input, shape index: {}]
  %s4 = inlined_call_operand.vmem [shape: f32[2,32,32], index: 4, kind: input, shape index: {}]
  %s5 = inlined_call_operand.vmem [shape: f32[2,1,32], index: 5, kind: input, shape index: {}]
  %s6 = inlined_call_operand.vmem [shape: f32[2,1,32], index: 6, kind: input, shape index: {}]
  %s7 = inlined_call_operand.vmem [shape: f32[2,1,32], index: 7, kind: input, shape index: {}]
  %s8 = inlined_call_operand.vmem [shape: f32[2,32,64], index: 8, kind: input, shape index: {}]
  %s9 = inlined_call_operand.hbm [shape: f32[2,1,64], index: 9, kind: input, shape index: {}]
  %s10 = inlined_call_operand.vmem [shape: f32[2,64,32], index: 10, kind: input, shape index: {}]
  %s11 = inlined_call_operand.hbm [shape: f32[2,1,32], index: 11, kind: input, shape index: {}]
  %s12 = inlined_call_operand.vmem [shape: f32[2,1,32], index: 12, kind: input, shape index: {}]
  %s13 = inlined_call_operand.vmem [shape: f32[2,1,32], index: 13, kind: input, shape index: {}]
  %s14 = inlined_call_operand.hbm [shape: f32[64,64], index: 14, kind: input, shape index: {}]
  %s15 = inlined_call_operand.vmem [shape: f32[1,64], index: 15, kind: input, shape index: {}]
  %s16 = inlined_call_operand.vmem [shape: f32[64,8], index: 16, kind: input, shape index: {}]
  %s17 = inlined_call_operand.vmem [shape: f32[1,8], index: 17, kind: input, shape index: {}]
  %s18 = inlined_call_operand.hbm [shape: f32[2,8], index: 18, kind: output, shape index: {}]
  %s19 = sld [smem:[#allocation0]]
  $region94: #{global_transform_v2_forward.1} parent=0
    _
  %s21 = ssub.s32 1, %s19
  %s22 = scalar_select 0, %s21, %s19
  $region1: #{global_transform_v2_forward.1} parent=0
    #allocation2 [shape = 'u8[1024]{0}', space=vmem, size = 0x400, scoped, tag = 'input window, operand 9, single buffered']
    #allocation3 [shape = 's32[1]{0}', space=sflag, size = 0x4, scoped, tag = 'scoped memory for global_transform_v2_forward.1']
    #allocation4 [shape = 's32[1]{0}', space=sflag, size = 0x4, scoped, tag = 'scoped memory for global_transform_v2_forward.1']
    #allocation5 [shape = 'u8[1024]{0}', space=vmem, size = 0x400, scoped, tag = 'input window, operand 11, single buffered']
    #allocation6 [shape = 's32[1]{0}', space=sflag, size = 0x4, scoped, tag = 'scoped memory for global_transform_v2_forward.1']
    #allocation7 [shape = 'u8[32768]{0}', space=vmem, size = 0x8000, scoped, tag = 'input window, operand 14, single buffered']
    #allocation8 [shape = 'u8[1024]{0}', space=vmem, size = 0x400, scoped, tag = 'output window, operand 0, single buffered']
    %23 = vsyncpa [#allocation3], 0
    %24 = vsyncpa [#allocation6], 0
    %25 = vsyncpa [#allocation4], 0
    // Predicated region
    $region2: #{global_transform_v2_forward.1} parent=1 // pred_check
      _
    $region3: #{global_transform_v2_forward.1} parent=1 // pred_check_branch
      %27 = sbr.rel (0) target = $region5
    $region4: #{global_transform_v2_forward.1} parent=1 // pred_region
      _
    $region5: #{global_transform_v2_forward.1} parent=1 // pred_fallthru
      _
    // Predicated region
    $region6: #{global_transform_v2_forward.1} parent=1 // pred_check
      _
    $region7: #{global_transform_v2_forward.1} parent=1 // pred_check_branch
      %29 = sbr.rel (0) target = $region9
    $region8: #{global_transform_v2_forward.1} parent=1 // pred_region
      _
    $region9: #{global_transform_v2_forward.1} parent=1 // pred_fallthru
      _
    // Predicated region
    $region10: #{global_transform_v2_forward.1} parent=1 // pred_check
      _
    $region11: #{global_transform_v2_forward.1} parent=1 // pred_check_branch
      %31 = sbr.rel (0) target = $region13
    $region12: #{global_transform_v2_forward.1} parent=1 // pred_region
      _
    $region13: #{global_transform_v2_forward.1} parent=1 // pred_fallthru
      _
    // Predicated region
    $region14: #{global_transform_v2_forward.1} parent=1 // pred_check
      _
    $region15: #{global_transform_v2_forward.1} parent=1 // pred_check_branch
      %33 = sbr.rel (0) target = $region17
    $region16: #{global_transform_v2_forward.1} parent=1 // pred_region
      _
    $region17: #{global_transform_v2_forward.1} parent=1 // pred_fallthru
      _
    // Predicated region
    $region18: #{global_transform_v2_forward.1} parent=1 // pred_check
      _
    $region19: #{global_transform_v2_forward.1} parent=1 // pred_check_branch
      %35 = sbr.rel (0) target = $region21
    $region20: #{global_transform_v2_forward.1} parent=1 // pred_region
      _
    $region21: #{global_transform_v2_forward.1} parent=1 // pred_fallthru
      _
    // Predicated region
    $region22: #{global_transform_v2_forward.1} parent=1 // pred_check
      _
    $region23: #{global_transform_v2_forward.1} parent=1 // pred_check_branch
      %37 = sbr.rel (0) target = $region25
    $region24: #{global_transform_v2_forward.1} parent=1 // pred_region
      _
    $region25: #{global_transform_v2_forward.1} parent=1 // pred_fallthru
      _
    // Predicated region
    $region26: #{global_transform_v2_forward.1} parent=1 // pred_check
      _
    $region27: #{global_transform_v2_forward.1} parent=1 // pred_check_branch
      %39 = sbr.rel (0) target = $region29
    $region28: #{global_transform_v2_forward.1} parent=1 // pred_region
      _
    $region29: #{global_transform_v2_forward.1} parent=1 // pred_fallthru
      _
    // Predicated region
    $region30: #{global_transform_v2_forward.1} parent=1 // pred_check
      _
    $region31: #{global_transform_v2_forward.1} parent=1 // pred_check_branch
      %41 = sbr.rel (0) target = $region33
    $region32: #{global_transform_v2_forward.1} parent=1 // pred_region
      _
    $region33: #{global_transform_v2_forward.1} parent=1 // pred_fallthru
      _
    // Predicated region
    $region34: #{global_transform_v2_forward.1} parent=1 // pred_check
      _
    $region35: #{global_transform_v2_forward.1} parent=1 // pred_check_branch
      %43 = sbr.rel (0) target = $region37
    $region36: #{global_transform_v2_forward.1} parent=1 // pred_region
      _
    $region37: #{global_transform_v2_forward.1} parent=1 // pred_fallthru
      _
    // Predicated region
    $region38: #{global_transform_v2_forward.1} parent=1 // pred_check
      _
    $region39: #{global_transform_v2_forward.1} parent=1 // pred_check_branch
      %45 = sbr.rel (0) target = $region41
    $region40: #{global_transform_v2_forward.1} parent=1 // pred_region
      %s47 = ssub.s32 32, 32
      %48 = vsyncadd [#allocation3], %s47
      %s49 = sshll.u32 [#allocation2], 4
      %s50 = int_to_ptr.vmem [resolvable:$true] %s49
      %55 = dma.hbm_to_vmem [thread:$0]  %s9, 32, %s50, [#allocation3], 16, 16, 1
    $region41: #{global_transform_v2_forward.1} parent=1 // pred_fallthru
      _
    // Predicated region
    $region42: #{global_transform_v2_forward.1} parent=1 // pred_check
      _
    $region43: #{global_transform_v2_forward.1} parent=1 // pred_check_branch
      %57 = sbr.rel (0) target = $region45
    $region44: #{global_transform_v2_forward.1} parent=1 // pred_region
      _
    $region45: #{global_transform_v2_forward.1} parent=1 // pred_fallthru
      _
    // Predicated region
    $region46: #{global_transform_v2_forward.1} parent=1 // pred_check
      _
    $region47: #{global_transform_v2_forward.1} parent=1 // pred_check_branch
      %59 = sbr.rel (0) target = $region49
    $region48: #{global_transform_v2_forward.1} parent=1 // pred_region
      %s61 = ssub.s32 32, 32
      %62 = vsyncadd [#allocation6], %s61
      %s63 = sshll.u32 [#allocation5], 4
      %s64 = int_to_ptr.vmem [resolvable:$true] %s63
      %69 = dma.hbm_to_vmem [thread:$0]  %s11, 32, %s64, [#allocation6], 16, 16, 1
    $region49: #{global_transform_v2_forward.1} parent=1 // pred_fallthru
      _
    // Predicated region
    $region50: #{global_transform_v2_forward.1} parent=1 // pred_check
      _
    $region51: #{global_transform_v2_forward.1} parent=1 // pred_check_branch
      %71 = sbr.rel (0) target = $region53
    $region52: #{global_transform_v2_forward.1} parent=1 // pred_region
      _
    $region53: #{global_transform_v2_forward.1} parent=1 // pred_fallthru
      _
    // Predicated region
    $region54: #{global_transform_v2_forward.1} parent=1 // pred_check
      _
    $region55: #{global_transform_v2_forward.1} parent=1 // pred_check_branch
      %73 = sbr.rel (0) target = $region57
    $region56: #{global_transform_v2_forward.1} parent=1 // pred_region
      _
    $region57: #{global_transform_v2_forward.1} parent=1 // pred_fallthru
      _
    // Predicated region
    $region58: #{global_transform_v2_forward.1} parent=1 // pred_check
      _
    $region59: #{global_transform_v2_forward.1} parent=1 // pred_check_branch
      %75 = sbr.rel (0) target = $region61
    $region60: #{global_transform_v2_forward.1} parent=1 // pred_region
      %s77 = ssub.s32 1024, 1024
      %78 = vsyncadd [#allocation6], %s77
      %s79 = sshll.u32 [#allocation7], 4
      %s80 = int_to_ptr.vmem [resolvable:$true] %s79
      %85 = dma.hbm_to_vmem [thread:$0]  %s14, 1024, %s80, [#allocation6], 128, 128, 8
    $region61: #{global_transform_v2_forward.1} parent=1 // pred_fallthru
      _
    // Predicated region
    $region62: #{global_transform_v2_forward.1} parent=1 // pred_check
      _
    $region63: #{global_transform_v2_forward.1} parent=1 // pred_check_branch
      %87 = sbr.rel (0) target = $region65
    $region64: #{global_transform_v2_forward.1} parent=1 // pred_region
      _
    $region65: #{global_transform_v2_forward.1} parent=1 // pred_fallthru
      _
    // Predicated region
    $region66: #{global_transform_v2_forward.1} parent=1 // pred_check
      _
    $region67: #{global_transform_v2_forward.1} parent=1 // pred_check_branch
      %89 = sbr.rel (0) target = $region69
    $region68: #{global_transform_v2_forward.1} parent=1 // pred_region
      _
    $region69: #{global_transform_v2_forward.1} parent=1 // pred_fallthru
      _
    // Predicated region
    $region70: #{global_transform_v2_forward.1} parent=1 // pred_check
      _
    $region71: #{global_transform_v2_forward.1} parent=1 // pred_check_branch
      %91 = sbr.rel (0) target = $region73
    $region72: #{global_transform_v2_forward.1} parent=1 // pred_region
      _
    $region73: #{global_transform_v2_forward.1} parent=1 // pred_fallthru
      _
    // Predicated region
    $region74: #{global_transform_v2_forward.1} parent=1 // pred_check
      _
    $region75: #{global_transform_v2_forward.1} parent=1 // pred_check_branch
      %93 = sbr.rel (0) target = $region77
    $region76: #{global_transform_v2_forward.1} parent=1 // pred_region
      %94 = dma.done [#allocation3], 32
    $region77: #{global_transform_v2_forward.1} parent=1 // pred_fallthru
      _
    // Predicated region
    $region78: #{global_transform_v2_forward.1} parent=1 // pred_check
      _
    $region79: #{global_transform_v2_forward.1} parent=1 // pred_check_branch
      %96 = sbr.rel (0) target = $region81
    $region80: #{global_transform_v2_forward.1} parent=1 // pred_region
      %97 = dma.done [#allocation6], 32
    $region81: #{global_transform_v2_forward.1} parent=1 // pred_fallthru
      _
    // Predicated region
    $region82: #{global_transform_v2_forward.1} parent=1 // pred_check
      _
    $region83: #{global_transform_v2_forward.1} parent=1 // pred_check_branch
      %99 = sbr.rel (0) target = $region85
    $region84: #{global_transform_v2_forward.1} parent=1 // pred_region
      %100 = dma.done [#allocation6], 1024
    $region85: #{global_transform_v2_forward.1} parent=1 // pred_fallthru
      _
    %v102 = vld [vmem:[%s0] sm:$0xff]
    %v103 = vld [vmem:[%s0 + $0x8] sm:$0xff]
    %v104 = vld [vmem:[%s1] sm:$0xff]
    %v105 = vld [vmem:[%s1 + $0x8] sm:$0xff]
    %108 = vrot.lane.b32.xlu0 %v104, 24
    %v109 = vpop.permute.xlu0 %108
    %110 = vrot.lane.b32.xlu0 %v105, 24
    %v111 = vpop.permute.xlu0 %110
    %vm114 = vcmask 195584
    %v115 = vsel %vm114, %v102, %v109
    %v116 = vsel %vm114, %v103, %v111
    %v117 = vld [vmem:[%s4] sm:$0xff]
    %v118 = vld [vmem:[%s4 + $0x8] sm:$0xff]
    %v119 = vld [vmem:[%s4 + $0x10] sm:$0xff]
    %v120 = vld [vmem:[%s4 + $0x18] sm:$0xff]
    %v121 = vld [vmem:[%s2] sm:$0xff]
    %v122 = vld [vmem:[%s2 + $0x8] sm:$0xff]
    %v123 = vld [vmem:[%s2 + $0x10] sm:$0xff]
    %v124 = vld [vmem:[%s2 + $0x18] sm:$0xff]
    %v125 = vpack.c.bf16 %v116, %v115
    %v126 = vpack.c.bf16 %v122, %v121
    %v127 = vpack.c.bf16 %v124, %v123
    %v128 = vld [vmem:[%s3] sm:$0x1]
    %v130 = vlaneseq
    %v131 = vshrl.u32 %v130, 7
    %v132 = vsub.s32 0, %v131
    %v133 = vrot.slane %v128, %v132
    %vm135 = vcmask 261120
    %v137 = vsel %vm135, %v125, 0
    %139 = vmatprep.subr.bf16.mxu0 0
    %140 = vmatpush1.bf16.msra.mxu0 %v126
    %141 = vmatprep.subr.bf16.mxu0 0
    %142 = vmatpush1.bf16.msra.mxu0 %v127
    %143 = vmatprep.subr.bf16.mxu0 0
    %144 = vmatpush1.bf16.msra.mxu0 0
    %145 = vmatprep.subr.bf16.mxu0 0
    %146 = vmatpush1.bf16.msra.mxu0 0
    %147 = vmatprep.subr.bf16.mxu0 0
    %148 = vmatpush1.bf16.msra.mxu0 0
    %149 = vmatprep.subr.bf16.mxu0 0
    %150 = vmatpush1.bf16.msra.mxu0 0
    %151 = vmatprep.subr.bf16.mxu0 0
    %152 = vmatpush1.bf16.msra.mxu0 0
    %153 = vmatprep.subr.bf16.mxu0 0
    %154 = vmatpush1.bf16.msra.mxu0 0
    %155 = vmatprep.subr.bf16.mxu0 0
    %156 = vmatpush1.bf16.msra.mxu0 0
    %157 = vmatprep.subr.bf16.mxu0 0
    %158 = vmatpush1.bf16.msra.mxu0 0
    %159 = vmatprep.subr.bf16.mxu0 0
    %160 = vmatpush1.bf16.msra.mxu0 0
    %161 = vmatprep.subr.bf16.mxu0 0
    %162 = vmatpush1.bf16.msra.mxu0 0
    %163 = vmatprep.subr.bf16.mxu0 0
    %164 = vmatpush1.bf16.msra.mxu0 0
    %165 = vmatprep.subr.bf16.mxu0 0
    %166 = vmatpush1.bf16.msra.mxu0 0
    %167 = vmatprep.subr.bf16.mxu0 0
    %168 = vmatpush1.bf16.msra.mxu0 0
    %169 = vmatprep.subr.bf16.mxu0 0
    %170 = vmatpush1.bf16.msra.mxu0 0
    %171 = vmatprep.mubr.bf16.mxu0 0
    %172 = vmatmul.mubr.bf16.gmra.mrb[0].mxu0 %v137
    %v173 = vpop.f32.mrb[0].mxu0
    %v174 = vadd.f32 %v133, %v173
    %v175 = vpop.f32.mrb[0].mxu0
    %v176 = vpop.f32.mrb[0].mxu0
    %v177 = vadd.f32 %v133, %v176
    %v178 = vpop.f32.mrb[0].mxu0
    %179 = vdwg.mxu0
    %v180 = vpack.c.bf16 %v174, %v174
    %v181 = vpack.c.bf16 %v177, %v177
    %183 = vrot.lane.b32.xlu0 %v180, 96
    %v184 = vpop.permute.xlu0 %183
    %vm185 = vcmask 64512
    %v187 = vsel %vm185, %v180, 0
    %v190 = vsel %vm185, %v184, 0
    %192 = vmatprep.subr.bf16.mxu0 0
    %193 = vmatpush1.bf16.xpose.msra.mxu0 %v190
    %194 = vmatprep.subr.bf16.mxu0 0
    %195 = vmatpush1.bf16.xpose.msra.mxu0 0
    %196 = vmatprep.subr.bf16.mxu0 0
    %197 = vmatpush1.bf16.xpose.msra.mxu0 0
    %198 = vmatprep.subr.bf16.mxu0 0
    %199 = vmatpush1.bf16.xpose.msra.mxu0 0
    %200 = vmatprep.subr.bf16.mxu0 0
    %201 = vmatpush1.bf16.xpose.msra.mxu0 0
    %202 = vmatprep.subr.bf16.mxu0 0
    %203 = vmatpush1.bf16.xpose.msra.mxu0 0
    %204 = vmatprep.subr.bf16.mxu0 0
    %205 = vmatpush1.bf16.xpose.msra.mxu0 0
    %206 = vmatprep.subr.bf16.mxu0 0
    %207 = vmatpush1.bf16.xpose.msra.mxu0 0
    %208 = vmatprep.subr.bf16.mxu0 0
    %209 = vmatpush1.bf16.xpose.msra.mxu0 0
    %210 = vmatprep.subr.bf16.mxu0 0
    %211 = vmatpush1.bf16.xpose.msra.mxu0 0
    %212 = vmatprep.subr.bf16.mxu0 0
    %213 = vmatpush1.bf16.xpose.msra.mxu0 0
    %214 = vmatprep.subr.bf16.mxu0 0
    %215 = vmatpush1.bf16.xpose.msra.mxu0 0
    %216 = vmatprep.subr.bf16.mxu0 0
    %217 = vmatpush1.bf16.xpose.msra.mxu0 0
    %218 = vmatprep.subr.bf16.mxu0 0
    %219 = vmatpush1.bf16.xpose.msra.mxu0 0
    %220 = vmatprep.subr.bf16.mxu0 0
    %221 = vmatpush1.bf16.xpose.msra.mxu0 0
    %222 = vmatprep.subr.bf16.mxu0 0
    %223 = vmatpush1.bf16.xpose.msra.mxu0 0
    %224 = vmatprep.mubr.bf16.mxu0 0
    %225 = vmatmul.mubr.bf16.gmra.mrb[0].mxu0 %v187
    %v226 = vpop.f32.mrb[0].mxu0
    %v227 = vadd.f32 0.0, %v226
    %v228 = vpop.f32.mrb[0].mxu0
    %v229 = vpop.f32.mrb[0].mxu0
    %v230 = vpop.f32.mrb[0].mxu0
    %231 = vdwg.mxu0
    %233 = vrot.lane.b32.xlu0 %v181, 96
    %v234 = vpop.permute.xlu0 %233
    %v236 = vsel %vm185, %v181, 0
    %v239 = vsel %vm185, %v234, 0
    %241 = vmatprep.subr.bf16.mxu0 0
    %242 = vmatpush1.bf16.xpose.msra.mxu0 %v239
    %243 = vmatprep.subr.bf16.mxu0 0
    %244 = vmatpush1.bf16.xpose.msra.mxu0 0
    %245 = vmatprep.subr.bf16.mxu0 0
    %246 = vmatpush1.bf16.xpose.msra.mxu0 0
    %247 = vmatprep.subr.bf16.mxu0 0
    %248 = vmatpush1.bf16.xpose.msra.mxu0 0
    %249 = vmatprep.subr.bf16.mxu0 0
    %250 = vmatpush1.bf16.xpose.msra.mxu0 0
    %251 = vmatprep.subr.bf16.mxu0 0
    %252 = vmatpush1.bf16.xpose.msra.mxu0 0
    %253 = vmatprep.subr.bf16.mxu0 0
    %254 = vmatpush1.bf16.xpose.msra.mxu0 0
    %255 = vmatprep.subr.bf16.mxu0 0
    %256 = vmatpush1.bf16.xpose.msra.mxu0 0
    %257 = vmatprep.subr.bf16.mxu0 0
    %258 = vmatpush1.bf16.xpose.msra.mxu0 0
    %259 = vmatprep.subr.bf16.mxu0 0
    %260 = vmatpush1.bf16.xpose.msra.mxu0 0
    %261 = vmatprep.subr.bf16.mxu0 0
    %262 = vmatpush1.bf16.xpose.msra.mxu0 0
    %263 = vmatprep.subr.bf16.mxu0 0
    %264 = vmatpush1.bf16.xpose.msra.mxu0 0
    %265 = vmatprep.subr.bf16.mxu0 0
    %266 = vmatpush1.bf16.xpose.msra.mxu0 0
    %267 = vmatprep.subr.bf16.mxu0 0
    %268 = vmatpush1.bf16.xpose.msra.mxu0 0
    %269 = vmatprep.subr.bf16.mxu0 0
    %270 = vmatpush1.bf16.xpose.msra.mxu0 0
    %271 = vmatprep.subr.bf16.mxu0 0
    %272 = vmatpush1.bf16.xpose.msra.mxu0 0
    %273 = vmatprep.mubr.bf16.mxu0 0
    %274 = vmatmul.mubr.bf16.gmra.mrb[0].mxu0 %v236
    %v275 = vpop.f32.mrb[0].mxu0
    %v276 = vadd.f32 0.0, %v275
    %v277 = vpop.f32.mrb[0].mxu0
    %v278 = vpop.f32.mrb[0].mxu0
    %v279 = vpop.f32.mrb[0].mxu0
    %280 = vdwg.mxu0
    %v281 = vmul.f32 %v227, 0.35355338
    %v282 = vmul.f32 %v276, 0.35355338
    %v283 = vsel %vm185, %v281, -inf
    %284 = vmax.xlane.f32.xlu0 %v283
    %v285 = vpop.xlane.xlu0 %284
    %v286 = vsel %vm185, %v282, -inf
    %287 = vmax.xlane.f32.xlu0 %v286
    %v288 = vpop.xlane.xlu0 %287
    %v289 = vsub.f32 %v281, %v285
    %v290 = vsub.f32 %v282, %v288
    %v291 = vmul.f32 %v289, 1.442695
    %v292 = vpow.pop %v291
    %v293 = vmul.f32 %v290, 1.442695
    %v294 = vpow.pop %v293
    %v295 = vsel %vm185, %v292, 0.0
    %296 = vadd.xlane.f32.xlu0 %v295
    %v297 = vpop.xlane.xlu0 %296
    %v298 = vsel %vm185, %v294, 0.0
    %299 = vadd.xlane.f32.xlu0 %v298
    %v300 = vpop.xlane.xlu0 %299
    %v301 = vrcp.pop %v297
    %v302 = vrcp.pop %v300
    %v303 = vmul.f32 %v292, %v301
    %v304 = vmul.f32 %v294, %v302
    %v305 = vpack.c.bf16 %v303, %v303
    %v306 = vpack.c.bf16 %v304, %v304
    %307 = vrot.lane.b32.xlu0 %v180, 64
    %v308 = vpop.permute.xlu0 %307
    %v310 = vsel %vm185, %v305, 0
    %vm312 = vcmask 1043456
    %v314 = vsel %vm312, %v308, 0
    %316 = vmatprep.subr.bf16.mxu0 0
    %317 = vmatpush1.bf16.msra.mxu0 %v314
    %318 = vmatprep.subr.bf16.mxu0 0
    %319 = vmatpush1.bf16.msra.mxu0 0
    %320 = vmatprep.subr.bf16.mxu0 0
    %321 = vmatpush1.bf16.msra.mxu0 0
    %322 = vmatprep.subr.bf16.mxu0 0
    %323 = vmatpush1.bf16.msra.mxu0 0
    %324 = vmatprep.subr.bf16.mxu0 0
    %325 = vmatpush1.bf16.msra.mxu0 0
    %326 = vmatprep.subr.bf16.mxu0 0
    %327 = vmatpush1.bf16.msra.mxu0 0
    %328 = vmatprep.subr.bf16.mxu0 0
    %329 = vmatpush1.bf16.msra.mxu0 0
    %330 = vmatprep.subr.bf16.mxu0 0
    %331 = vmatpush1.bf16.msra.mxu0 0
    %332 = vmatprep.subr.bf16.mxu0 0
    %333 = vmatpush1.bf16.msra.mxu0 0
    %334 = vmatprep.subr.bf16.mxu0 0
    %335 = vmatpush1.bf16.msra.mxu0 0
    %336 = vmatprep.subr.bf16.mxu0 0
    %337 = vmatpush1.bf16.msra.mxu0 0
    %338 = vmatprep.subr.bf16.mxu0 0
    %339 = vmatpush1.bf16.msra.mxu0 0
    %340 = vmatprep.subr.bf16.mxu0 0
    %341 = vmatpush1.bf16.msra.mxu0 0
    %342 = vmatprep.subr.bf16.mxu0 0
    %343 = vmatpush1.bf16.msra.mxu0 0
    %344 = vmatprep.subr.bf16.mxu0 0
    %345 = vmatpush1.bf16.msra.mxu0 0
    %346 = vmatprep.subr.bf16.mxu0 0
    %347 = vmatpush1.bf16.msra.mxu0 0
    %348 = vmatprep.mubr.bf16.mxu0 0
    %349 = vmatmul.mubr.bf16.gmra.mrb[0].mxu0 %v310
    %v350 = vpop.f32.mrb[0].mxu0
    %v351 = vadd.f32 0.0, %v350
    %v352 = vpop.f32.mrb[0].mxu0
    %v353 = vpop.f32.mrb[0].mxu0
    %v354 = vpop.f32.mrb[0].mxu0
    %355 = vdwg.mxu0
    %356 = vrot.lane.b32.xlu0 %v181, 64
    %v357 = vpop.permute.xlu0 %356
    %v359 = vsel %vm185, %v306, 0
    %v362 = vsel %vm312, %v357, 0
    %364 = vmatprep.subr.bf16.mxu0 0
    %365 = vmatpush1.bf16.msra.mxu0 %v362
    %366 = vmatprep.subr.bf16.mxu0 0
    %367 = vmatpush1.bf16.msra.mxu0 0
    %368 = vmatprep.subr.bf16.mxu0 0
    %369 = vmatpush1.bf16.msra.mxu0 0
    %370 = vmatprep.subr.bf16.mxu0 0
    %371 = vmatpush1.bf16.msra.mxu0 0
    %372 = vmatprep.subr.bf16.mxu0 0
    %373 = vmatpush1.bf16.msra.mxu0 0
    %374 = vmatprep.subr.bf16.mxu0 0
    %375 = vmatpush1.bf16.msra.mxu0 0
    %376 = vmatprep.subr.bf16.mxu0 0
    %377 = vmatpush1.bf16.msra.mxu0 0
    %378 = vmatprep.subr.bf16.mxu0 0
    %379 = vmatpush1.bf16.msra.mxu0 0
    %380 = vmatprep.subr.bf16.mxu0 0
    %381 = vmatpush1.bf16.msra.mxu0 0
    %382 = vmatprep.subr.bf16.mxu0 0
    %383 = vmatpush1.bf16.msra.mxu0 0
    %384 = vmatprep.subr.bf16.mxu0 0
    %385 = vmatpush1.bf16.msra.mxu0 0
    %386 = vmatprep.subr.bf16.mxu0 0
    %387 = vmatpush1.bf16.msra.mxu0 0
    %388 = vmatprep.subr.bf16.mxu0 0
    %389 = vmatpush1.bf16.msra.mxu0 0
    %390 = vmatprep.subr.bf16.mxu0 0
    %391 = vmatpush1.bf16.msra.mxu0 0
    %392 = vmatprep.subr.bf16.mxu0 0
    %393 = vmatpush1.bf16.msra.mxu0 0
    %394 = vmatprep.subr.bf16.mxu0 0
    %395 = vmatpush1.bf16.msra.mxu0 0
    %396 = vmatprep.mubr.bf16.mxu0 0
    %397 = vmatmul.mubr.bf16.gmra.mrb[0].mxu0 %v359
    %v398 = vpop.f32.mrb[0].mxu0
    %v399 = vadd.f32 0.0, %v398
    %v400 = vpop.f32.mrb[0].mxu0
    %v401 = vpop.f32.mrb[0].mxu0
    %v402 = vpop.f32.mrb[0].mxu0
    %403 = vdwg.mxu0
    %v404 = vpack.c.bf16 %v399, %v351
    %v405 = vpack.c.bf16 %v117, %v117
    %406 = vrot.lane.b32.xlu0 %v180, 120
    %v407 = vpop.permute.xlu0 %406
    %408 = vrot.lane.b32.xlu0 %v180, 88
    %v409 = vpop.permute.xlu0 %408
    %v411 = vsel %vm185, %v407, 0
    %v414 = vsel %vm185, %v409, 0
    %416 = vmatprep.subr.bf16.mxu0 0
    %417 = vmatpush1.bf16.xpose.msra.mxu0 %v414
    %418 = vmatprep.subr.bf16.mxu0 0
    %419 = vmatpush1.bf16.xpose.msra.mxu0 0
    %420 = vmatprep.subr.bf16.mxu0 0
    %421 = vmatpush1.bf16.xpose.msra.mxu0 0
    %422 = vmatprep.subr.bf16.mxu0 0
    %423 = vmatpush1.bf16.xpose.msra.mxu0 0
    %424 = vmatprep.subr.bf16.mxu0 0
    %425 = vmatpush1.bf16.xpose.msra.mxu0 0
    %426 = vmatprep.subr.bf16.mxu0 0
    %427 = vmatpush1.bf16.xpose.msra.mxu0 0
    %428 = vmatprep.subr.bf16.mxu0 0
    %429 = vmatpush1.bf16.xpose.msra.mxu0 0
    %430 = vmatprep.subr.bf16.mxu0 0
    %431 = vmatpush1.bf16.xpose.msra.mxu0 0
    %432 = vmatprep.subr.bf16.mxu0 0
    %433 = vmatpush1.bf16.xpose.msra.mxu0 0
    %434 = vmatprep.subr.bf16.mxu0 0
    %435 = vmatpush1.bf16.xpose.msra.mxu0 0
    %436 = vmatprep.subr.bf16.mxu0 0
    %437 = vmatpush1.bf16.xpose.msra.mxu0 0
    %438 = vmatprep.subr.bf16.mxu0 0
    %439 = vmatpush1.bf16.xpose.msra.mxu0 0
    %440 = vmatprep.subr.bf16.mxu0 0
    %441 = vmatpush1.bf16.xpose.msra.mxu0 0
    %442 = vmatprep.subr.bf16.mxu0 0
    %443 = vmatpush1.bf16.xpose.msra.mxu0 0
    %444 = vmatprep.subr.bf16.mxu0 0
    %445 = vmatpush1.bf16.xpose.msra.mxu0 0
    %446 = vmatprep.subr.bf16.mxu0 0
    %447 = vmatpush1.bf16.xpose.msra.mxu0 0
    %448 = vmatprep.mubr.bf16.mxu0 0
    %449 = vmatmul.mubr.bf16.gmra.mrb[0].mxu0 %v411
    %v450 = vpop.f32.mrb[0].mxu0
    %v451 = vadd.f32 0.0, %v450
    %v452 = vpop.f32.mrb[0].mxu0
    %v453 = vpop.f32.mrb[0].mxu0
    %v454 = vpop.f32.mrb[0].mxu0
    %455 = vdwg.mxu0
    %456 = vrot.lane.b32.xlu0 %v181, 120
    %v457 = vpop.permute.xlu0 %456
    %458 = vrot.lane.b32.xlu0 %v181, 88
    %v459 = vpop.permute.xlu0 %458
    %v461 = vsel %vm185, %v457, 0
    %v464 = vsel %vm185, %v459, 0
    %466 = vmatprep.subr.bf16.mxu0 0
    %467 = vmatpush1.bf16.xpose.msra.mxu0 %v464
    %468 = vmatprep.subr.bf16.mxu0 0
    %469 = vmatpush1.bf16.xpose.msra.mxu0 0
    %470 = vmatprep.subr.bf16.mxu0 0
    %471 = vmatpush1.bf16.xpose.msra.mxu0 0
    %472 = vmatprep.subr.bf16.mxu0 0
    %473 = vmatpush1.bf16.xpose.msra.mxu0 0
    %474 = vmatprep.subr.bf16.mxu0 0
    %475 = vmatpush1.bf16.xpose.msra.mxu0 0
    %476 = vmatprep.subr.bf16.mxu0 0
    %477 = vmatpush1.bf16.xpose.msra.mxu0 0
    %478 = vmatprep.subr.bf16.mxu0 0
    %479 = vmatpush1.bf16.xpose.msra.mxu0 0
    %480 = vmatprep.subr.bf16.mxu0 0
    %481 = vmatpush1.bf16.xpose.msra.mxu0 0
    %482 = vmatprep.subr.bf16.mxu0 0
    %483 = vmatpush1.bf16.xpose.msra.mxu0 0
    %484 = vmatprep.subr.bf16.mxu0 0
    %485 = vmatpush1.bf16.xpose.msra.mxu0 0
    %486 = vmatprep.subr.bf16.mxu0 0
    %487 = vmatpush1.bf16.xpose.msra.mxu0 0
    %488 = vmatprep.subr.bf16.mxu0 0
    %489 = vmatpush1.bf16.xpose.msra.mxu0 0
    %490 = vmatprep.subr.bf16.mxu0 0
    %491 = vmatpush1.bf16.xpose.msra.mxu0 0
    %492 = vmatprep.subr.bf16.mxu0 0
    %493 = vmatpush1.bf16.xpose.msra.mxu0 0
    %494 = vmatprep.subr.bf16.mxu0 0
    %495 = vmatpush1.bf16.xpose.msra.mxu0 0
    %496 = vmatprep.subr.bf16.mxu0 0
    %497 = vmatpush1.bf16.xpose.msra.mxu0 0
    %498 = vmatprep.mubr.bf16.mxu0 0
    %499 = vmatmul.mubr.bf16.gmra.mrb[0].mxu0 %v461
    %v500 = vpop.f32.mrb[0].mxu0
    %v501 = vadd.f32 0.0, %v500
    %v502 = vpop.f32.mrb[0].mxu0
    %v503 = vpop.f32.mrb[0].mxu0
    %v504 = vpop.f32.mrb[0].mxu0
    %505 = vdwg.mxu0
    %v506 = vmul.f32 %v451, 0.35355338
    %v507 = vmul.f32 %v501, 0.35355338
    %v508 = vsel %vm185, %v506, -inf
    %509 = vmax.xlane.f32.xlu0 %v508
    %v510 = vpop.xlane.xlu0 %509
    %v511 = vsel %vm185, %v507, -inf
    %512 = vmax.xlane.f32.xlu0 %v511
    %v513 = vpop.xlane.xlu0 %512
    %v514 = vsub.f32 %v506, %v510
    %v515 = vsub.f32 %v507, %v513
    %v516 = vmul.f32 %v514, 1.442695
    %v517 = vpow.pop %v516
    %v518 = vmul.f32 %v515, 1.442695
    %v519 = vpow.pop %v518
    %v520 = vsel %vm185, %v517, 0.0
    %521 = vadd.xlane.f32.xlu0 %v520
    %v522 = vpop.xlane.xlu0 %521
    %v523 = vsel %vm185, %v519, 0.0
    %524 = vadd.xlane.f32.xlu0 %v523
    %v525 = vpop.xlane.xlu0 %524
    %v526 = vrcp.pop %v522
    %v527 = vrcp.pop %v525
    %v528 = vmul.f32 %v517, %v526
    %v529 = vmul.f32 %v519, %v527
    %v530 = vpack.c.bf16 %v528, %v528
    %v531 = vpack.c.bf16 %v529, %v529
    %532 = vrot.lane.b32.xlu0 %v180, 56
    %v533 = vpop.permute.xlu0 %532
    %v535 = vsel %vm185, %v530, 0
    %v538 = vsel %vm312, %v533, 0
    %540 = vmatprep.subr.bf16.mxu0 0
    %541 = vmatpush1.bf16.msra.mxu0 %v538
    %542 = vmatprep.subr.bf16.mxu0 0
    %543 = vmatpush1.bf16.msra.mxu0 0
    %544 = vmatprep.subr.bf16.mxu0 0
    %545 = vmatpush1.bf16.msra.mxu0 0
    %546 = vmatprep.subr.bf16.mxu0 0
    %547 = vmatpush1.bf16.msra.mxu0 0
    %548 = vmatprep.subr.bf16.mxu0 0
    %549 = vmatpush1.bf16.msra.mxu0 0
    %550 = vmatprep.subr.bf16.mxu0 0
    %551 = vmatpush1.bf16.msra.mxu0 0
    %552 = vmatprep.subr.bf16.mxu0 0
    %553 = vmatpush1.bf16.msra.mxu0 0
    %554 = vmatprep.subr.bf16.mxu0 0
    %555 = vmatpush1.bf16.msra.mxu0 0
    %556 = vmatprep.subr.bf16.mxu0 0
    %557 = vmatpush1.bf16.msra.mxu0 0
    %558 = vmatprep.subr.bf16.mxu0 0
    %559 = vmatpush1.bf16.msra.mxu0 0
    %560 = vmatprep.subr.bf16.mxu0 0
    %561 = vmatpush1.bf16.msra.mxu0 0
    %562 = vmatprep.subr.bf16.mxu0 0
    %563 = vmatpush1.bf16.msra.mxu0 0
    %564 = vmatprep.subr.bf16.mxu0 0
    %565 = vmatpush1.bf16.msra.mxu0 0
    %566 = vmatprep.subr.bf16.mxu0 0
    %567 = vmatpush1.bf16.msra.mxu0 0
    %568 = vmatprep.subr.bf16.mxu0 0
    %569 = vmatpush1.bf16.msra.mxu0 0
    %570 = vmatprep.subr.bf16.mxu0 0
    %571 = vmatpush1.bf16.msra.mxu0 0
    %572 = vmatprep.mubr.bf16.mxu0 0
    %573 = vmatmul.mubr.bf16.gmra.mrb[0].mxu0 %v535
    %v574 = vpop.f32.mrb[0].mxu0
    %v575 = vadd.f32 0.0, %v574
    %v576 = vpop.f32.mrb[0].mxu0
    %v577 = vpop.f32.mrb[0].mxu0
    %v578 = vpop.f32.mrb[0].mxu0
    %579 = vdwg.mxu0
    %580 = vrot.lane.b32.xlu0 %v181, 56
    %v581 = vpop.permute.xlu0 %580
    %v583 = vsel %vm185, %v531, 0
    %v586 = vsel %vm312, %v581, 0
    %588 = vmatprep.subr.bf16.mxu0 0
    %589 = vmatpush1.bf16.msra.mxu0 %v586
    %590 = vmatprep.subr.bf16.mxu0 0
    %591 = vmatpush1.bf16.msra.mxu0 0
    %592 = vmatprep.subr.bf16.mxu0 0
    %593 = vmatpush1.bf16.msra.mxu0 0
    %594 = vmatprep.subr.bf16.mxu0 0
    %595 = vmatpush1.bf16.msra.mxu0 0
    %596 = vmatprep.subr.bf16.mxu0 0
    %597 = vmatpush1.bf16.msra.mxu0 0
    %598 = vmatprep.subr.bf16.mxu0 0
    %599 = vmatpush1.bf16.msra.mxu0 0
    %600 = vmatprep.subr.bf16.mxu0 0
    %601 = vmatpush1.bf16.msra.mxu0 0
    %602 = vmatprep.subr.bf16.mxu0 0
    %603 = vmatpush1.bf16.msra.mxu0 0
    %604 = vmatprep.subr.bf16.mxu0 0
    %605 = vmatpush1.bf16.msra.mxu0 0
    %606 = vmatprep.subr.bf16.mxu0 0
    %607 = vmatpush1.bf16.msra.mxu0 0
    %608 = vmatprep.subr.bf16.mxu0 0
    %609 = vmatpush1.bf16.msra.mxu0 0
    %610 = vmatprep.subr.bf16.mxu0 0
    %611 = vmatpush1.bf16.msra.mxu0 0
    %612 = vmatprep.subr.bf16.mxu0 0
    %613 = vmatpush1.bf16.msra.mxu0 0
    %614 = vmatprep.subr.bf16.mxu0 0
    %615 = vmatpush1.bf16.msra.mxu0 0
    %616 = vmatprep.subr.bf16.mxu0 0
    %617 = vmatpush1.bf16.msra.mxu0 0
    %618 = vmatprep.subr.bf16.mxu0 0
    %619 = vmatpush1.bf16.msra.mxu0 0
    %620 = vmatprep.mubr.bf16.mxu0 0
    %621 = vmatmul.mubr.bf16.gmra.mrb[0].mxu0 %v583
    %v622 = vpop.f32.mrb[0].mxu0
    %v623 = vadd.f32 0.0, %v622
    %v624 = vpop.f32.mrb[0].mxu0
    %v625 = vpop.f32.mrb[0].mxu0
    %v626 = vpop.f32.mrb[0].mxu0
    %627 = vdwg.mxu0
    %v628 = vpack.c.bf16 %v623, %v575
    %v629 = vpack.c.bf16 %v118, %v118
    %v631 = vsel %vm185, %v628, 0
    %v634 = vsel %vm312, %v629, 0
    %636 = vmatprep.subr.bf16.mxu0 0
    %637 = vmatpush1.bf16.msra.mxu0 %v634
    %638 = vmatprep.subr.bf16.mxu0 0
    %639 = vmatpush1.bf16.msra.mxu0 0
    %640 = vmatprep.subr.bf16.mxu0 0
    %641 = vmatpush1.bf16.msra.mxu0 0
    %642 = vmatprep.subr.bf16.mxu0 0
    %643 = vmatpush1.bf16.msra.mxu0 0
    %644 = vmatprep.subr.bf16.mxu0 0
    %645 = vmatpush1.bf16.msra.mxu0 0
    %646 = vmatprep.subr.bf16.mxu0 0
    %647 = vmatpush1.bf16.msra.mxu0 0
    %648 = vmatprep.subr.bf16.mxu0 0
    %649 = vmatpush1.bf16.msra.mxu0 0
    %650 = vmatprep.subr.bf16.mxu0 0
    %651 = vmatpush1.bf16.msra.mxu0 0
    %652 = vmatprep.subr.bf16.mxu0 0
    %653 = vmatpush1.bf16.msra.mxu0 0
    %654 = vmatprep.subr.bf16.mxu0 0
    %655 = vmatpush1.bf16.msra.mxu0 0
    %656 = vmatprep.subr.bf16.mxu0 0
    %657 = vmatpush1.bf16.msra.mxu0 0
    %658 = vmatprep.subr.bf16.mxu0 0
    %659 = vmatpush1.bf16.msra.mxu0 0
    %660 = vmatprep.subr.bf16.mxu0 0
    %661 = vmatpush1.bf16.msra.mxu0 0
    %662 = vmatprep.subr.bf16.mxu0 0
    %663 = vmatpush1.bf16.msra.mxu0 0
    %664 = vmatprep.subr.bf16.mxu0 0
    %665 = vmatpush1.bf16.msra.mxu0 0
    %666 = vmatprep.subr.bf16.mxu0 0
    %667 = vmatpush1.bf16.msra.mxu0 0
    %668 = vmatprep.mubr.bf16.mxu0 0
    %669 = vmatmul.mubr.bf16.gmra.mrb[0].mxu0 %v631
    %v670 = vpop.f32.mrb[0].mxu0
    %v671 = vadd.f32 0.0, %v670
    %v672 = vpop.f32.mrb[0].mxu0
    %v673 = vpop.f32.mrb[0].mxu0
    %v674 = vadd.f32 0.0, %v673
    %v675 = vpop.f32.mrb[0].mxu0
    %676 = vdwg.mxu0
    %v678 = vsel %vm185, %v404, 0
    %v681 = vsel %vm312, %v405, 0
    %683 = vmatprep.subr.bf16.mxu0 0
    %684 = vmatpush1.bf16.msra.mxu0 %v681
    %685 = vmatprep.subr.bf16.mxu0 0
    %686 = vmatpush1.bf16.msra.mxu0 0
    %687 = vmatprep.subr.bf16.mxu0 0
    %688 = vmatpush1.bf16.msra.mxu0 0
    %689 = vmatprep.subr.bf16.mxu0 0
    %690 = vmatpush1.bf16.msra.mxu0 0
    %691 = vmatprep.subr.bf16.mxu0 0
    %692 = vmatpush1.bf16.msra.mxu0 0
    %693 = vmatprep.subr.bf16.mxu0 0
    %694 = vmatpush1.bf16.msra.mxu0 0
    %695 = vmatprep.subr.bf16.mxu0 0
    %696 = vmatpush1.bf16.msra.mxu0 0
    %697 = vmatprep.subr.bf16.mxu0 0
    %698 = vmatpush1.bf16.msra.mxu0 0
    %699 = vmatprep.subr.bf16.mxu0 0
    %700 = vmatpush1.bf16.msra.mxu0 0
    %701 = vmatprep.subr.bf16.mxu0 0
    %702 = vmatpush1.bf16.msra.mxu0 0
    %703 = vmatprep.subr.bf16.mxu0 0
    %704 = vmatpush1.bf16.msra.mxu0 0
    %705 = vmatprep.subr.bf16.mxu0 0
    %706 = vmatpush1.bf16.msra.mxu0 0
    %707 = vmatprep.subr.bf16.mxu0 0
    %708 = vmatpush1.bf16.msra.mxu0 0
    %709 = vmatprep.subr.bf16.mxu0 0
    %710 = vmatpush1.bf16.msra.mxu0 0
    %711 = vmatprep.subr.bf16.mxu0 0
    %712 = vmatpush1.bf16.msra.mxu0 0
    %713 = vmatprep.subr.bf16.mxu0 0
    %714 = vmatpush1.bf16.msra.mxu0 0
    %715 = vmatprep.mubr.bf16.mxu0 0
    %716 = vmatmul.mubr.bf16.gmra.mrb[0].mxu0 %v678
    %v717 = vpop.f32.mrb[0].mxu0
    %v718 = vadd.f32 %v671, %v717
    %v719 = vpop.f32.mrb[0].mxu0
    %v720 = vpop.f32.mrb[0].mxu0
    %v721 = vadd.f32 %v674, %v720
    %v722 = vpop.f32.mrb[0].mxu0
    %723 = vdwg.mxu0
    %724 = vrot.lane.b32.xlu0 %v180, 112
    %v725 = vpop.permute.xlu0 %724
    %726 = vrot.lane.b32.xlu0 %v180, 80
    %v727 = vpop.permute.xlu0 %726
    %v729 = vsel %vm185, %v725, 0
    %v732 = vsel %vm185, %v727, 0
    %734 = vmatprep.subr.bf16.mxu0 0
    %735 = vmatpush1.bf16.xpose.msra.mxu0 %v732
    %736 = vmatprep.subr.bf16.mxu0 0
    %737 = vmatpush1.bf16.xpose.msra.mxu0 0
    %738 = vmatprep.subr.bf16.mxu0 0
    %739 = vmatpush1.bf16.xpose.msra.mxu0 0
    %740 = vmatprep.subr.bf16.mxu0 0
    %741 = vmatpush1.bf16.xpose.msra.mxu0 0
    %742 = vmatprep.subr.bf16.mxu0 0
    %743 = vmatpush1.bf16.xpose.msra.mxu0 0
    %744 = vmatprep.subr.bf16.mxu0 0
    %745 = vmatpush1.bf16.xpose.msra.mxu0 0
    %746 = vmatprep.subr.bf16.mxu0 0
    %747 = vmatpush1.bf16.xpose.msra.mxu0 0
    %748 = vmatprep.subr.bf16.mxu0 0
    %749 = vmatpush1.bf16.xpose.msra.mxu0 0
    %750 = vmatprep.subr.bf16.mxu0 0
    %751 = vmatpush1.bf16.xpose.msra.mxu0 0
    %752 = vmatprep.subr.bf16.mxu0 0
    %753 = vmatpush1.bf16.xpose.msra.mxu0 0
    %754 = vmatprep.subr.bf16.mxu0 0
    %755 = vmatpush1.bf16.xpose.msra.mxu0 0
    %756 = vmatprep.subr.bf16.mxu0 0
    %757 = vmatpush1.bf16.xpose.msra.mxu0 0
    %758 = vmatprep.subr.bf16.mxu0 0
    %759 = vmatpush1.bf16.xpose.msra.mxu0 0
    %760 = vmatprep.subr.bf16.mxu0 0
    %761 = vmatpush1.bf16.xpose.msra.mxu0 0
    %762 = vmatprep.subr.bf16.mxu0 0
    %763 = vmatpush1.bf16.xpose.msra.mxu0 0
    %764 = vmatprep.subr.bf16.mxu0 0
    %765 = vmatpush1.bf16.xpose.msra.mxu0 0
    %766 = vmatprep.mubr.bf16.mxu0 0
    %767 = vmatmul.mubr.bf16.gmra.mrb[0].mxu0 %v729
    %v768 = vpop.f32.mrb[0].mxu0
    %v769 = vadd.f32 0.0, %v768
    %v770 = vpop.f32.mrb[0].mxu0
    %v771 = vpop.f32.mrb[0].mxu0
    %v772 = vpop.f32.mrb[0].mxu0
    %773 = vdwg.mxu0
    %774 = vrot.lane.b32.xlu0 %v181, 112
    %v775 = vpop.permute.xlu0 %774
    %776 = vrot.lane.b32.xlu0 %v181, 80
    %v777 = vpop.permute.xlu0 %776
    %v779 = vsel %vm185, %v775, 0
    %v782 = vsel %vm185, %v777, 0
    %784 = vmatprep.subr.bf16.mxu0 0
    %785 = vmatpush1.bf16.xpose.msra.mxu0 %v782
    %786 = vmatprep.subr.bf16.mxu0 0
    %787 = vmatpush1.bf16.xpose.msra.mxu0 0
    %788 = vmatprep.subr.bf16.mxu0 0
    %789 = vmatpush1.bf16.xpose.msra.mxu0 0
    %790 = vmatprep.subr.bf16.mxu0 0
    %791 = vmatpush1.bf16.xpose.msra.mxu0 0
    %792 = vmatprep.subr.bf16.mxu0 0
    %793 = vmatpush1.bf16.xpose.msra.mxu0 0
    %794 = vmatprep.subr.bf16.mxu0 0
    %795 = vmatpush1.bf16.xpose.msra.mxu0 0
    %796 = vmatprep.subr.bf16.mxu0 0
    %797 = vmatpush1.bf16.xpose.msra.mxu0 0
    %798 = vmatprep.subr.bf16.mxu0 0
    %799 = vmatpush1.bf16.xpose.msra.mxu0 0
    %800 = vmatprep.subr.bf16.mxu0 0
    %801 = vmatpush1.bf16.xpose.msra.mxu0 0
    %802 = vmatprep.subr.bf16.mxu0 0
    %803 = vmatpush1.bf16.xpose.msra.mxu0 0
    %804 = vmatprep.subr.bf16.mxu0 0
    %805 = vmatpush1.bf16.xpose.msra.mxu0 0
    %806 = vmatprep.subr.bf16.mxu0 0
    %807 = vmatpush1.bf16.xpose.msra.mxu0 0
    %808 = vmatprep.subr.bf16.mxu0 0
    %809 = vmatpush1.bf16.xpose.msra.mxu0 0
    %810 = vmatprep.subr.bf16.mxu0 0
    %811 = vmatpush1.bf16.xpose.msra.mxu0 0
    %812 = vmatprep.subr.bf16.mxu0 0
    %813 = vmatpush1.bf16.xpose.msra.mxu0 0
    %814 = vmatprep.subr.bf16.mxu0 0
    %815 = vmatpush1.bf16.xpose.msra.mxu0 0
    %816 = vmatprep.mubr.bf16.mxu0 0
    %817 = vmatmul.mubr.bf16.gmra.mrb[0].mxu0 %v779
    %v818 = vpop.f32.mrb[0].mxu0
    %v819 = vadd.f32 0.0, %v818
    %v820 = vpop.f32.mrb[0].mxu0
    %v821 = vpop.f32.mrb[0].mxu0
    %v822 = vpop.f32.mrb[0].mxu0
    %823 = vdwg.mxu0
    %v824 = vmul.f32 %v769, 0.35355338
    %v825 = vmul.f32 %v819, 0.35355338
    %v826 = vsel %vm185, %v824, -inf
    %827 = vmax.xlane.f32.xlu0 %v826
    %v828 = vpop.xlane.xlu0 %827
    %v829 = vsel %vm185, %v825, -inf
    %830 = vmax.xlane.f32.xlu0 %v829
    %v831 = vpop.xlane.xlu0 %830
    %v832 = vsub.f32 %v824, %v828
    %v833 = vsub.f32 %v825, %v831
    %v834 = vmul.f32 %v832, 1.442695
    %v835 = vpow.pop %v834
    %v836 = vmul.f32 %v833, 1.442695
    %v837 = vpow.pop %v836
    %v838 = vsel %vm185, %v835, 0.0
    %839 = vadd.xlane.f32.xlu0 %v838
    %v840 = vpop.xlane.xlu0 %839
    %v841 = vsel %vm185, %v837, 0.0
    %842 = vadd.xlane.f32.xlu0 %v841
    %v843 = vpop.xlane.xlu0 %842
    %v844 = vrcp.pop %v840
    %v845 = vrcp.pop %v843
    %v846 = vmul.f32 %v835, %v844
    %v847 = vmul.f32 %v837, %v845
    %v848 = vpack.c.bf16 %v846, %v846
    %v849 = vpack.c.bf16 %v847, %v847
    %850 = vrot.lane.b32.xlu0 %v180, 48
    %v851 = vpop.permute.xlu0 %850
    %v853 = vsel %vm185, %v848, 0
    %v856 = vsel %vm312, %v851, 0
    %858 = vmatprep.subr.bf16.mxu0 0
    %859 = vmatpush1.bf16.msra.mxu0 %v856
    %860 = vmatprep.subr.bf16.mxu0 0
    %861 = vmatpush1.bf16.msra.mxu0 0
    %862 = vmatprep.subr.bf16.mxu0 0
    %863 = vmatpush1.bf16.msra.mxu0 0
    %864 = vmatprep.subr.bf16.mxu0 0
    %865 = vmatpush1.bf16.msra.mxu0 0
    %866 = vmatprep.subr.bf16.mxu0 0
    %867 = vmatpush1.bf16.msra.mxu0 0
    %868 = vmatprep.subr.bf16.mxu0 0
    %869 = vmatpush1.bf16.msra.mxu0 0
    %870 = vmatprep.subr.bf16.mxu0 0
    %871 = vmatpush1.bf16.msra.mxu0 0
    %872 = vmatprep.subr.bf16.mxu0 0
    %873 = vmatpush1.bf16.msra.mxu0 0
    %874 = vmatprep.subr.bf16.mxu0 0
    %875 = vmatpush1.bf16.msra.mxu0 0
    %876 = vmatprep.subr.bf16.mxu0 0
    %877 = vmatpush1.bf16.msra.mxu0 0
    %878 = vmatprep.subr.bf16.mxu0 0
    %879 = vmatpush1.bf16.msra.mxu0 0
    %880 = vmatprep.subr.bf16.mxu0 0
    %881 = vmatpush1.bf16.msra.mxu0 0
    %882 = vmatprep.subr.bf16.mxu0 0
    %883 = vmatpush1.bf16.msra.mxu0 0
    %884 = vmatprep.subr.bf16.mxu0 0
    %885 = vmatpush1.bf16.msra.mxu0 0
    %886 = vmatprep.subr.bf16.mxu0 0
    %887 = vmatpush1.bf16.msra.mxu0 0
    %888 = vmatprep.subr.bf16.mxu0 0
    %889 = vmatpush1.bf16.msra.mxu0 0
    %890 = vmatprep.mubr.bf16.mxu0 0
    %891 = vmatmul.mubr.bf16.gmra.mrb[0].mxu0 %v853
    %v892 = vpop.f32.mrb[0].mxu0
    %v893 = vadd.f32 0.0, %v892
    %v894 = vpop.f32.mrb[0].mxu0
    %v895 = vpop.f32.mrb[0].mxu0
    %v896 = vpop.f32.mrb[0].mxu0
    %897 = vdwg.mxu0
    %898 = vrot.lane.b32.xlu0 %v181, 48
    %v899 = vpop.permute.xlu0 %898
    %v901 = vsel %vm185, %v849, 0
    %v904 = vsel %vm312, %v899, 0
    %906 = vmatprep.subr.bf16.mxu0 0
    %907 = vmatpush1.bf16.msra.mxu0 %v904
    %908 = vmatprep.subr.bf16.mxu0 0
    %909 = vmatpush1.bf16.msra.mxu0 0
    %910 = vmatprep.subr.bf16.mxu0 0
    %911 = vmatpush1.bf16.msra.mxu0 0
    %912 = vmatprep.subr.bf16.mxu0 0
    %913 = vmatpush1.bf16.msra.mxu0 0
    %914 = vmatprep.subr.bf16.mxu0 0
    %915 = vmatpush1.bf16.msra.mxu0 0
    %916 = vmatprep.subr.bf16.mxu0 0
    %917 = vmatpush1.bf16.msra.mxu0 0
    %918 = vmatprep.subr.bf16.mxu0 0
    %919 = vmatpush1.bf16.msra.mxu0 0
    %920 = vmatprep.subr.bf16.mxu0 0
    %921 = vmatpush1.bf16.msra.mxu0 0
    %922 = vmatprep.subr.bf16.mxu0 0
    %923 = vmatpush1.bf16.msra.mxu0 0
    %924 = vmatprep.subr.bf16.mxu0 0
    %925 = vmatpush1.bf16.msra.mxu0 0
    %926 = vmatprep.subr.bf16.mxu0 0
    %927 = vmatpush1.bf16.msra.mxu0 0
    %928 = vmatprep.subr.bf16.mxu0 0
    %929 = vmatpush1.bf16.msra.mxu0 0
    %930 = vmatprep.subr.bf16.mxu0 0
    %931 = vmatpush1.bf16.msra.mxu0 0
    %932 = vmatprep.subr.bf16.mxu0 0
    %933 = vmatpush1.bf16.msra.mxu0 0
    %934 = vmatprep.subr.bf16.mxu0 0
    %935 = vmatpush1.bf16.msra.mxu0 0
    %936 = vmatprep.subr.bf16.mxu0 0
    %937 = vmatpush1.bf16.msra.mxu0 0
    %938 = vmatprep.mubr.bf16.mxu0 0
    %939 = vmatmul.mubr.bf16.gmra.mrb[0].mxu0 %v901
    %v940 = vpop.f32.mrb[0].mxu0
    %v941 = vadd.f32 0.0, %v940
    %v942 = vpop.f32.mrb[0].mxu0
    %v943 = vpop.f32.mrb[0].mxu0
    %v944 = vpop.f32.mrb[0].mxu0
    %945 = vdwg.mxu0
    %v946 = vpack.c.bf16 %v941, %v893
    %v947 = vpack.c.bf16 %v119, %v119
    %v949 = vsel %vm185, %v946, 0
    %v952 = vsel %vm312, %v947, 0
    %954 = vmatprep.subr.bf16.mxu0 0
    %955 = vmatpush1.bf16.msra.mxu0 %v952
    %956 = vmatprep.subr.bf16.mxu0 0
    %957 = vmatpush1.bf16.msra.mxu0 0
    %958 = vmatprep.subr.bf16.mxu0 0
    %959 = vmatpush1.bf16.msra.mxu0 0
    %960 = vmatprep.subr.bf16.mxu0 0
    %961 = vmatpush1.bf16.msra.mxu0 0
    %962 = vmatprep.subr.bf16.mxu0 0
    %963 = vmatpush1.bf16.msra.mxu0 0
    %964 = vmatprep.subr.bf16.mxu0 0
    %965 = vmatpush1.bf16.msra.mxu0 0
    %966 = vmatprep.subr.bf16.mxu0 0
    %967 = vmatpush1.bf16.msra.mxu0 0
    %968 = vmatprep.subr.bf16.mxu0 0
    %969 = vmatpush1.bf16.msra.mxu0 0
    %970 = vmatprep.subr.bf16.mxu0 0
    %971 = vmatpush1.bf16.msra.mxu0 0
    %972 = vmatprep.subr.bf16.mxu0 0
    %973 = vmatpush1.bf16.msra.mxu0 0
    %974 = vmatprep.subr.bf16.mxu0 0
    %975 = vmatpush1.bf16.msra.mxu0 0
    %976 = vmatprep.subr.bf16.mxu0 0
    %977 = vmatpush1.bf16.msra.mxu0 0
    %978 = vmatprep.subr.bf16.mxu0 0
    %979 = vmatpush1.bf16.msra.mxu0 0
    %980 = vmatprep.subr.bf16.mxu0 0
    %981 = vmatpush1.bf16.msra.mxu0 0
    %982 = vmatprep.subr.bf16.mxu0 0
    %983 = vmatpush1.bf16.msra.mxu0 0
    %984 = vmatprep.subr.bf16.mxu0 0
    %985 = vmatpush1.bf16.msra.mxu0 0
    %986 = vmatprep.mubr.bf16.mxu0 0
    %987 = vmatmul.mubr.bf16.gmra.mrb[0].mxu0 %v949
    %v988 = vpop.f32.mrb[0].mxu0
    %v989 = vadd.f32 0.0, %v988
    %v990 = vpop.f32.mrb[0].mxu0
    %v991 = vpop.f32.mrb[0].mxu0
    %v992 = vadd.f32 0.0, %v991
    %v993 = vpop.f32.mrb[0].mxu0
    %994 = vdwg.mxu0
    %v995 = vadd.f32 %v718, %v989
    %v996 = vadd.f32 %v721, %v992
    %997 = vrot.lane.b32.xlu0 %v180, 104
    %v998 = vpop.permute.xlu0 %997
    %999 = vrot.lane.b32.xlu0 %v180, 72
    %v1000 = vpop.permute.xlu0 %999
    %v1002 = vsel %vm185, %v998, 0
    %v1005 = vsel %vm185, %v1000, 0
    %1007 = vmatprep.subr.bf16.mxu0 0
    %1008 = vmatpush1.bf16.xpose.msra.mxu0 %v1005
    %1009 = vmatprep.subr.bf16.mxu0 0
    %1010 = vmatpush1.bf16.xpose.msra.mxu0 0
    %1011 = vmatprep.subr.bf16.mxu0 0
    %1012 = vmatpush1.bf16.xpose.msra.mxu0 0
    %1013 = vmatprep.subr.bf16.mxu0 0
    %1014 = vmatpush1.bf16.xpose.msra.mxu0 0
    %1015 = vmatprep.subr.bf16.mxu0 0
    %1016 = vmatpush1.bf16.xpose.msra.mxu0 0
    %1017 = vmatprep.subr.bf16.mxu0 0
    %1018 = vmatpush1.bf16.xpose.msra.mxu0 0
    %1019 = vmatprep.subr.bf16.mxu0 0
    %1020 = vmatpush1.bf16.xpose.msra.mxu0 0
    %1021 = vmatprep.subr.bf16.mxu0 0
    %1022 = vmatpush1.bf16.xpose.msra.mxu0 0
    %1023 = vmatprep.subr.bf16.mxu0 0
    %1024 = vmatpush1.bf16.xpose.msra.mxu0 0
    %1025 = vmatprep.subr.bf16.mxu0 0
    %1026 = vmatpush1.bf16.xpose.msra.mxu0 0
    %1027 = vmatprep.subr.bf16.mxu0 0
    %1028 = vmatpush1.bf16.xpose.msra.mxu0 0
    %1029 = vmatprep.subr.bf16.mxu0 0
    %1030 = vmatpush1.bf16.xpose.msra.mxu0 0
    %1031 = vmatprep.subr.bf16.mxu0 0
    %1032 = vmatpush1.bf16.xpose.msra.mxu0 0
    %1033 = vmatprep.subr.bf16.mxu0 0
    %1034 = vmatpush1.bf16.xpose.msra.mxu0 0
    %1035 = vmatprep.subr.bf16.mxu0 0
    %1036 = vmatpush1.bf16.xpose.msra.mxu0 0
    %1037 = vmatprep.subr.bf16.mxu0 0
    %1038 = vmatpush1.bf16.xpose.msra.mxu0 0
    %1039 = vmatprep.mubr.bf16.mxu0 0
    %1040 = vmatmul.mubr.bf16.gmra.mrb[0].mxu0 %v1002
    %v1041 = vpop.f32.mrb[0].mxu0
    %v1042 = vadd.f32 0.0, %v1041
    %v1043 = vpop.f32.mrb[0].mxu0
    %v1044 = vpop.f32.mrb[0].mxu0
    %v1045 = vpop.f32.mrb[0].mxu0
    %1046 = vdwg.mxu0
    %1047 = vrot.lane.b32.xlu0 %v181, 104
    %v1048 = vpop.permute.xlu0 %1047
    %1049 = vrot.lane.b32.xlu0 %v181, 72
    %v1050 = vpop.permute.xlu0 %1049
    %v1052 = vsel %vm185, %v1048, 0
    %v1055 = vsel %vm185, %v1050, 0
    %1057 = vmatprep.subr.bf16.mxu0 0
    %1058 = vmatpush1.bf16.xpose.msra.mxu0 %v1055
    %1059 = vmatprep.subr.bf16.mxu0 0
    %1060 = vmatpush1.bf16.xpose.msra.mxu0 0
    %1061 = vmatprep.subr.bf16.mxu0 0
    %1062 = vmatpush1.bf16.xpose.msra.mxu0 0
    %1063 = vmatprep.subr.bf16.mxu0 0
    %1064 = vmatpush1.bf16.xpose.msra.mxu0 0
    %1065 = vmatprep.subr.bf16.mxu0 0
    %1066 = vmatpush1.bf16.xpose.msra.mxu0 0
    %1067 = vmatprep.subr.bf16.mxu0 0
    %1068 = vmatpush1.bf16.xpose.msra.mxu0 0
    %1069 = vmatprep.subr.bf16.mxu0 0
    %1070 = vmatpush1.bf16.xpose.msra.mxu0 0
    %1071 = vmatprep.subr.bf16.mxu0 0
    %1072 = vmatpush1.bf16.xpose.msra.mxu0 0
    %1073 = vmatprep.subr.bf16.mxu0 0
    %1074 = vmatpush1.bf16.xpose.msra.mxu0 0
    %1075 = vmatprep.subr.bf16.mxu0 0
    %1076 = vmatpush1.bf16.xpose.msra.mxu0 0
    %1077 = vmatprep.subr.bf16.mxu0 0
    %1078 = vmatpush1.bf16.xpose.msra.mxu0 0
    %1079 = vmatprep.subr.bf16.mxu0 0
    %1080 = vmatpush1.bf16.xpose.msra.mxu0 0
    %1081 = vmatprep.subr.bf16.mxu0 0
    %1082 = vmatpush1.bf16.xpose.msra.mxu0 0
    %1083 = vmatprep.subr.bf16.mxu0 0
    %1084 = vmatpush1.bf16.xpose.msra.mxu0 0
    %1085 = vmatprep.subr.bf16.mxu0 0
    %1086 = vmatpush1.bf16.xpose.msra.mxu0 0
    %1087 = vmatprep.subr.bf16.mxu0 0
    %1088 = vmatpush1.bf16.xpose.msra.mxu0 0
    %1089 = vmatprep.mubr.bf16.mxu0 0
    %1090 = vmatmul.mubr.bf16.gmra.mrb[0].mxu0 %v1052
    %v1091 = vpop.f32.mrb[0].mxu0
    %v1092 = vadd.f32 0.0, %v1091
    %v1093 = vpop.f32.mrb[0].mxu0
    %v1094 = vpop.f32.mrb[0].mxu0
    %v1095 = vpop.f32.mrb[0].mxu0
    %1096 = vdwg.mxu0
    %v1097 = vmul.f32 %v1042, 0.35355338
    %v1098 = vmul.f32 %v1092, 0.35355338
    %v1099 = vsel %vm185, %v1097, -inf
    %1100 = vmax.xlane.f32.xlu0 %v1099
    %v1101 = vpop.xlane.xlu0 %1100
    %v1102 = vsel %vm185, %v1098, -inf
    %1103 = vmax.xlane.f32.xlu0 %v1102
    %v1104 = vpop.xlane.xlu0 %1103
    %v1105 = vsub.f32 %v1097, %v1101
    %v1106 = vsub.f32 %v1098, %v1104
    %v1107 = vmul.f32 %v1105, 1.442695
    %v1108 = vpow.pop %v1107
    %v1109 = vmul.f32 %v1106, 1.442695
    %v1110 = vpow.pop %v1109
    %v1111 = vsel %vm185, %v1108, 0.0
    %1112 = vadd.xlane.f32.xlu0 %v1111
    %v1113 = vpop.xlane.xlu0 %1112
    %v1114 = vsel %vm185, %v1110, 0.0
    %1115 = vadd.xlane.f32.xlu0 %v1114
    %v1116 = vpop.xlane.xlu0 %1115
    %v1117 = vrcp.pop %v1113
    %v1118 = vrcp.pop %v1116
    %v1119 = vmul.f32 %v1108, %v1117
    %v1120 = vmul.f32 %v1110, %v1118
    %v1121 = vpack.c.bf16 %v1119, %v1119
    %v1122 = vpack.c.bf16 %v1120, %v1120
    %1123 = vrot.lane.b32.xlu0 %v180, 40
    %v1124 = vpop.permute.xlu0 %1123
    %v1126 = vsel %vm185, %v1121, 0
    %v1129 = vsel %vm312, %v1124, 0
    %1131 = vmatprep.subr.bf16.mxu0 0
    %1132 = vmatpush1.bf16.msra.mxu0 %v1129
    %1133 = vmatprep.subr.bf16.mxu0 0
    %1134 = vmatpush1.bf16.msra.mxu0 0
    %1135 = vmatprep.subr.bf16.mxu0 0
    %1136 = vmatpush1.bf16.msra.mxu0 0
    %1137 = vmatprep.subr.bf16.mxu0 0
    %1138 = vmatpush1.bf16.msra.mxu0 0
    %1139 = vmatprep.subr.bf16.mxu0 0
    %1140 = vmatpush1.bf16.msra.mxu0 0
    %1141 = vmatprep.subr.bf16.mxu0 0
    %1142 = vmatpush1.bf16.msra.mxu0 0
    %1143 = vmatprep.subr.bf16.mxu0 0
    %1144 = vmatpush1.bf16.msra.mxu0 0
    %1145 = vmatprep.subr.bf16.mxu0 0
    %1146 = vmatpush1.bf16.msra.mxu0 0
    %1147 = vmatprep.subr.bf16.mxu0 0
    %1148 = vmatpush1.bf16.msra.mxu0 0
    %1149 = vmatprep.subr.bf16.mxu0 0
    %1150 = vmatpush1.bf16.msra.mxu0 0
    %1151 = vmatprep.subr.bf16.mxu0 0
    %1152 = vmatpush1.bf16.msra.mxu0 0
    %1153 = vmatprep.subr.bf16.mxu0 0
    %1154 = vmatpush1.bf16.msra.mxu0 0
    %1155 = vmatprep.subr.bf16.mxu0 0
    %1156 = vmatpush1.bf16.msra.mxu0 0
    %1157 = vmatprep.subr.bf16.mxu0 0
    %1158 = vmatpush1.bf16.msra.mxu0 0
    %1159 = vmatprep.subr.bf16.mxu0 0
    %1160 = vmatpush1.bf16.msra.mxu0 0
    %1161 = vmatprep.subr.bf16.mxu0 0
    %1162 = vmatpush1.bf16.msra.mxu0 0
    %1163 = vmatprep.mubr.bf16.mxu0 0
    %1164 = vmatmul.mubr.bf16.gmra.mrb[0].mxu0 %v1126
    %v1165 = vpop.f32.mrb[0].mxu0
    %v1166 = vadd.f32 0.0, %v1165
    %v1167 = vpop.f32.mrb[0].mxu0
    %v1168 = vpop.f32.mrb[0].mxu0
    %v1169 = vpop.f32.mrb[0].mxu0
    %1170 = vdwg.mxu0
    %1171 = vrot.lane.b32.xlu0 %v181, 40
    %v1172 = vpop.permute.xlu0 %1171
    %v1174 = vsel %vm185, %v1122, 0
    %v1177 = vsel %vm312, %v1172, 0
    %1179 = vmatprep.subr.bf16.mxu0 0
    %1180 = vmatpush1.bf16.msra.mxu0 %v1177
    %1181 = vmatprep.subr.bf16.mxu0 0
    %1182 = vmatpush1.bf16.msra.mxu0 0
    %1183 = vmatprep.subr.bf16.mxu0 0
    %1184 = vmatpush1.bf16.msra.mxu0 0
    %1185 = vmatprep.subr.bf16.mxu0 0
    %1186 = vmatpush1.bf16.msra.mxu0 0
    %1187 = vmatprep.subr.bf16.mxu0 0
    %1188 = vmatpush1.bf16.msra.mxu0 0
    %1189 = vmatprep.subr.bf16.mxu0 0
    %1190 = vmatpush1.bf16.msra.mxu0 0
    %1191 = vmatprep.subr.bf16.mxu0 0
    %1192 = vmatpush1.bf16.msra.mxu0 0
    %1193 = vmatprep.subr.bf16.mxu0 0
    %1194 = vmatpush1.bf16.msra.mxu0 0
    %1195 = vmatprep.subr.bf16.mxu0 0
    %1196 = vmatpush1.bf16.msra.mxu0 0
    %1197 = vmatprep.subr.bf16.mxu0 0
    %1198 = vmatpush1.bf16.msra.mxu0 0
    %1199 = vmatprep.subr.bf16.mxu0 0
    %1200 = vmatpush1.bf16.msra.mxu0 0
    %1201 = vmatprep.subr.bf16.mxu0 0
    %1202 = vmatpush1.bf16.msra.mxu0 0
    %1203 = vmatprep.subr.bf16.mxu0 0
    %1204 = vmatpush1.bf16.msra.mxu0 0
    %1205 = vmatprep.subr.bf16.mxu0 0
    %1206 = vmatpush1.bf16.msra.mxu0 0
    %1207 = vmatprep.subr.bf16.mxu0 0
    %1208 = vmatpush1.bf16.msra.mxu0 0
    %1209 = vmatprep.subr.bf16.mxu0 0
    %1210 = vmatpush1.bf16.msra.mxu0 0
    %1211 = vmatprep.mubr.bf16.mxu0 0
    %1212 = vmatmul.mubr.bf16.gmra.mrb[0].mxu0 %v1174
    %v1213 = vpop.f32.mrb[0].mxu0
    %v1214 = vadd.f32 0.0, %v1213
    %v1215 = vpop.f32.mrb[0].mxu0
    %v1216 = vpop.f32.mrb[0].mxu0
    %v1217 = vpop.f32.mrb[0].mxu0
    %1218 = vdwg.mxu0
    %v1219 = vpack.c.bf16 %v1214, %v1166
    %v1220 = vpack.c.bf16 %v120, %v120
    %v1222 = vsel %vm185, %v1219, 0
    %v1225 = vsel %vm312, %v1220, 0
    %1227 = vmatprep.subr.bf16.mxu0 0
    %1228 = vmatpush1.bf16.msra.mxu0 %v1225
    %1229 = vmatprep.subr.bf16.mxu0 0
    %1230 = vmatpush1.bf16.msra.mxu0 0
    %1231 = vmatprep.subr.bf16.mxu0 0
    %1232 = vmatpush1.bf16.msra.mxu0 0
    %1233 = vmatprep.subr.bf16.mxu0 0
    %1234 = vmatpush1.bf16.msra.mxu0 0
    %1235 = vmatprep.subr.bf16.mxu0 0
    %1236 = vmatpush1.bf16.msra.mxu0 0
    %1237 = vmatprep.subr.bf16.mxu0 0
    %1238 = vmatpush1.bf16.msra.mxu0 0
    %1239 = vmatprep.subr.bf16.mxu0 0
    %1240 = vmatpush1.bf16.msra.mxu0 0
    %1241 = vmatprep.subr.bf16.mxu0 0
    %1242 = vmatpush1.bf16.msra.mxu0 0
    %1243 = vmatprep.subr.bf16.mxu0 0
    %1244 = vmatpush1.bf16.msra.mxu0 0
    %1245 = vmatprep.subr.bf16.mxu0 0
    %1246 = vmatpush1.bf16.msra.mxu0 0
    %1247 = vmatprep.subr.bf16.mxu0 0
    %1248 = vmatpush1.bf16.msra.mxu0 0
    %1249 = vmatprep.subr.bf16.mxu0 0
    %1250 = vmatpush1.bf16.msra.mxu0 0
    %1251 = vmatprep.subr.bf16.mxu0 0
    %1252 = vmatpush1.bf16.msra.mxu0 0
    %1253 = vmatprep.subr.bf16.mxu0 0
    %1254 = vmatpush1.bf16.msra.mxu0 0
    %1255 = vmatprep.subr.bf16.mxu0 0
    %1256 = vmatpush1.bf16.msra.mxu0 0
    %1257 = vmatprep.subr.bf16.mxu0 0
    %1258 = vmatpush1.bf16.msra.mxu0 0
    %1259 = vmatprep.mubr.bf16.mxu0 0
    %1260 = vmatmul.mubr.bf16.gmra.mrb[0].mxu0 %v1222
    %v1261 = vpop.f32.mrb[0].mxu0
    %v1262 = vadd.f32 0.0, %v1261
    %v1263 = vpop.f32.mrb[0].mxu0
    %v1264 = vpop.f32.mrb[0].mxu0
    %v1265 = vadd.f32 0.0, %v1264
    %v1266 = vpop.f32.mrb[0].mxu0
    %1267 = vdwg.mxu0
    %v1268 = vadd.f32 %v995, %v1262
    %v1269 = vadd.f32 %v996, %v1265
    %v1270 = vld [vmem:[%s5] sm:$0x1]
    %v1272 = vlaneseq
    %v1273 = vshrl.u32 %v1272, 7
    %v1274 = vsub.s32 0, %v1273
    %v1275 = vrot.slane %v1270, %v1274
    %v1277 = vadd.f32 %v1268, %v1275
    %v1278 = vadd.f32 %v1269, %v1275
    %v1279 = vadd.f32 %v115, %v1277
    %v1280 = vadd.f32 %v116, %v1278
    %v1281 = vld [vmem:[%s6] sm:$0x1]
    %v1282 = vld [vmem:[%s7] sm:$0x1]
    %v1283 = vsel %vm135, %v1279, 0.0
    %1284 = vadd.xlane.f32.xlu0 %v1283
    %v1285 = vpop.xlane.xlu0 %1284
    %v1286 = vsel %vm135, %v1280, 0.0
    %1287 = vadd.xlane.f32.xlu0 %v1286
    %v1288 = vpop.xlane.xlu0 %1287
    %v1289 = vrcp.pop 32.0
    %v1290 = vmul.f32 %v1285, %v1289
    %v1291 = vmul.f32 %v1288, %v1289
    %v1292 = vsub.f32 %v1279, %v1290
    %v1293 = vsub.f32 %v1280, %v1291
    %v1294 = vmul.f32 %v1292, %v1292
    %v1295 = vmul.f32 %v1293, %v1293
    %v1296 = vsel %vm135, %v1294, 0.0
    %1297 = vadd.xlane.f32.xlu0 %v1296
    %v1298 = vpop.xlane.xlu0 %1297
    %v1299 = vsel %vm135, %v1295, 0.0
    %1300 = vadd.xlane.f32.xlu0 %v1299
    %v1301 = vpop.xlane.xlu0 %1300
    %v1302 = vmul.f32 %v1298, %v1289
    %v1303 = vmul.f32 %v1301, %v1289
    %v1304 = vadd.f32 %v1302, 1e-05
    %v1305 = vadd.f32 %v1303, 1e-05
    %v1306 = vrsqrt.pop %v1304
    %v1307 = vrsqrt.pop %v1305
    %v1308 = vmul.f32 %v1292, %v1306
    %v1309 = vmul.f32 %v1293, %v1307
    %v1311 = vlaneseq
    %v1312 = vshrl.u32 %v1311, 7
    %v1313 = vsub.s32 0, %v1312
    %v1314 = vrot.slane %v1281, %v1313
    %v1316 = vmul.f32 %v1308, %v1314
    %v1317 = vmul.f32 %v1309, %v1314
    %v1319 = vlaneseq
    %v1320 = vshrl.u32 %v1319, 7
    %v1321 = vsub.s32 0, %v1320
    %v1322 = vrot.slane %v1282, %v1321
    %v1324 = vadd.f32 %v1316, %v1322
    %v1325 = vadd.f32 %v1317, %v1322
    %v1326 = vld [vmem:[%s8] sm:$0xff]
    %v1327 = vld [vmem:[%s8 + $0x8] sm:$0xff]
    %v1328 = vld [vmem:[%s8 + $0x10] sm:$0xff]
    %v1329 = vld [vmem:[%s8 + $0x18] sm:$0xff]
    %v1330 = vpack.c.bf16 %v1325, %v1324
    %v1331 = vpack.c.bf16 %v1327, %v1326
    %v1332 = vpack.c.bf16 %v1329, %v1328
    %v1333 = vld [vmem:[#allocation2] sm:$0x1]
    %v1335 = vlaneseq
    %v1336 = vshrl.u32 %v1335, 7
    %v1337 = vsub.s32 0, %v1336
    %v1338 = vrot.slane %v1333, %v1337
    %v1341 = vsel %vm135, %v1330, 0
    %1343 = vmatprep.subr.bf16.mxu0 0
    %1344 = vmatpush1.bf16.msra.mxu0 %v1331
    %1345 = vmatprep.subr.bf16.mxu0 0
    %1346 = vmatpush1.bf16.msra.mxu0 %v1332
    %1347 = vmatprep.subr.bf16.mxu0 0
    %1348 = vmatpush1.bf16.msra.mxu0 0
    %1349 = vmatprep.subr.bf16.mxu0 0
    %1350 = vmatpush1.bf16.msra.mxu0 0
    %1351 = vmatprep.subr.bf16.mxu0 0
    %1352 = vmatpush1.bf16.msra.mxu0 0
    %1353 = vmatprep.subr.bf16.mxu0 0
    %1354 = vmatpush1.bf16.msra.mxu0 0
    %1355 = vmatprep.subr.bf16.mxu0 0
    %1356 = vmatpush1.bf16.msra.mxu0 0
    %1357 = vmatprep.subr.bf16.mxu0 0
    %1358 = vmatpush1.bf16.msra.mxu0 0
    %1359 = vmatprep.subr.bf16.mxu0 0
    %1360 = vmatpush1.bf16.msra.mxu0 0
    %1361 = vmatprep.subr.bf16.mxu0 0
    %1362 = vmatpush1.bf16.msra.mxu0 0
    %1363 = vmatprep.subr.bf16.mxu0 0
    %1364 = vmatpush1.bf16.msra.mxu0 0
    %1365 = vmatprep.subr.bf16.mxu0 0
    %1366 = vmatpush1.bf16.msra.mxu0 0
    %1367 = vmatprep.subr.bf16.mxu0 0
    %1368 = vmatpush1.bf16.msra.mxu0 0
    %1369 = vmatprep.subr.bf16.mxu0 0
    %1370 = vmatpush1.bf16.msra.mxu0 0
    %1371 = vmatprep.subr.bf16.mxu0 0
    %1372 = vmatpush1.bf16.msra.mxu0 0
    %1373 = vmatprep.subr.bf16.mxu0 0
    %1374 = vmatpush1.bf16.msra.mxu0 0
    %1375 = vmatprep.mubr.bf16.mxu0 0
    %1376 = vmatmul.mubr.bf16.gmra.mrb[0].mxu0 %v1341
    %v1377 = vpop.f32.mrb[0].mxu0
    %v1378 = vadd.f32 %v1338, %v1377
    %v1379 = vpop.f32.mrb[0].mxu0
    %v1380 = vpop.f32.mrb[0].mxu0
    %v1381 = vadd.f32 %v1338, %v1380
    %v1382 = vpop.f32.mrb[0].mxu0
    %1383 = vdwg.mxu0
    %v1384 = vmax.f32 %v1378, 0.0
    %v1385 = vmax.f32 %v1381, 0.0
    %v1386 = vld [vmem:[%s10] sm:$0xff]
    %v1387 = vld [vmem:[%s10 + $0x8] sm:$0xff]
    %v1388 = vld [vmem:[%s10 + $0x10] sm:$0xff]
    %v1389 = vld [vmem:[%s10 + $0x18] sm:$0xff]
    %v1390 = vld [vmem:[%s10 + $0x20] sm:$0xff]
    %v1391 = vld [vmem:[%s10 + $0x28] sm:$0xff]
    %v1392 = vld [vmem:[%s10 + $0x30] sm:$0xff]
    %v1393 = vld [vmem:[%s10 + $0x38] sm:$0xff]
    %v1394 = vpack.c.bf16 %v1385, %v1384
    %v1395 = vpack.c.bf16 %v1387, %v1386
    %v1396 = vpack.c.bf16 %v1389, %v1388
    %v1397 = vpack.c.bf16 %v1391, %v1390
    %v1398 = vpack.c.bf16 %v1393, %v1392
    %v1399 = vld [vmem:[#allocation5] sm:$0x1]
    %v1401 = vlaneseq
    %v1402 = vshrl.u32 %v1401, 7
    %v1403 = vsub.s32 0, %v1402
    %v1404 = vrot.slane %v1399, %v1403
    %vm1406 = vcmask 523264
    %v1408 = vsel %vm1406, %v1394, 0
    %1410 = vmatprep.subr.bf16.mxu0 0
    %1411 = vmatpush1.bf16.msra.mxu0 %v1395
    %1412 = vmatprep.subr.bf16.mxu0 0
    %1413 = vmatpush1.bf16.msra.mxu0 %v1396
    %1414 = vmatprep.subr.bf16.mxu0 0
    %1415 = vmatpush1.bf16.msra.mxu0 %v1397
    %1416 = vmatprep.subr.bf16.mxu0 0
    %1417 = vmatpush1.bf16.msra.mxu0 %v1398
    %1418 = vmatprep.subr.bf16.mxu0 0
    %1419 = vmatpush1.bf16.msra.mxu0 0
    %1420 = vmatprep.subr.bf16.mxu0 0
    %1421 = vmatpush1.bf16.msra.mxu0 0
    %1422 = vmatprep.subr.bf16.mxu0 0
    %1423 = vmatpush1.bf16.msra.mxu0 0
    %1424 = vmatprep.subr.bf16.mxu0 0
    %1425 = vmatpush1.bf16.msra.mxu0 0
    %1426 = vmatprep.subr.bf16.mxu0 0
    %1427 = vmatpush1.bf16.msra.mxu0 0
    %1428 = vmatprep.subr.bf16.mxu0 0
    %1429 = vmatpush1.bf16.msra.mxu0 0
    %1430 = vmatprep.subr.bf16.mxu0 0
    %1431 = vmatpush1.bf16.msra.mxu0 0
    %1432 = vmatprep.subr.bf16.mxu0 0
    %1433 = vmatpush1.bf16.msra.mxu0 0
    %1434 = vmatprep.subr.bf16.mxu0 0
    %1435 = vmatpush1.bf16.msra.mxu0 0
    %1436 = vmatprep.subr.bf16.mxu0 0
    %1437 = vmatpush1.bf16.msra.mxu0 0
    %1438 = vmatprep.subr.bf16.mxu0 0
    %1439 = vmatpush1.bf16.msra.mxu0 0
    %1440 = vmatprep.subr.bf16.mxu0 0
    %1441 = vmatpush1.bf16.msra.mxu0 0
    %1442 = vmatprep.mubr.bf16.mxu0 0
    %1443 = vmatmul.mubr.bf16.gmra.mrb[0].mxu0 %v1408
    %v1444 = vpop.f32.mrb[0].mxu0
    %v1445 = vadd.f32 %v1404, %v1444
    %v1446 = vpop.f32.mrb[0].mxu0
    %v1447 = vpop.f32.mrb[0].mxu0
    %v1448 = vadd.f32 %v1404, %v1447
    %v1449 = vpop.f32.mrb[0].mxu0
    %1450 = vdwg.mxu0
    %v1451 = vadd.f32 %v1324, %v1445
    %v1452 = vadd.f32 %v1325, %v1448
    %v1453 = vld [vmem:[%s12] sm:$0x1]
    %v1454 = vld [vmem:[%s13] sm:$0x1]
    %v1455 = vsel %vm135, %v1451, 0.0
    %1456 = vadd.xlane.f32.xlu0 %v1455
    %v1457 = vpop.xlane.xlu0 %1456
    %v1458 = vsel %vm135, %v1452, 0.0
    %1459 = vadd.xlane.f32.xlu0 %v1458
    %v1460 = vpop.xlane.xlu0 %1459
    %v1461 = vmul.f32 %v1457, %v1289
    %v1462 = vmul.f32 %v1460, %v1289
    %v1463 = vsub.f32 %v1451, %v1461
    %v1464 = vsub.f32 %v1452, %v1462
    %v1465 = vmul.f32 %v1463, %v1463
    %v1466 = vmul.f32 %v1464, %v1464
    %v1467 = vsel %vm135, %v1465, 0.0
    %1468 = vadd.xlane.f32.xlu0 %v1467
    %v1469 = vpop.xlane.xlu0 %1468
    %v1470 = vsel %vm135, %v1466, 0.0
    %1471 = vadd.xlane.f32.xlu0 %v1470
    %v1472 = vpop.xlane.xlu0 %1471
    %v1473 = vmul.f32 %v1469, %v1289
    %v1474 = vmul.f32 %v1472, %v1289
    %v1475 = vadd.f32 %v1473, 1e-05
    %v1476 = vadd.f32 %v1474, 1e-05
    %v1477 = vrsqrt.pop %v1475
    %v1478 = vrsqrt.pop %v1476
    %v1479 = vmul.f32 %v1463, %v1477
    %v1480 = vmul.f32 %v1464, %v1478
    %v1482 = vlaneseq
    %v1483 = vshrl.u32 %v1482, 7
    %v1484 = vsub.s32 0, %v1483
    %v1485 = vrot.slane %v1453, %v1484
    %v1487 = vmul.f32 %v1479, %v1485
    %v1488 = vmul.f32 %v1480, %v1485
    %v1490 = vlaneseq
    %v1491 = vshrl.u32 %v1490, 7
    %v1492 = vsub.s32 0, %v1491
    %v1493 = vrot.slane %v1454, %v1492
    %v1495 = vadd.f32 %v1487, %v1493
    %v1496 = vadd.f32 %v1488, %v1493
    %v1497 = vsel %vm135, %v1495, 0.0
    %v1498 = vrot.slane %v1497, 4
    %v1499 = vadd.f32 %v1497, %v1498
    %v1500 = vrot.slane %v1499, 2
    %v1501 = vadd.f32 %v1499, %v1500
    %v1502 = vrot.slane %v1501, 1
    %v1503 = vadd.f32 %v1501, %v1502
    %v1504 = vsel %vm135, %v1496, 0.0
    %v1505 = vrot.slane %v1504, 4
    %v1506 = vadd.f32 %v1504, %v1505
    %v1507 = vrot.slane %v1506, 2
    %v1508 = vadd.f32 %v1506, %v1507
    %v1509 = vrot.slane %v1508, 1
    %v1510 = vadd.f32 %v1508, %v1509
    %s1511 = scalar_lea.vmem %s4, 32
    %v1512 = vld [vmem:[%s1511] sm:$0xff]
    %v1513 = vld [vmem:[%s1511 + $0x8] sm:$0xff]
    %v1514 = vld [vmem:[%s1511 + $0x10] sm:$0xff]
    %v1515 = vld [vmem:[%s1511 + $0x18] sm:$0xff]
    %s1516 = scalar_lea.vmem %s2, 32
    %v1517 = vld [vmem:[%s1516] sm:$0xff]
    %v1518 = vld [vmem:[%s1516 + $0x8] sm:$0xff]
    %v1519 = vld [vmem:[%s1516 + $0x10] sm:$0xff]
    %v1520 = vld [vmem:[%s1516 + $0x18] sm:$0xff]
    %v1521 = vpack.c.bf16 %v1496, %v1495
    %v1522 = vpack.c.bf16 %v1518, %v1517
    %v1523 = vpack.c.bf16 %v1520, %v1519
    %s1524 = scalar_lea.vmem %s3, 1
    %v1525 = vld [vmem:[%s1524] sm:$0x1]
    %v1527 = vlaneseq
    %v1528 = vshrl.u32 %v1527, 7
    %v1529 = vsub.s32 0, %v1528
    %v1530 = vrot.slane %v1525, %v1529
    %v1533 = vsel %vm135, %v1521, 0
    %1535 = vmatprep.subr.bf16.mxu0 0
    %1536 = vmatpush1.bf16.msra.mxu0 %v1522
    %1537 = vmatprep.subr.bf16.mxu0 0
    %1538 = vmatpush1.bf16.msra.mxu0 %v1523
    %1539 = vmatprep.subr.bf16.mxu0 0
    %1540 = vmatpush1.bf16.msra.mxu0 0
    %1541 = vmatprep.subr.bf16.mxu0 0
    %1542 = vmatpush1.bf16.msra.mxu0 0
    %1543 = vmatprep.subr.bf16.mxu0 0
    %1544 = vmatpush1.bf16.msra.mxu0 0
    %1545 = vmatprep.subr.bf16.mxu0 0
    %1546 = vmatpush1.bf16.msra.mxu0 0
    %1547 = vmatprep.subr.bf16.mxu0 0
    %1548 = vmatpush1.bf16.msra.mxu0 0
    %1549 = vmatprep.subr.bf16.mxu0 0
    %1550 = vmatpush1.bf16.msra.mxu0 0
    %1551 = vmatprep.subr.bf16.mxu0 0
    %1552 = vmatpush1.bf16.msra.mxu0 0
    %1553 = vmatprep.subr.bf16.mxu0 0
    %1554 = vmatpush1.bf16.msra.mxu0 0
    %1555 = vmatprep.subr.bf16.mxu0 0
    %1556 = vmatpush1.bf16.msra.mxu0 0
    %1557 = vmatprep.subr.bf16.mxu0 0
    %1558 = vmatpush1.bf16.msra.mxu0 0
    %1559 = vmatprep.subr.bf16.mxu0 0
    %1560 = vmatpush1.bf16.msra.mxu0 0
    %1561 = vmatprep.subr.bf16.mxu0 0
    %1562 = vmatpush1.bf16.msra.mxu0 0
    %1563 = vmatprep.subr.bf16.mxu0 0
    %1564 = vmatpush1.bf16.msra.mxu0 0
    %1565 = vmatprep.subr.bf16.mxu0 0
    %1566 = vmatpush1.bf16.msra.mxu0 0
    %1567 = vmatprep.mubr.bf16.mxu0 0
    %1568 = vmatmul.mubr.bf16.gmra.mrb[0].mxu0 %v1533
    %v1569 = vpop.f32.mrb[0].mxu0
    %v1570 = vadd.f32 %v1530, %v1569
    %v1571 = vpop.f32.mrb[0].mxu0
    %v1572 = vpop.f32.mrb[0].mxu0
    %v1573 = vadd.f32 %v1530, %v1572
    %v1574 = vpop.f32.mrb[0].mxu0
    %1575 = vdwg.mxu0
    %v1576 = vpack.c.bf16 %v1570, %v1570
    %v1577 = vpack.c.bf16 %v1573, %v1573
    %1579 = vrot.lane.b32.xlu0 %v1576, 96
    %v1580 = vpop.permute.xlu0 %1579
    %v1582 = vsel %vm185, %v1576, 0
    %v1585 = vsel %vm185, %v1580, 0
    %1587 = vmatprep.subr.bf16.mxu0 0
    %1588 = vmatpush1.bf16.xpose.msra.mxu0 %v1585
    %1589 = vmatprep.subr.bf16.mxu0 0
    %1590 = vmatpush1.bf16.xpose.msra.mxu0 0
    %1591 = vmatprep.subr.bf16.mxu0 0
    %1592 = vmatpush1.bf16.xpose.msra.mxu0 0
    %1593 = vmatprep.subr.bf16.mxu0 0
    %1594 = vmatpush1.bf16.xpose.msra.mxu0 0
    %1595 = vmatprep.subr.bf16.mxu0 0
    %1596 = vmatpush1.bf16.xpose.msra.mxu0 0
    %1597 = vmatprep.subr.bf16.mxu0 0
    %1598 = vmatpush1.bf16.xpose.msra.mxu0 0
    %1599 = vmatprep.subr.bf16.mxu0 0
    %1600 = vmatpush1.bf16.xpose.msra.mxu0 0
    %1601 = vmatprep.subr.bf16.mxu0 0
    %1602 = vmatpush1.bf16.xpose.msra.mxu0 0
    %1603 = vmatprep.subr.bf16.mxu0 0
    %1604 = vmatpush1.bf16.xpose.msra.mxu0 0
    %1605 = vmatprep.subr.bf16.mxu0 0
    %1606 = vmatpush1.bf16.xpose.msra.mxu0 0
    %1607 = vmatprep.subr.bf16.mxu0 0
    %1608 = vmatpush1.bf16.xpose.msra.mxu0 0
    %1609 = vmatprep.subr.bf16.mxu0 0
    %1610 = vmatpush1.bf16.xpose.msra.mxu0 0
    %1611 = vmatprep.subr.bf16.mxu0 0
    %1612 = vmatpush1.bf16.xpose.msra.mxu0 0
    %1613 = vmatprep.subr.bf16.mxu0 0
    %1614 = vmatpush1.bf16.xpose.msra.mxu0 0
    %1615 = vmatprep.subr.bf16.mxu0 0
    %1616 = vmatpush1.bf16.xpose.msra.mxu0 0
    %1617 = vmatprep.subr.bf16.mxu0 0
    %1618 = vmatpush1.bf16.xpose.msra.mxu0 0
    %1619 = vmatprep.mubr.bf16.mxu0 0
    %1620 = vmatmul.mubr.bf16.gmra.mrb[0].mxu0 %v1582
    %v1621 = vpop.f32.mrb[0].mxu0
    %v1622 = vadd.f32 0.0, %v1621
    %v1623 = vpop.f32.mrb[0].mxu0
    %v1624 = vpop.f32.mrb[0].mxu0
    %v1625 = vpop.f32.mrb[0].mxu0
    %1626 = vdwg.mxu0
    %1628 = vrot.lane.b32.xlu0 %v1577, 96
    %v1629 = vpop.permute.xlu0 %1628
    %v1631 = vsel %vm185, %v1577, 0
    %v1634 = vsel %vm185, %v1629, 0
    %1636 = vmatprep.subr.bf16.mxu0 0
    %1637 = vmatpush1.bf16.xpose.msra.mxu0 %v1634
    %1638 = vmatprep.subr.bf16.mxu0 0
    %1639 = vmatpush1.bf16.xpose.msra.mxu0 0
    %1640 = vmatprep.subr.bf16.mxu0 0
    %1641 = vmatpush1.bf16.xpose.msra.mxu0 0
    %1642 = vmatprep.subr.bf16.mxu0 0
    %1643 = vmatpush1.bf16.xpose.msra.mxu0 0
    %1644 = vmatprep.subr.bf16.mxu0 0
    %1645 = vmatpush1.bf16.xpose.msra.mxu0 0
    %1646 = vmatprep.subr.bf16.mxu0 0
    %1647 = vmatpush1.bf16.xpose.msra.mxu0 0
    %1648 = vmatprep.subr.bf16.mxu0 0
    %1649 = vmatpush1.bf16.xpose.msra.mxu0 0
    %1650 = vmatprep.subr.bf16.mxu0 0
    %1651 = vmatpush1.bf16.xpose.msra.mxu0 0
    %1652 = vmatprep.subr.bf16.mxu0 0
    %1653 = vmatpush1.bf16.xpose.msra.mxu0 0
    %1654 = vmatprep.subr.bf16.mxu0 0
    %1655 = vmatpush1.bf16.xpose.msra.mxu0 0
    %1656 = vmatprep.subr.bf16.mxu0 0
    %1657 = vmatpush1.bf16.xpose.msra.mxu0 0
    %1658 = vmatprep.subr.bf16.mxu0 0
    %1659 = vmatpush1.bf16.xpose.msra.mxu0 0
    %1660 = vmatprep.subr.bf16.mxu0 0
    %1661 = vmatpush1.bf16.xpose.msra.mxu0 0
    %1662 = vmatprep.subr.bf16.mxu0 0
    %1663 = vmatpush1.bf16.xpose.msra.mxu0 0
    %1664 = vmatprep.subr.bf16.mxu0 0
    %1665 = vmatpush1.bf16.xpose.msra.mxu0 0
    %1666 = vmatprep.subr.bf16.mxu0 0
    %1667 = vmatpush1.bf16.xpose.msra.mxu0 0
    %1668 = vmatprep.mubr.bf16.mxu0 0
    %1669 = vmatmul.mubr.bf16.gmra.mrb[0].mxu0 %v1631
    %v1670 = vpop.f32.mrb[0].mxu0
    %v1671 = vadd.f32 0.0, %v1670
    %v1672 = vpop.f32.mrb[0].mxu0
    %v1673 = vpop.f32.mrb[0].mxu0
    %v1674 = vpop.f32.mrb[0].mxu0
    %1675 = vdwg.mxu0
    %v1676 = vmul.f32 %v1622, 0.35355338
    %v1677 = vmul.f32 %v1671, 0.35355338
    %v1678 = vsel %vm185, %v1676, -inf
    %1679 = vmax.xlane.f32.xlu0 %v1678
    %v1680 = vpop.xlane.xlu0 %1679
    %v1681 = vsel %vm185, %v1677, -inf
    %1682 = vmax.xlane.f32.xlu0 %v1681
    %v1683 = vpop.xlane.xlu0 %1682
    %v1684 = vsub.f32 %v1676, %v1680
    %v1685 = vsub.f32 %v1677, %v1683
    %v1686 = vmul.f32 %v1684, 1.442695
    %v1687 = vpow.pop %v1686
    %v1688 = vmul.f32 %v1685, 1.442695
    %v1689 = vpow.pop %v1688
    %v1690 = vsel %vm185, %v1687, 0.0
    %1691 = vadd.xlane.f32.xlu0 %v1690
    %v1692 = vpop.xlane.xlu0 %1691
    %v1693 = vsel %vm185, %v1689, 0.0
    %1694 = vadd.xlane.f32.xlu0 %v1693
    %v1695 = vpop.xlane.xlu0 %1694
    %v1696 = vrcp.pop %v1692
    %v1697 = vrcp.pop %v1695
    %v1698 = vmul.f32 %v1687, %v1696
    %v1699 = vmul.f32 %v1689, %v1697
    %v1700 = vpack.c.bf16 %v1698, %v1698
    %v1701 = vpack.c.bf16 %v1699, %v1699
    %1702 = vrot.lane.b32.xlu0 %v1576, 64
    %v1703 = vpop.permute.xlu0 %1702
    %v1705 = vsel %vm185, %v1700, 0
    %v1708 = vsel %vm312, %v1703, 0
    %1710 = vmatprep.subr.bf16.mxu0 0
    %1711 = vmatpush1.bf16.msra.mxu0 %v1708
    %1712 = vmatprep.subr.bf16.mxu0 0
    %1713 = vmatpush1.bf16.msra.mxu0 0
    %1714 = vmatprep.subr.bf16.mxu0 0
    %1715 = vmatpush1.bf16.msra.mxu0 0
    %1716 = vmatprep.subr.bf16.mxu0 0
    %1717 = vmatpush1.bf16.msra.mxu0 0
    %1718 = vmatprep.subr.bf16.mxu0 0
    %1719 = vmatpush1.bf16.msra.mxu0 0
    %1720 = vmatprep.subr.bf16.mxu0 0
    %1721 = vmatpush1.bf16.msra.mxu0 0
    %1722 = vmatprep.subr.bf16.mxu0 0
    %1723 = vmatpush1.bf16.msra.mxu0 0
    %1724 = vmatprep.subr.bf16.mxu0 0
    %1725 = vmatpush1.bf16.msra.mxu0 0
    %1726 = vmatprep.subr.bf16.mxu0 0
    %1727 = vmatpush1.bf16.msra.mxu0 0
    %1728 = vmatprep.subr.bf16.mxu0 0
    %1729 = vmatpush1.bf16.msra.mxu0 0
    %1730 = vmatprep.subr.bf16.mxu0 0
    %1731 = vmatpush1.bf16.msra.mxu0 0
    %1732 = vmatprep.subr.bf16.mxu0 0
    %1733 = vmatpush1.bf16.msra.mxu0 0
    %1734 = vmatprep.subr.bf16.mxu0 0
    %1735 = vmatpush1.bf16.msra.mxu0 0
    %1736 = vmatprep.subr.bf16.mxu0 0
    %1737 = vmatpush1.bf16.msra.mxu0 0
    %1738 = vmatprep.subr.bf16.mxu0 0
    %1739 = vmatpush1.bf16.msra.mxu0 0
    %1740 = vmatprep.subr.bf16.mxu0 0
    %1741 = vmatpush1.bf16.msra.mxu0 0
    %1742 = vmatprep.mubr.bf16.mxu0 0
    %1743 = vmatmul.mubr.bf16.gmra.mrb[0].mxu0 %v1705
    %v1744 = vpop.f32.mrb[0].mxu0
    %v1745 = vadd.f32 0.0, %v1744
    %v1746 = vpop.f32.mrb[0].mxu0
    %v1747 = vpop.f32.mrb[0].mxu0
    %v1748 = vpop.f32.mrb[0].mxu0
    %1749 = vdwg.mxu0
    %1750 = vrot.lane.b32.xlu0 %v1577, 64
    %v1751 = vpop.permute.xlu0 %1750
    %v1753 = vsel %vm185, %v1701, 0
    %v1756 = vsel %vm312, %v1751, 0
    %1758 = vmatprep.subr.bf16.mxu0 0
    %1759 = vmatpush1.bf16.msra.mxu0 %v1756
    %1760 = vmatprep.subr.bf16.mxu0 0
    %1761 = vmatpush1.bf16.msra.mxu0 0
    %1762 = vmatprep.subr.bf16.mxu0 0
    %1763 = vmatpush1.bf16.msra.mxu0 0
    %1764 = vmatprep.subr.bf16.mxu0 0
    %1765 = vmatpush1.bf16.msra.mxu0 0
    %1766 = vmatprep.subr.bf16.mxu0 0
    %1767 = vmatpush1.bf16.msra.mxu0 0
    %1768 = vmatprep.subr.bf16.mxu0 0
    %1769 = vmatpush1.bf16.msra.mxu0 0
    %1770 = vmatprep.subr.bf16.mxu0 0
    %1771 = vmatpush1.bf16.msra.mxu0 0
    %1772 = vmatprep.subr.bf16.mxu0 0
    %1773 = vmatpush1.bf16.msra.mxu0 0
    %1774 = vmatprep.subr.bf16.mxu0 0
    %1775 = vmatpush1.bf16.msra.mxu0 0
    %1776 = vmatprep.subr.bf16.mxu0 0
    %1777 = vmatpush1.bf16.msra.mxu0 0
    %1778 = vmatprep.subr.bf16.mxu0 0
    %1779 = vmatpush1.bf16.msra.mxu0 0
    %1780 = vmatprep.subr.bf16.mxu0 0
    %1781 = vmatpush1.bf16.msra.mxu0 0
    %1782 = vmatprep.subr.bf16.mxu0 0
    %1783 = vmatpush1.bf16.msra.mxu0 0
    %1784 = vmatprep.subr.bf16.mxu0 0
    %1785 = vmatpush1.bf16.msra.mxu0 0
    %1786 = vmatprep.subr.bf16.mxu0 0
    %1787 = vmatpush1.bf16.msra.mxu0 0
    %1788 = vmatprep.subr.bf16.mxu0 0
    %1789 = vmatpush1.bf16.msra.mxu0 0
    %1790 = vmatprep.mubr.bf16.mxu0 0
    %1791 = vmatmul.mubr.bf16.gmra.mrb[0].mxu0 %v1753
    %v1792 = vpop.f32.mrb[0].mxu0
    %v1793 = vadd.f32 0.0, %v1792
    %v1794 = vpop.f32.mrb[0].mxu0
    %v1795 = vpop.f32.mrb[0].mxu0
    %v1796 = vpop.f32.mrb[0].mxu0
    %1797 = vdwg.mxu0
    %v1798 = vpack.c.bf16 %v1793, %v1745
    %v1799 = vpack.c.bf16 %v1512, %v1512
    %1800 = vrot.lane.b32.xlu0 %v1576, 120
    %v1801 = vpop.permute.xlu0 %1800
    %1802 = vrot.lane.b32.xlu0 %v1576, 88
    %v1803 = vpop.permute.xlu0 %1802
    %v1805 = vsel %vm185, %v1801, 0
    %v1808 = vsel %vm185, %v1803, 0
    %1810 = vmatprep.subr.bf16.mxu0 0
    %1811 = vmatpush1.bf16.xpose.msra.mxu0 %v1808
    %1812 = vmatprep.subr.bf16.mxu0 0
    %1813 = vmatpush1.bf16.xpose.msra.mxu0 0
    %1814 = vmatprep.subr.bf16.mxu0 0
    %1815 = vmatpush1.bf16.xpose.msra.mxu0 0
    %1816 = vmatprep.subr.bf16.mxu0 0
    %1817 = vmatpush1.bf16.xpose.msra.mxu0 0
    %1818 = vmatprep.subr.bf16.mxu0 0
    %1819 = vmatpush1.bf16.xpose.msra.mxu0 0
    %1820 = vmatprep.subr.bf16.mxu0 0
    %1821 = vmatpush1.bf16.xpose.msra.mxu0 0
    %1822 = vmatprep.subr.bf16.mxu0 0
    %1823 = vmatpush1.bf16.xpose.msra.mxu0 0
    %1824 = vmatprep.subr.bf16.mxu0 0
    %1825 = vmatpush1.bf16.xpose.msra.mxu0 0
    %1826 = vmatprep.subr.bf16.mxu0 0
    %1827 = vmatpush1.bf16.xpose.msra.mxu0 0
    %1828 = vmatprep.subr.bf16.mxu0 0
    %1829 = vmatpush1.bf16.xpose.msra.mxu0 0
    %1830 = vmatprep.subr.bf16.mxu0 0
    %1831 = vmatpush1.bf16.xpose.msra.mxu0 0
    %1832 = vmatprep.subr.bf16.mxu0 0
    %1833 = vmatpush1.bf16.xpose.msra.mxu0 0
    %1834 = vmatprep.subr.bf16.mxu0 0
    %1835 = vmatpush1.bf16.xpose.msra.mxu0 0
    %1836 = vmatprep.subr.bf16.mxu0 0
    %1837 = vmatpush1.bf16.xpose.msra.mxu0 0
    %1838 = vmatprep.subr.bf16.mxu0 0
    %1839 = vmatpush1.bf16.xpose.msra.mxu0 0
    %1840 = vmatprep.subr.bf16.mxu0 0
    %1841 = vmatpush1.bf16.xpose.msra.mxu0 0
    %1842 = vmatprep.mubr.bf16.mxu0 0
    %1843 = vmatmul.mubr.bf16.gmra.mrb[0].mxu0 %v1805
    %v1844 = vpop.f32.mrb[0].mxu0
    %v1845 = vadd.f32 0.0, %v1844
    %v1846 = vpop.f32.mrb[0].mxu0
    %v1847 = vpop.f32.mrb[0].mxu0
    %v1848 = vpop.f32.mrb[0].mxu0
    %1849 = vdwg.mxu0
    %1850 = vrot.lane.b32.xlu0 %v1577, 120
    %v1851 = vpop.permute.xlu0 %1850
    %1852 = vrot.lane.b32.xlu0 %v1577, 88
    %v1853 = vpop.permute.xlu0 %1852
    %v1855 = vsel %vm185, %v1851, 0
    %v1858 = vsel %vm185, %v1853, 0
    %1860 = vmatprep.subr.bf16.mxu0 0
    %1861 = vmatpush1.bf16.xpose.msra.mxu0 %v1858
    %1862 = vmatprep.subr.bf16.mxu0 0
    %1863 = vmatpush1.bf16.xpose.msra.mxu0 0
    %1864 = vmatprep.subr.bf16.mxu0 0
    %1865 = vmatpush1.bf16.xpose.msra.mxu0 0
    %1866 = vmatprep.subr.bf16.mxu0 0
    %1867 = vmatpush1.bf16.xpose.msra.mxu0 0
    %1868 = vmatprep.subr.bf16.mxu0 0
    %1869 = vmatpush1.bf16.xpose.msra.mxu0 0
    %1870 = vmatprep.subr.bf16.mxu0 0
    %1871 = vmatpush1.bf16.xpose.msra.mxu0 0
    %1872 = vmatprep.subr.bf16.mxu0 0
    %1873 = vmatpush1.bf16.xpose.msra.mxu0 0
    %1874 = vmatprep.subr.bf16.mxu0 0
    %1875 = vmatpush1.bf16.xpose.msra.mxu0 0
    %1876 = vmatprep.subr.bf16.mxu0 0
    %1877 = vmatpush1.bf16.xpose.msra.mxu0 0
    %1878 = vmatprep.subr.bf16.mxu0 0
    %1879 = vmatpush1.bf16.xpose.msra.mxu0 0
    %1880 = vmatprep.subr.bf16.mxu0 0
    %1881 = vmatpush1.bf16.xpose.msra.mxu0 0
    %1882 = vmatprep.subr.bf16.mxu0 0
    %1883 = vmatpush1.bf16.xpose.msra.mxu0 0
    %1884 = vmatprep.subr.bf16.mxu0 0
    %1885 = vmatpush1.bf16.xpose.msra.mxu0 0
    %1886 = vmatprep.subr.bf16.mxu0 0
    %1887 = vmatpush1.bf16.xpose.msra.mxu0 0
    %1888 = vmatprep.subr.bf16.mxu0 0
    %1889 = vmatpush1.bf16.xpose.msra.mxu0 0
    %1890 = vmatprep.subr.bf16.mxu0 0
    %1891 = vmatpush1.bf16.xpose.msra.mxu0 0
    %1892 = vmatprep.mubr.bf16.mxu0 0
    %1893 = vmatmul.mubr.bf16.gmra.mrb[0].mxu0 %v1855
    %v1894 = vpop.f32.mrb[0].mxu0
    %v1895 = vadd.f32 0.0, %v1894
    %v1896 = vpop.f32.mrb[0].mxu0
    %v1897 = vpop.f32.mrb[0].mxu0
    %v1898 = vpop.f32.mrb[0].mxu0
    %1899 = vdwg.mxu0
    %v1900 = vmul.f32 %v1845, 0.35355338
    %v1901 = vmul.f32 %v1895, 0.35355338
    %v1902 = vsel %vm185, %v1900, -inf
    %1903 = vmax.xlane.f32.xlu0 %v1902
    %v1904 = vpop.xlane.xlu0 %1903
    %v1905 = vsel %vm185, %v1901, -inf
    %1906 = vmax.xlane.f32.xlu0 %v1905
    %v1907 = vpop.xlane.xlu0 %1906
    %v1908 = vsub.f32 %v1900, %v1904
    %v1909 = vsub.f32 %v1901, %v1907
    %v1910 = vmul.f32 %v1908, 1.442695
    %v1911 = vpow.pop %v1910
    %v1912 = vmul.f32 %v1909, 1.442695
    %v1913 = vpow.pop %v1912
    %v1914 = vsel %vm185, %v1911, 0.0
    %1915 = vadd.xlane.f32.xlu0 %v1914
    %v1916 = vpop.xlane.xlu0 %1915
    %v1917 = vsel %vm185, %v1913, 0.0
    %1918 = vadd.xlane.f32.xlu0 %v1917
    %v1919 = vpop.xlane.xlu0 %1918
    %v1920 = vrcp.pop %v1916
    %v1921 = vrcp.pop %v1919
    %v1922 = vmul.f32 %v1911, %v1920
    %v1923 = vmul.f32 %v1913, %v1921
    %v1924 = vpack.c.bf16 %v1922, %v1922
    %v1925 = vpack.c.bf16 %v1923, %v1923
    %1926 = vrot.lane.b32.xlu0 %v1576, 56
    %v1927 = vpop.permute.xlu0 %1926
    %v1929 = vsel %vm185, %v1924, 0
    %v1932 = vsel %vm312, %v1927, 0
    %1934 = vmatprep.subr.bf16.mxu0 0
    %1935 = vmatpush1.bf16.msra.mxu0 %v1932
    %1936 = vmatprep.subr.bf16.mxu0 0
    %1937 = vmatpush1.bf16.msra.mxu0 0
    %1938 = vmatprep.subr.bf16.mxu0 0
    %1939 = vmatpush1.bf16.msra.mxu0 0
    %1940 = vmatprep.subr.bf16.mxu0 0
    %1941 = vmatpush1.bf16.msra.mxu0 0
    %1942 = vmatprep.subr.bf16.mxu0 0
    %1943 = vmatpush1.bf16.msra.mxu0 0
    %1944 = vmatprep.subr.bf16.mxu0 0
    %1945 = vmatpush1.bf16.msra.mxu0 0
    %1946 = vmatprep.subr.bf16.mxu0 0
    %1947 = vmatpush1.bf16.msra.mxu0 0
    %1948 = vmatprep.subr.bf16.mxu0 0
    %1949 = vmatpush1.bf16.msra.mxu0 0
    %1950 = vmatprep.subr.bf16.mxu0 0
    %1951 = vmatpush1.bf16.msra.mxu0 0
    %1952 = vmatprep.subr.bf16.mxu0 0
    %1953 = vmatpush1.bf16.msra.mxu0 0
    %1954 = vmatprep.subr.bf16.mxu0 0
    %1955 = vmatpush1.bf16.msra.mxu0 0
    %1956 = vmatprep.subr.bf16.mxu0 0
    %1957 = vmatpush1.bf16.msra.mxu0 0
    %1958 = vmatprep.subr.bf16.mxu0 0
    %1959 = vmatpush1.bf16.msra.mxu0 0
    %1960 = vmatprep.subr.bf16.mxu0 0
    %1961 = vmatpush1.bf16.msra.mxu0 0
    %1962 = vmatprep.subr.bf16.mxu0 0
    %1963 = vmatpush1.bf16.msra.mxu0 0
    %1964 = vmatprep.subr.bf16.mxu0 0
    %1965 = vmatpush1.bf16.msra.mxu0 0
    %1966 = vmatprep.mubr.bf16.mxu0 0
    %1967 = vmatmul.mubr.bf16.gmra.mrb[0].mxu0 %v1929
    %v1968 = vpop.f32.mrb[0].mxu0
    %v1969 = vadd.f32 0.0, %v1968
    %v1970 = vpop.f32.mrb[0].mxu0
    %v1971 = vpop.f32.mrb[0].mxu0
    %v1972 = vpop.f32.mrb[0].mxu0
    %1973 = vdwg.mxu0
    %1974 = vrot.lane.b32.xlu0 %v1577, 56
    %v1975 = vpop.permute.xlu0 %1974
    %v1977 = vsel %vm185, %v1925, 0
    %v1980 = vsel %vm312, %v1975, 0
    %1982 = vmatprep.subr.bf16.mxu0 0
    %1983 = vmatpush1.bf16.msra.mxu0 %v1980
    %1984 = vmatprep.subr.bf16.mxu0 0
    %1985 = vmatpush1.bf16.msra.mxu0 0
    %1986 = vmatprep.subr.bf16.mxu0 0
    %1987 = vmatpush1.bf16.msra.mxu0 0
    %1988 = vmatprep.subr.bf16.mxu0 0
    %1989 = vmatpush1.bf16.msra.mxu0 0
    %1990 = vmatprep.subr.bf16.mxu0 0
    %1991 = vmatpush1.bf16.msra.mxu0 0
    %1992 = vmatprep.subr.bf16.mxu0 0
    %1993 = vmatpush1.bf16.msra.mxu0 0
    %1994 = vmatprep.subr.bf16.mxu0 0
    %1995 = vmatpush1.bf16.msra.mxu0 0
    %1996 = vmatprep.subr.bf16.mxu0 0
    %1997 = vmatpush1.bf16.msra.mxu0 0
    %1998 = vmatprep.subr.bf16.mxu0 0
    %1999 = vmatpush1.bf16.msra.mxu0 0
    %2000 = vmatprep.subr.bf16.mxu0 0
    %2001 = vmatpush1.bf16.msra.mxu0 0
    %2002 = vmatprep.subr.bf16.mxu0 0
    %2003 = vmatpush1.bf16.msra.mxu0 0
    %2004 = vmatprep.subr.bf16.mxu0 0
    %2005 = vmatpush1.bf16.msra.mxu0 0
    %2006 = vmatprep.subr.bf16.mxu0 0
    %2007 = vmatpush1.bf16.msra.mxu0 0
    %2008 = vmatprep.subr.bf16.mxu0 0
    %2009 = vmatpush1.bf16.msra.mxu0 0
    %2010 = vmatprep.subr.bf16.mxu0 0
    %2011 = vmatpush1.bf16.msra.mxu0 0
    %2012 = vmatprep.subr.bf16.mxu0 0
    %2013 = vmatpush1.bf16.msra.mxu0 0
    %2014 = vmatprep.mubr.bf16.mxu0 0
    %2015 = vmatmul.mubr.bf16.gmra.mrb[0].mxu0 %v1977
    %v2016 = vpop.f32.mrb[0].mxu0
    %v2017 = vadd.f32 0.0, %v2016
    %v2018 = vpop.f32.mrb[0].mxu0
    %v2019 = vpop.f32.mrb[0].mxu0
    %v2020 = vpop.f32.mrb[0].mxu0
    %2021 = vdwg.mxu0
    %v2022 = vpack.c.bf16 %v2017, %v1969
    %v2023 = vpack.c.bf16 %v1513, %v1513
    %v2025 = vsel %vm185, %v2022, 0
    %v2028 = vsel %vm312, %v2023, 0
    %2030 = vmatprep.subr.bf16.mxu0 0
    %2031 = vmatpush1.bf16.msra.mxu0 %v2028
    %2032 = vmatprep.subr.bf16.mxu0 0
    %2033 = vmatpush1.bf16.msra.mxu0 0
    %2034 = vmatprep.subr.bf16.mxu0 0
    %2035 = vmatpush1.bf16.msra.mxu0 0
    %2036 = vmatprep.subr.bf16.mxu0 0
    %2037 = vmatpush1.bf16.msra.mxu0 0
    %2038 = vmatprep.subr.bf16.mxu0 0
    %2039 = vmatpush1.bf16.msra.mxu0 0
    %2040 = vmatprep.subr.bf16.mxu0 0
    %2041 = vmatpush1.bf16.msra.mxu0 0
    %2042 = vmatprep.subr.bf16.mxu0 0
    %2043 = vmatpush1.bf16.msra.mxu0 0
    %2044 = vmatprep.subr.bf16.mxu0 0
    %2045 = vmatpush1.bf16.msra.mxu0 0
    %2046 = vmatprep.subr.bf16.mxu0 0
    %2047 = vmatpush1.bf16.msra.mxu0 0
    %2048 = vmatprep.subr.bf16.mxu0 0
    %2049 = vmatpush1.bf16.msra.mxu0 0
    %2050 = vmatprep.subr.bf16.mxu0 0
    %2051 = vmatpush1.bf16.msra.mxu0 0
    %2052 = vmatprep.subr.bf16.mxu0 0
    %2053 = vmatpush1.bf16.msra.mxu0 0
    %2054 = vmatprep.subr.bf16.mxu0 0
    %2055 = vmatpush1.bf16.msra.mxu0 0
    %2056 = vmatprep.subr.bf16.mxu0 0
    %2057 = vmatpush1.bf16.msra.mxu0 0
    %2058 = vmatprep.subr.bf16.mxu0 0
    %2059 = vmatpush1.bf16.msra.mxu0 0
    %2060 = vmatprep.subr.bf16.mxu0 0
    %2061 = vmatpush1.bf16.msra.mxu0 0
    %2062 = vmatprep.mubr.bf16.mxu0 0
    %2063 = vmatmul.mubr.bf16.gmra.mrb[0].mxu0 %v2025
    %v2064 = vpop.f32.mrb[0].mxu0
    %v2065 = vadd.f32 0.0, %v2064
    %v2066 = vpop.f32.mrb[0].mxu0
    %v2067 = vpop.f32.mrb[0].mxu0
    %v2068 = vadd.f32 0.0, %v2067
    %v2069 = vpop.f32.mrb[0].mxu0
    %2070 = vdwg.mxu0
    %v2072 = vsel %vm185, %v1798, 0
    %v2075 = vsel %vm312, %v1799, 0
    %2077 = vmatprep.subr.bf16.mxu0 0
    %2078 = vmatpush1.bf16.msra.mxu0 %v2075
    %2079 = vmatprep.subr.bf16.mxu0 0
    %2080 = vmatpush1.bf16.msra.mxu0 0
    %2081 = vmatprep.subr.bf16.mxu0 0
    %2082 = vmatpush1.bf16.msra.mxu0 0
    %2083 = vmatprep.subr.bf16.mxu0 0
    %2084 = vmatpush1.bf16.msra.mxu0 0
    %2085 = vmatprep.subr.bf16.mxu0 0
    %2086 = vmatpush1.bf16.msra.mxu0 0
    %2087 = vmatprep.subr.bf16.mxu0 0
    %2088 = vmatpush1.bf16.msra.mxu0 0
    %2089 = vmatprep.subr.bf16.mxu0 0
    %2090 = vmatpush1.bf16.msra.mxu0 0
    %2091 = vmatprep.subr.bf16.mxu0 0
    %2092 = vmatpush1.bf16.msra.mxu0 0
    %2093 = vmatprep.subr.bf16.mxu0 0
    %2094 = vmatpush1.bf16.msra.mxu0 0
    %2095 = vmatprep.subr.bf16.mxu0 0
    %2096 = vmatpush1.bf16.msra.mxu0 0
    %2097 = vmatprep.subr.bf16.mxu0 0
    %2098 = vmatpush1.bf16.msra.mxu0 0
    %2099 = vmatprep.subr.bf16.mxu0 0
    %2100 = vmatpush1.bf16.msra.mxu0 0
    %2101 = vmatprep.subr.bf16.mxu0 0
    %2102 = vmatpush1.bf16.msra.mxu0 0
    %2103 = vmatprep.subr.bf16.mxu0 0
    %2104 = vmatpush1.bf16.msra.mxu0 0
    %2105 = vmatprep.subr.bf16.mxu0 0
    %2106 = vmatpush1.bf16.msra.mxu0 0
    %2107 = vmatprep.subr.bf16.mxu0 0
    %2108 = vmatpush1.bf16.msra.mxu0 0
    %2109 = vmatprep.mubr.bf16.mxu0 0
    %2110 = vmatmul.mubr.bf16.gmra.mrb[0].mxu0 %v2072
    %v2111 = vpop.f32.mrb[0].mxu0
    %v2112 = vadd.f32 %v2065, %v2111
    %v2113 = vpop.f32.mrb[0].mxu0
    %v2114 = vpop.f32.mrb[0].mxu0
    %v2115 = vadd.f32 %v2068, %v2114
    %v2116 = vpop.f32.mrb[0].mxu0
    %2117 = vdwg.mxu0
    %2118 = vrot.lane.b32.xlu0 %v1576, 112
    %v2119 = vpop.permute.xlu0 %2118
    %2120 = vrot.lane.b32.xlu0 %v1576, 80
    %v2121 = vpop.permute.xlu0 %2120
    %v2123 = vsel %vm185, %v2119, 0
    %v2126 = vsel %vm185, %v2121, 0
    %2128 = vmatprep.subr.bf16.mxu0 0
    %2129 = vmatpush1.bf16.xpose.msra.mxu0 %v2126
    %2130 = vmatprep.subr.bf16.mxu0 0
    %2131 = vmatpush1.bf16.xpose.msra.mxu0 0
    %2132 = vmatprep.subr.bf16.mxu0 0
    %2133 = vmatpush1.bf16.xpose.msra.mxu0 0
    %2134 = vmatprep.subr.bf16.mxu0 0
    %2135 = vmatpush1.bf16.xpose.msra.mxu0 0
    %2136 = vmatprep.subr.bf16.mxu0 0
    %2137 = vmatpush1.bf16.xpose.msra.mxu0 0
    %2138 = vmatprep.subr.bf16.mxu0 0
    %2139 = vmatpush1.bf16.xpose.msra.mxu0 0
    %2140 = vmatprep.subr.bf16.mxu0 0
    %2141 = vmatpush1.bf16.xpose.msra.mxu0 0
    %2142 = vmatprep.subr.bf16.mxu0 0
    %2143 = vmatpush1.bf16.xpose.msra.mxu0 0
    %2144 = vmatprep.subr.bf16.mxu0 0
    %2145 = vmatpush1.bf16.xpose.msra.mxu0 0
    %2146 = vmatprep.subr.bf16.mxu0 0
    %2147 = vmatpush1.bf16.xpose.msra.mxu0 0
    %2148 = vmatprep.subr.bf16.mxu0 0
    %2149 = vmatpush1.bf16.xpose.msra.mxu0 0
    %2150 = vmatprep.subr.bf16.mxu0 0
    %2151 = vmatpush1.bf16.xpose.msra.mxu0 0
    %2152 = vmatprep.subr.bf16.mxu0 0
    %2153 = vmatpush1.bf16.xpose.msra.mxu0 0
    %2154 = vmatprep.subr.bf16.mxu0 0
    %2155 = vmatpush1.bf16.xpose.msra.mxu0 0
    %2156 = vmatprep.subr.bf16.mxu0 0
    %2157 = vmatpush1.bf16.xpose.msra.mxu0 0
    %2158 = vmatprep.subr.bf16.mxu0 0
    %2159 = vmatpush1.bf16.xpose.msra.mxu0 0
    %2160 = vmatprep.mubr.bf16.mxu0 0
    %2161 = vmatmul.mubr.bf16.gmra.mrb[0].mxu0 %v2123
    %v2162 = vpop.f32.mrb[0].mxu0
    %v2163 = vadd.f32 0.0, %v2162
    %v2164 = vpop.f32.mrb[0].mxu0
    %v2165 = vpop.f32.mrb[0].mxu0
    %v2166 = vpop.f32.mrb[0].mxu0
    %2167 = vdwg.mxu0
    %2168 = vrot.lane.b32.xlu0 %v1577, 112
    %v2169 = vpop.permute.xlu0 %2168
    %2170 = vrot.lane.b32.xlu0 %v1577, 80
    %v2171 = vpop.permute.xlu0 %2170
    %v2173 = vsel %vm185, %v2169, 0
    %v2176 = vsel %vm185, %v2171, 0
    %2178 = vmatprep.subr.bf16.mxu0 0
    %2179 = vmatpush1.bf16.xpose.msra.mxu0 %v2176
    %2180 = vmatprep.subr.bf16.mxu0 0
    %2181 = vmatpush1.bf16.xpose.msra.mxu0 0
    %2182 = vmatprep.subr.bf16.mxu0 0
    %2183 = vmatpush1.bf16.xpose.msra.mxu0 0
    %2184 = vmatprep.subr.bf16.mxu0 0
    %2185 = vmatpush1.bf16.xpose.msra.mxu0 0
    %2186 = vmatprep.subr.bf16.mxu0 0
    %2187 = vmatpush1.bf16.xpose.msra.mxu0 0
    %2188 = vmatprep.subr.bf16.mxu0 0
    %2189 = vmatpush1.bf16.xpose.msra.mxu0 0
    %2190 = vmatprep.subr.bf16.mxu0 0
    %2191 = vmatpush1.bf16.xpose.msra.mxu0 0
    %2192 = vmatprep.subr.bf16.mxu0 0
    %2193 = vmatpush1.bf16.xpose.msra.mxu0 0
    %2194 = vmatprep.subr.bf16.mxu0 0
    %2195 = vmatpush1.bf16.xpose.msra.mxu0 0
    %2196 = vmatprep.subr.bf16.mxu0 0
    %2197 = vmatpush1.bf16.xpose.msra.mxu0 0
    %2198 = vmatprep.subr.bf16.mxu0 0
    %2199 = vmatpush1.bf16.xpose.msra.mxu0 0
    %2200 = vmatprep.subr.bf16.mxu0 0
    %2201 = vmatpush1.bf16.xpose.msra.mxu0 0
    %2202 = vmatprep.subr.bf16.mxu0 0
    %2203 = vmatpush1.bf16.xpose.msra.mxu0 0
    %2204 = vmatprep.subr.bf16.mxu0 0
    %2205 = vmatpush1.bf16.xpose.msra.mxu0 0
    %2206 = vmatprep.subr.bf16.mxu0 0
    %2207 = vmatpush1.bf16.xpose.msra.mxu0 0
    %2208 = vmatprep.subr.bf16.mxu0 0
    %2209 = vmatpush1.bf16.xpose.msra.mxu0 0
    %2210 = vmatprep.mubr.bf16.mxu0 0
    %2211 = vmatmul.mubr.bf16.gmra.mrb[0].mxu0 %v2173
    %v2212 = vpop.f32.mrb[0].mxu0
    %v2213 = vadd.f32 0.0, %v2212
    %v2214 = vpop.f32.mrb[0].mxu0
    %v2215 = vpop.f32.mrb[0].mxu0
    %v2216 = vpop.f32.mrb[0].mxu0
    %2217 = vdwg.mxu0
    %v2218 = vmul.f32 %v2163, 0.35355338
    %v2219 = vmul.f32 %v2213, 0.35355338
    %v2220 = vsel %vm185, %v2218, -inf
    %2221 = vmax.xlane.f32.xlu0 %v2220
    %v2222 = vpop.xlane.xlu0 %2221
    %v2223 = vsel %vm185, %v2219, -inf
    %2224 = vmax.xlane.f32.xlu0 %v2223
    %v2225 = vpop.xlane.xlu0 %2224
    %v2226 = vsub.f32 %v2218, %v2222
    %v2227 = vsub.f32 %v2219, %v2225
    %v2228 = vmul.f32 %v2226, 1.442695
    %v2229 = vpow.pop %v2228
    %v2230 = vmul.f32 %v2227, 1.442695
    %v2231 = vpow.pop %v2230
    %v2232 = vsel %vm185, %v2229, 0.0
    %2233 = vadd.xlane.f32.xlu0 %v2232
    %v2234 = vpop.xlane.xlu0 %2233
    %v2235 = vsel %vm185, %v2231, 0.0
    %2236 = vadd.xlane.f32.xlu0 %v2235
    %v2237 = vpop.xlane.xlu0 %2236
    %v2238 = vrcp.pop %v2234
    %v2239 = vrcp.pop %v2237
    %v2240 = vmul.f32 %v2229, %v2238
    %v2241 = vmul.f32 %v2231, %v2239
    %v2242 = vpack.c.bf16 %v2240, %v2240
    %v2243 = vpack.c.bf16 %v2241, %v2241
    %2244 = vrot.lane.b32.xlu0 %v1576, 48
    %v2245 = vpop.permute.xlu0 %2244
    %v2247 = vsel %vm185, %v2242, 0
    %v2250 = vsel %vm312, %v2245, 0
    %2252 = vmatprep.subr.bf16.mxu0 0
    %2253 = vmatpush1.bf16.msra.mxu0 %v2250
    %2254 = vmatprep.subr.bf16.mxu0 0
    %2255 = vmatpush1.bf16.msra.mxu0 0
    %2256 = vmatprep.subr.bf16.mxu0 0
    %2257 = vmatpush1.bf16.msra.mxu0 0
    %2258 = vmatprep.subr.bf16.mxu0 0
    %2259 = vmatpush1.bf16.msra.mxu0 0
    %2260 = vmatprep.subr.bf16.mxu0 0
    %2261 = vmatpush1.bf16.msra.mxu0 0
    %2262 = vmatprep.subr.bf16.mxu0 0
    %2263 = vmatpush1.bf16.msra.mxu0 0
    %2264 = vmatprep.subr.bf16.mxu0 0
    %2265 = vmatpush1.bf16.msra.mxu0 0
    %2266 = vmatprep.subr.bf16.mxu0 0
    %2267 = vmatpush1.bf16.msra.mxu0 0
    %2268 = vmatprep.subr.bf16.mxu0 0
    %2269 = vmatpush1.bf16.msra.mxu0 0
    %2270 = vmatprep.subr.bf16.mxu0 0
    %2271 = vmatpush1.bf16.msra.mxu0 0
    %2272 = vmatprep.subr.bf16.mxu0 0
    %2273 = vmatpush1.bf16.msra.mxu0 0
    %2274 = vmatprep.subr.bf16.mxu0 0
    %2275 = vmatpush1.bf16.msra.mxu0 0
    %2276 = vmatprep.subr.bf16.mxu0 0
    %2277 = vmatpush1.bf16.msra.mxu0 0
    %2278 = vmatprep.subr.bf16.mxu0 0
    %2279 = vmatpush1.bf16.msra.mxu0 0
    %2280 = vmatprep.subr.bf16.mxu0 0
    %2281 = vmatpush1.bf16.msra.mxu0 0
    %2282 = vmatprep.subr.bf16.mxu0 0
    %2283 = vmatpush1.bf16.msra.mxu0 0
    %2284 = vmatprep.mubr.bf16.mxu0 0
    %2285 = vmatmul.mubr.bf16.gmra.mrb[0].mxu0 %v2247
    %v2286 = vpop.f32.mrb[0].mxu0
    %v2287 = vadd.f32 0.0, %v2286
    %v2288 = vpop.f32.mrb[0].mxu0
    %v2289 = vpop.f32.mrb[0].mxu0
    %v2290 = vpop.f32.mrb[0].mxu0
    %2291 = vdwg.mxu0
    %2292 = vrot.lane.b32.xlu0 %v1577, 48
    %v2293 = vpop.permute.xlu0 %2292
    %v2295 = vsel %vm185, %v2243, 0
    %v2298 = vsel %vm312, %v2293, 0
    %2300 = vmatprep.subr.bf16.mxu0 0
    %2301 = vmatpush1.bf16.msra.mxu0 %v2298
    %2302 = vmatprep.subr.bf16.mxu0 0
    %2303 = vmatpush1.bf16.msra.mxu0 0
    %2304 = vmatprep.subr.bf16.mxu0 0
    %2305 = vmatpush1.bf16.msra.mxu0 0
    %2306 = vmatprep.subr.bf16.mxu0 0
    %2307 = vmatpush1.bf16.msra.mxu0 0
    %2308 = vmatprep.subr.bf16.mxu0 0
    %2309 = vmatpush1.bf16.msra.mxu0 0
    %2310 = vmatprep.subr.bf16.mxu0 0
    %2311 = vmatpush1.bf16.msra.mxu0 0
    %2312 = vmatprep.subr.bf16.mxu0 0
    %2313 = vmatpush1.bf16.msra.mxu0 0
    %2314 = vmatprep.subr.bf16.mxu0 0
    %2315 = vmatpush1.bf16.msra.mxu0 0
    %2316 = vmatprep.subr.bf16.mxu0 0
    %2317 = vmatpush1.bf16.msra.mxu0 0
    %2318 = vmatprep.subr.bf16.mxu0 0
    %2319 = vmatpush1.bf16.msra.mxu0 0
    %2320 = vmatprep.subr.bf16.mxu0 0
    %2321 = vmatpush1.bf16.msra.mxu0 0
    %2322 = vmatprep.subr.bf16.mxu0 0
    %2323 = vmatpush1.bf16.msra.mxu0 0
    %2324 = vmatprep.subr.bf16.mxu0 0
    %2325 = vmatpush1.bf16.msra.mxu0 0
    %2326 = vmatprep.subr.bf16.mxu0 0
    %2327 = vmatpush1.bf16.msra.mxu0 0
    %2328 = vmatprep.subr.bf16.mxu0 0
    %2329 = vmatpush1.bf16.msra.mxu0 0
    %2330 = vmatprep.subr.bf16.mxu0 0
    %2331 = vmatpush1.bf16.msra.mxu0 0
    %2332 = vmatprep.mubr.bf16.mxu0 0
    %2333 = vmatmul.mubr.bf16.gmra.mrb[0].mxu0 %v2295
    %v2334 = vpop.f32.mrb[0].mxu0
    %v2335 = vadd.f32 0.0, %v2334
    %v2336 = vpop.f32.mrb[0].mxu0
    %v2337 = vpop.f32.mrb[0].mxu0
    %v2338 = vpop.f32.mrb[0].mxu0
    %2339 = vdwg.mxu0
    %v2340 = vpack.c.bf16 %v2335, %v2287
    %v2341 = vpack.c.bf16 %v1514, %v1514
    %v2343 = vsel %vm185, %v2340, 0
    %v2346 = vsel %vm312, %v2341, 0
    %2348 = vmatprep.subr.bf16.mxu0 0
    %2349 = vmatpush1.bf16.msra.mxu0 %v2346
    %2350 = vmatprep.subr.bf16.mxu0 0
    %2351 = vmatpush1.bf16.msra.mxu0 0
    %2352 = vmatprep.subr.bf16.mxu0 0
    %2353 = vmatpush1.bf16.msra.mxu0 0
    %2354 = vmatprep.subr.bf16.mxu0 0
    %2355 = vmatpush1.bf16.msra.mxu0 0
    %2356 = vmatprep.subr.bf16.mxu0 0
    %2357 = vmatpush1.bf16.msra.mxu0 0
    %2358 = vmatprep.subr.bf16.mxu0 0
    %2359 = vmatpush1.bf16.msra.mxu0 0
    %2360 = vmatprep.subr.bf16.mxu0 0
    %2361 = vmatpush1.bf16.msra.mxu0 0
    %2362 = vmatprep.subr.bf16.mxu0 0
    %2363 = vmatpush1.bf16.msra.mxu0 0
    %2364 = vmatprep.subr.bf16.mxu0 0
    %2365 = vmatpush1.bf16.msra.mxu0 0
    %2366 = vmatprep.subr.bf16.mxu0 0
    %2367 = vmatpush1.bf16.msra.mxu0 0
    %2368 = vmatprep.subr.bf16.mxu0 0
    %2369 = vmatpush1.bf16.msra.mxu0 0
    %2370 = vmatprep.subr.bf16.mxu0 0
    %2371 = vmatpush1.bf16.msra.mxu0 0
    %2372 = vmatprep.subr.bf16.mxu0 0
    %2373 = vmatpush1.bf16.msra.mxu0 0
    %2374 = vmatprep.subr.bf16.mxu0 0
    %2375 = vmatpush1.bf16.msra.mxu0 0
    %2376 = vmatprep.subr.bf16.mxu0 0
    %2377 = vmatpush1.bf16.msra.mxu0 0
    %2378 = vmatprep.subr.bf16.mxu0 0
    %2379 = vmatpush1.bf16.msra.mxu0 0
    %2380 = vmatprep.mubr.bf16.mxu0 0
    %2381 = vmatmul.mubr.bf16.gmra.mrb[0].mxu0 %v2343
    %v2382 = vpop.f32.mrb[0].mxu0
    %v2383 = vadd.f32 0.0, %v2382
    %v2384 = vpop.f32.mrb[0].mxu0
    %v2385 = vpop.f32.mrb[0].mxu0
    %v2386 = vadd.f32 0.0, %v2385
    %v2387 = vpop.f32.mrb[0].mxu0
    %2388 = vdwg.mxu0
    %v2389 = vadd.f32 %v2112, %v2383
    %v2390 = vadd.f32 %v2115, %v2386
    %2391 = vrot.lane.b32.xlu0 %v1576, 104
    %v2392 = vpop.permute.xlu0 %2391
    %2393 = vrot.lane.b32.xlu0 %v1576, 72
    %v2394 = vpop.permute.xlu0 %2393
    %v2396 = vsel %vm185, %v2392, 0
    %v2399 = vsel %vm185, %v2394, 0
    %2401 = vmatprep.subr.bf16.mxu0 0
    %2402 = vmatpush1.bf16.xpose.msra.mxu0 %v2399
    %2403 = vmatprep.subr.bf16.mxu0 0
    %2404 = vmatpush1.bf16.xpose.msra.mxu0 0
    %2405 = vmatprep.subr.bf16.mxu0 0
    %2406 = vmatpush1.bf16.xpose.msra.mxu0 0
    %2407 = vmatprep.subr.bf16.mxu0 0
    %2408 = vmatpush1.bf16.xpose.msra.mxu0 0
    %2409 = vmatprep.subr.bf16.mxu0 0
    %2410 = vmatpush1.bf16.xpose.msra.mxu0 0
    %2411 = vmatprep.subr.bf16.mxu0 0
    %2412 = vmatpush1.bf16.xpose.msra.mxu0 0
    %2413 = vmatprep.subr.bf16.mxu0 0
    %2414 = vmatpush1.bf16.xpose.msra.mxu0 0
    %2415 = vmatprep.subr.bf16.mxu0 0
    %2416 = vmatpush1.bf16.xpose.msra.mxu0 0
    %2417 = vmatprep.subr.bf16.mxu0 0
    %2418 = vmatpush1.bf16.xpose.msra.mxu0 0
    %2419 = vmatprep.subr.bf16.mxu0 0
    %2420 = vmatpush1.bf16.xpose.msra.mxu0 0
    %2421 = vmatprep.subr.bf16.mxu0 0
    %2422 = vmatpush1.bf16.xpose.msra.mxu0 0
    %2423 = vmatprep.subr.bf16.mxu0 0
    %2424 = vmatpush1.bf16.xpose.msra.mxu0 0
    %2425 = vmatprep.subr.bf16.mxu0 0
    %2426 = vmatpush1.bf16.xpose.msra.mxu0 0
    %2427 = vmatprep.subr.bf16.mxu0 0
    %2428 = vmatpush1.bf16.xpose.msra.mxu0 0
    %2429 = vmatprep.subr.bf16.mxu0 0
    %2430 = vmatpush1.bf16.xpose.msra.mxu0 0
    %2431 = vmatprep.subr.bf16.mxu0 0
    %2432 = vmatpush1.bf16.xpose.msra.mxu0 0
    %2433 = vmatprep.mubr.bf16.mxu0 0
    %2434 = vmatmul.mubr.bf16.gmra.mrb[0].mxu0 %v2396
    %v2435 = vpop.f32.mrb[0].mxu0
    %v2436 = vadd.f32 0.0, %v2435
    %v2437 = vpop.f32.mrb[0].mxu0
    %v2438 = vpop.f32.mrb[0].mxu0
    %v2439 = vpop.f32.mrb[0].mxu0
    %2440 = vdwg.mxu0
    %2441 = vrot.lane.b32.xlu0 %v1577, 104
    %v2442 = vpop.permute.xlu0 %2441
    %2443 = vrot.lane.b32.xlu0 %v1577, 72
    %v2444 = vpop.permute.xlu0 %2443
    %v2446 = vsel %vm185, %v2442, 0
    %v2449 = vsel %vm185, %v2444, 0
    %2451 = vmatprep.subr.bf16.mxu0 0
    %2452 = vmatpush1.bf16.xpose.msra.mxu0 %v2449
    %2453 = vmatprep.subr.bf16.mxu0 0
    %2454 = vmatpush1.bf16.xpose.msra.mxu0 0
    %2455 = vmatprep.subr.bf16.mxu0 0
    %2456 = vmatpush1.bf16.xpose.msra.mxu0 0
    %2457 = vmatprep.subr.bf16.mxu0 0
    %2458 = vmatpush1.bf16.xpose.msra.mxu0 0
    %2459 = vmatprep.subr.bf16.mxu0 0
    %2460 = vmatpush1.bf16.xpose.msra.mxu0 0
    %2461 = vmatprep.subr.bf16.mxu0 0
    %2462 = vmatpush1.bf16.xpose.msra.mxu0 0
    %2463 = vmatprep.subr.bf16.mxu0 0
    %2464 = vmatpush1.bf16.xpose.msra.mxu0 0
    %2465 = vmatprep.subr.bf16.mxu0 0
    %2466 = vmatpush1.bf16.xpose.msra.mxu0 0
    %2467 = vmatprep.subr.bf16.mxu0 0
    %2468 = vmatpush1.bf16.xpose.msra.mxu0 0
    %2469 = vmatprep.subr.bf16.mxu0 0
    %2470 = vmatpush1.bf16.xpose.msra.mxu0 0
    %2471 = vmatprep.subr.bf16.mxu0 0
    %2472 = vmatpush1.bf16.xpose.msra.mxu0 0
    %2473 = vmatprep.subr.bf16.mxu0 0
    %2474 = vmatpush1.bf16.xpose.msra.mxu0 0
    %2475 = vmatprep.subr.bf16.mxu0 0
    %2476 = vmatpush1.bf16.xpose.msra.mxu0 0
    %2477 = vmatprep.subr.bf16.mxu0 0
    %2478 = vmatpush1.bf16.xpose.msra.mxu0 0
    %2479 = vmatprep.subr.bf16.mxu0 0
    %2480 = vmatpush1.bf16.xpose.msra.mxu0 0
    %2481 = vmatprep.subr.bf16.mxu0 0
    %2482 = vmatpush1.bf16.xpose.msra.mxu0 0
    %2483 = vmatprep.mubr.bf16.mxu0 0
    %2484 = vmatmul.mubr.bf16.gmra.mrb[0].mxu0 %v2446
    %v2485 = vpop.f32.mrb[0].mxu0
    %v2486 = vadd.f32 0.0, %v2485
    %v2487 = vpop.f32.mrb[0].mxu0
    %v2488 = vpop.f32.mrb[0].mxu0
    %v2489 = vpop.f32.mrb[0].mxu0
    %2490 = vdwg.mxu0
    %v2491 = vmul.f32 %v2436, 0.35355338
    %v2492 = vmul.f32 %v2486, 0.35355338
    %v2493 = vsel %vm185, %v2491, -inf
    %2494 = vmax.xlane.f32.xlu0 %v2493
    %v2495 = vpop.xlane.xlu0 %2494
    %v2496 = vsel %vm185, %v2492, -inf
    %2497 = vmax.xlane.f32.xlu0 %v2496
    %v2498 = vpop.xlane.xlu0 %2497
    %v2499 = vsub.f32 %v2491, %v2495
    %v2500 = vsub.f32 %v2492, %v2498
    %v2501 = vmul.f32 %v2499, 1.442695
    %v2502 = vpow.pop %v2501
    %v2503 = vmul.f32 %v2500, 1.442695
    %v2504 = vpow.pop %v2503
    %v2505 = vsel %vm185, %v2502, 0.0
    %2506 = vadd.xlane.f32.xlu0 %v2505
    %v2507 = vpop.xlane.xlu0 %2506
    %v2508 = vsel %vm185, %v2504, 0.0
    %2509 = vadd.xlane.f32.xlu0 %v2508
    %v2510 = vpop.xlane.xlu0 %2509
    %v2511 = vrcp.pop %v2507
    %v2512 = vrcp.pop %v2510
    %v2513 = vmul.f32 %v2502, %v2511
    %v2514 = vmul.f32 %v2504, %v2512
    %v2515 = vpack.c.bf16 %v2513, %v2513
    %v2516 = vpack.c.bf16 %v2514, %v2514
    %2517 = vrot.lane.b32.xlu0 %v1576, 40
    %v2518 = vpop.permute.xlu0 %2517
    %v2520 = vsel %vm185, %v2515, 0
    %v2523 = vsel %vm312, %v2518, 0
    %2525 = vmatprep.subr.bf16.mxu0 0
    %2526 = vmatpush1.bf16.msra.mxu0 %v2523
    %2527 = vmatprep.subr.bf16.mxu0 0
    %2528 = vmatpush1.bf16.msra.mxu0 0
    %2529 = vmatprep.subr.bf16.mxu0 0
    %2530 = vmatpush1.bf16.msra.mxu0 0
    %2531 = vmatprep.subr.bf16.mxu0 0
    %2532 = vmatpush1.bf16.msra.mxu0 0
    %2533 = vmatprep.subr.bf16.mxu0 0
    %2534 = vmatpush1.bf16.msra.mxu0 0
    %2535 = vmatprep.subr.bf16.mxu0 0
    %2536 = vmatpush1.bf16.msra.mxu0 0
    %2537 = vmatprep.subr.bf16.mxu0 0
    %2538 = vmatpush1.bf16.msra.mxu0 0
    %2539 = vmatprep.subr.bf16.mxu0 0
    %2540 = vmatpush1.bf16.msra.mxu0 0
    %2541 = vmatprep.subr.bf16.mxu0 0
    %2542 = vmatpush1.bf16.msra.mxu0 0
    %2543 = vmatprep.subr.bf16.mxu0 0
    %2544 = vmatpush1.bf16.msra.mxu0 0
    %2545 = vmatprep.subr.bf16.mxu0 0
    %2546 = vmatpush1.bf16.msra.mxu0 0
    %2547 = vmatprep.subr.bf16.mxu0 0
    %2548 = vmatpush1.bf16.msra.mxu0 0
    %2549 = vmatprep.subr.bf16.mxu0 0
    %2550 = vmatpush1.bf16.msra.mxu0 0
    %2551 = vmatprep.subr.bf16.mxu0 0
    %2552 = vmatpush1.bf16.msra.mxu0 0
    %2553 = vmatprep.subr.bf16.mxu0 0
    %2554 = vmatpush1.bf16.msra.mxu0 0
    %2555 = vmatprep.subr.bf16.mxu0 0
    %2556 = vmatpush1.bf16.msra.mxu0 0
    %2557 = vmatprep.mubr.bf16.mxu0 0
    %2558 = vmatmul.mubr.bf16.gmra.mrb[0].mxu0 %v2520
    %v2559 = vpop.f32.mrb[0].mxu0
    %v2560 = vadd.f32 0.0, %v2559
    %v2561 = vpop.f32.mrb[0].mxu0
    %v2562 = vpop.f32.mrb[0].mxu0
    %v2563 = vpop.f32.mrb[0].mxu0
    %2564 = vdwg.mxu0
    %2565 = vrot.lane.b32.xlu0 %v1577, 40
    %v2566 = vpop.permute.xlu0 %2565
    %v2568 = vsel %vm185, %v2516, 0
    %v2571 = vsel %vm312, %v2566, 0
    %2573 = vmatprep.subr.bf16.mxu0 0
    %2574 = vmatpush1.bf16.msra.mxu0 %v2571
    %2575 = vmatprep.subr.bf16.mxu0 0
    %2576 = vmatpush1.bf16.msra.mxu0 0
    %2577 = vmatprep.subr.bf16.mxu0 0
    %2578 = vmatpush1.bf16.msra.mxu0 0
    %2579 = vmatprep.subr.bf16.mxu0 0
    %2580 = vmatpush1.bf16.msra.mxu0 0
    %2581 = vmatprep.subr.bf16.mxu0 0
    %2582 = vmatpush1.bf16.msra.mxu0 0
    %2583 = vmatprep.subr.bf16.mxu0 0
    %2584 = vmatpush1.bf16.msra.mxu0 0
    %2585 = vmatprep.subr.bf16.mxu0 0
    %2586 = vmatpush1.bf16.msra.mxu0 0
    %2587 = vmatprep.subr.bf16.mxu0 0
    %2588 = vmatpush1.bf16.msra.mxu0 0
    %2589 = vmatprep.subr.bf16.mxu0 0
    %2590 = vmatpush1.bf16.msra.mxu0 0
    %2591 = vmatprep.subr.bf16.mxu0 0
    %2592 = vmatpush1.bf16.msra.mxu0 0
    %2593 = vmatprep.subr.bf16.mxu0 0
    %2594 = vmatpush1.bf16.msra.mxu0 0
    %2595 = vmatprep.subr.bf16.mxu0 0
    %2596 = vmatpush1.bf16.msra.mxu0 0
    %2597 = vmatprep.subr.bf16.mxu0 0
    %2598 = vmatpush1.bf16.msra.mxu0 0
    %2599 = vmatprep.subr.bf16.mxu0 0
    %2600 = vmatpush1.bf16.msra.mxu0 0
    %2601 = vmatprep.subr.bf16.mxu0 0
    %2602 = vmatpush1.bf16.msra.mxu0 0
    %2603 = vmatprep.subr.bf16.mxu0 0
    %2604 = vmatpush1.bf16.msra.mxu0 0
    %2605 = vmatprep.mubr.bf16.mxu0 0
    %2606 = vmatmul.mubr.bf16.gmra.mrb[0].mxu0 %v2568
    %v2607 = vpop.f32.mrb[0].mxu0
    %v2608 = vadd.f32 0.0, %v2607
    %v2609 = vpop.f32.mrb[0].mxu0
    %v2610 = vpop.f32.mrb[0].mxu0
    %v2611 = vpop.f32.mrb[0].mxu0
    %2612 = vdwg.mxu0
    %v2613 = vpack.c.bf16 %v2608, %v2560
    %v2614 = vpack.c.bf16 %v1515, %v1515
    %v2616 = vsel %vm185, %v2613, 0
    %v2619 = vsel %vm312, %v2614, 0
    %2621 = vmatprep.subr.bf16.mxu0 0
    %2622 = vmatpush1.bf16.msra.mxu0 %v2619
    %2623 = vmatprep.subr.bf16.mxu0 0
    %2624 = vmatpush1.bf16.msra.mxu0 0
    %2625 = vmatprep.subr.bf16.mxu0 0
    %2626 = vmatpush1.bf16.msra.mxu0 0
    %2627 = vmatprep.subr.bf16.mxu0 0
    %2628 = vmatpush1.bf16.msra.mxu0 0
    %2629 = vmatprep.subr.bf16.mxu0 0
    %2630 = vmatpush1.bf16.msra.mxu0 0
    %2631 = vmatprep.subr.bf16.mxu0 0
    %2632 = vmatpush1.bf16.msra.mxu0 0
    %2633 = vmatprep.subr.bf16.mxu0 0
    %2634 = vmatpush1.bf16.msra.mxu0 0
    %2635 = vmatprep.subr.bf16.mxu0 0
    %2636 = vmatpush1.bf16.msra.mxu0 0
    %2637 = vmatprep.subr.bf16.mxu0 0
    %2638 = vmatpush1.bf16.msra.mxu0 0
    %2639 = vmatprep.subr.bf16.mxu0 0
    %2640 = vmatpush1.bf16.msra.mxu0 0
    %2641 = vmatprep.subr.bf16.mxu0 0
    %2642 = vmatpush1.bf16.msra.mxu0 0
    %2643 = vmatprep.subr.bf16.mxu0 0
    %2644 = vmatpush1.bf16.msra.mxu0 0
    %2645 = vmatprep.subr.bf16.mxu0 0
    %2646 = vmatpush1.bf16.msra.mxu0 0
    %2647 = vmatprep.subr.bf16.mxu0 0
    %2648 = vmatpush1.bf16.msra.mxu0 0
    %2649 = vmatprep.subr.bf16.mxu0 0
    %2650 = vmatpush1.bf16.msra.mxu0 0
    %2651 = vmatprep.subr.bf16.mxu0 0
    %2652 = vmatpush1.bf16.msra.mxu0 0
    %2653 = vmatprep.mubr.bf16.mxu0 0
    %2654 = vmatmul.mubr.bf16.gmra.mrb[0].mxu0 %v2616
    %v2655 = vpop.f32.mrb[0].mxu0
    %v2656 = vadd.f32 0.0, %v2655
    %v2657 = vpop.f32.mrb[0].mxu0
    %v2658 = vpop.f32.mrb[0].mxu0
    %v2659 = vadd.f32 0.0, %v2658
    %v2660 = vpop.f32.mrb[0].mxu0
    %2661 = vdwg.mxu0
    %v2662 = vadd.f32 %v2389, %v2656
    %v2663 = vadd.f32 %v2390, %v2659
    %s2664 = scalar_lea.vmem %s5, 1
    %v2665 = vld [vmem:[%s2664] sm:$0x1]
    %v2667 = vlaneseq
    %v2668 = vshrl.u32 %v2667, 7
    %v2669 = vsub.s32 0, %v2668
    %v2670 = vrot.slane %v2665, %v2669
    %v2672 = vadd.f32 %v2662, %v2670
    %v2673 = vadd.f32 %v2663, %v2670
    %v2674 = vadd.f32 %v1495, %v2672
    %v2675 = vadd.f32 %v1496, %v2673
    %s2676 = scalar_lea.vmem %s6, 1
    %v2677 = vld [vmem:[%s2676] sm:$0x1]
    %s2678 = scalar_lea.vmem %s7, 1
    %v2679 = vld [vmem:[%s2678] sm:$0x1]
    %v2680 = vsel %vm135, %v2674, 0.0
    %2681 = vadd.xlane.f32.xlu0 %v2680
    %v2682 = vpop.xlane.xlu0 %2681
    %v2683 = vsel %vm135, %v2675, 0.0
    %2684 = vadd.xlane.f32.xlu0 %v2683
    %v2685 = vpop.xlane.xlu0 %2684
    %v2686 = vmul.f32 %v2682, %v1289
    %v2687 = vmul.f32 %v2685, %v1289
    %v2688 = vsub.f32 %v2674, %v2686
    %v2689 = vsub.f32 %v2675, %v2687
    %v2690 = vmul.f32 %v2688, %v2688
    %v2691 = vmul.f32 %v2689, %v2689
    %v2692 = vsel %vm135, %v2690, 0.0
    %2693 = vadd.xlane.f32.xlu0 %v2692
    %v2694 = vpop.xlane.xlu0 %2693
    %v2695 = vsel %vm135, %v2691, 0.0
    %2696 = vadd.xlane.f32.xlu0 %v2695
    %v2697 = vpop.xlane.xlu0 %2696
    %v2698 = vmul.f32 %v2694, %v1289
    %v2699 = vmul.f32 %v2697, %v1289
    %v2700 = vadd.f32 %v2698, 1e-05
    %v2701 = vadd.f32 %v2699, 1e-05
    %v2702 = vrsqrt.pop %v2700
    %v2703 = vrsqrt.pop %v2701
    %v2704 = vmul.f32 %v2688, %v2702
    %v2705 = vmul.f32 %v2689, %v2703
    %v2707 = vlaneseq
    %v2708 = vshrl.u32 %v2707, 7
    %v2709 = vsub.s32 0, %v2708
    %v2710 = vrot.slane %v2677, %v2709
    %v2712 = vmul.f32 %v2704, %v2710
    %v2713 = vmul.f32 %v2705, %v2710
    %v2715 = vlaneseq
    %v2716 = vshrl.u32 %v2715, 7
    %v2717 = vsub.s32 0, %v2716
    %v2718 = vrot.slane %v2679, %v2717
    %v2720 = vadd.f32 %v2712, %v2718
    %v2721 = vadd.f32 %v2713, %v2718
    %s2722 = scalar_lea.vmem %s8, 32
    %v2723 = vld [vmem:[%s2722] sm:$0xff]
    %v2724 = vld [vmem:[%s2722 + $0x8] sm:$0xff]
    %v2725 = vld [vmem:[%s2722 + $0x10] sm:$0xff]
    %v2726 = vld [vmem:[%s2722 + $0x18] sm:$0xff]
    %v2727 = vpack.c.bf16 %v2721, %v2720
    %v2728 = vpack.c.bf16 %v2724, %v2723
    %v2729 = vpack.c.bf16 %v2726, %v2725
    %s2730 = scalar_lea.vmem [#allocation2], 1
    %v2731 = vld [vmem:[%s2730] sm:$0x1]
    %v2733 = vlaneseq
    %v2734 = vshrl.u32 %v2733, 7
    %v2735 = vsub.s32 0, %v2734
    %v2736 = vrot.slane %v2731, %v2735
    %v2739 = vsel %vm135, %v2727, 0
    %2741 = vmatprep.subr.bf16.mxu0 0
    %2742 = vmatpush1.bf16.msra.mxu0 %v2728
    %2743 = vmatprep.subr.bf16.mxu0 0
    %2744 = vmatpush1.bf16.msra.mxu0 %v2729
    %2745 = vmatprep.subr.bf16.mxu0 0
    %2746 = vmatpush1.bf16.msra.mxu0 0
    %2747 = vmatprep.subr.bf16.mxu0 0
    %2748 = vmatpush1.bf16.msra.mxu0 0
    %2749 = vmatprep.subr.bf16.mxu0 0
    %2750 = vmatpush1.bf16.msra.mxu0 0
    %2751 = vmatprep.subr.bf16.mxu0 0
    %2752 = vmatpush1.bf16.msra.mxu0 0
    %2753 = vmatprep.subr.bf16.mxu0 0
    %2754 = vmatpush1.bf16.msra.mxu0 0
    %2755 = vmatprep.subr.bf16.mxu0 0
    %2756 = vmatpush1.bf16.msra.mxu0 0
    %2757 = vmatprep.subr.bf16.mxu0 0
    %2758 = vmatpush1.bf16.msra.mxu0 0
    %2759 = vmatprep.subr.bf16.mxu0 0
    %2760 = vmatpush1.bf16.msra.mxu0 0
    %2761 = vmatprep.subr.bf16.mxu0 0
    %2762 = vmatpush1.bf16.msra.mxu0 0
    %2763 = vmatprep.subr.bf16.mxu0 0
    %2764 = vmatpush1.bf16.msra.mxu0 0
    %2765 = vmatprep.subr.bf16.mxu0 0
    %2766 = vmatpush1.bf16.msra.mxu0 0
    %2767 = vmatprep.subr.bf16.mxu0 0
    %2768 = vmatpush1.bf16.msra.mxu0 0
    %2769 = vmatprep.subr.bf16.mxu0 0
    %2770 = vmatpush1.bf16.msra.mxu0 0
    %2771 = vmatprep.subr.bf16.mxu0 0
    %2772 = vmatpush1.bf16.msra.mxu0 0
    %2773 = vmatprep.mubr.bf16.mxu0 0
    %2774 = vmatmul.mubr.bf16.gmra.mrb[0].mxu0 %v2739
    %v2775 = vpop.f32.mrb[0].mxu0
    %v2776 = vadd.f32 %v2736, %v2775
    %v2777 = vpop.f32.mrb[0].mxu0
    %v2778 = vpop.f32.mrb[0].mxu0
    %v2779 = vadd.f32 %v2736, %v2778
    %v2780 = vpop.f32.mrb[0].mxu0
    %2781 = vdwg.mxu0
    %v2782 = vmax.f32 %v2776, 0.0
    %v2783 = vmax.f32 %v2779, 0.0
    %s2784 = scalar_lea.vmem %s10, 64
    %v2785 = vld [vmem:[%s2784] sm:$0xff]
    %v2786 = vld [vmem:[%s2784 + $0x8] sm:$0xff]
    %v2787 = vld [vmem:[%s2784 + $0x10] sm:$0xff]
    %v2788 = vld [vmem:[%s2784 + $0x18] sm:$0xff]
    %v2789 = vld [vmem:[%s2784 + $0x20] sm:$0xff]
    %v2790 = vld [vmem:[%s2784 + $0x28] sm:$0xff]
    %v2791 = vld [vmem:[%s2784 + $0x30] sm:$0xff]
    %v2792 = vld [vmem:[%s2784 + $0x38] sm:$0xff]
    %v2793 = vpack.c.bf16 %v2783, %v2782
    %v2794 = vpack.c.bf16 %v2786, %v2785
    %v2795 = vpack.c.bf16 %v2788, %v2787
    %v2796 = vpack.c.bf16 %v2790, %v2789
    %v2797 = vpack.c.bf16 %v2792, %v2791
    %s2798 = scalar_lea.vmem [#allocation5], 1
    %v2799 = vld [vmem:[%s2798] sm:$0x1]
    %v2801 = vlaneseq
    %v2802 = vshrl.u32 %v2801, 7
    %v2803 = vsub.s32 0, %v2802
    %v2804 = vrot.slane %v2799, %v2803
    %v2807 = vsel %vm1406, %v2793, 0
    %2809 = vmatprep.subr.bf16.mxu0 0
    %2810 = vmatpush1.bf16.msra.mxu0 %v2794
    %2811 = vmatprep.subr.bf16.mxu0 0
    %2812 = vmatpush1.bf16.msra.mxu0 %v2795
    %2813 = vmatprep.subr.bf16.mxu0 0
    %2814 = vmatpush1.bf16.msra.mxu0 %v2796
    %2815 = vmatprep.subr.bf16.mxu0 0
    %2816 = vmatpush1.bf16.msra.mxu0 %v2797
    %2817 = vmatprep.subr.bf16.mxu0 0
    %2818 = vmatpush1.bf16.msra.mxu0 0
    %2819 = vmatprep.subr.bf16.mxu0 0
    %2820 = vmatpush1.bf16.msra.mxu0 0
    %2821 = vmatprep.subr.bf16.mxu0 0
    %2822 = vmatpush1.bf16.msra.mxu0 0
    %2823 = vmatprep.subr.bf16.mxu0 0
    %2824 = vmatpush1.bf16.msra.mxu0 0
    %2825 = vmatprep.subr.bf16.mxu0 0
    %2826 = vmatpush1.bf16.msra.mxu0 0
    %2827 = vmatprep.subr.bf16.mxu0 0
    %2828 = vmatpush1.bf16.msra.mxu0 0
    %2829 = vmatprep.subr.bf16.mxu0 0
    %2830 = vmatpush1.bf16.msra.mxu0 0
    %2831 = vmatprep.subr.bf16.mxu0 0
    %2832 = vmatpush1.bf16.msra.mxu0 0
    %2833 = vmatprep.subr.bf16.mxu0 0
    %2834 = vmatpush1.bf16.msra.mxu0 0
    %2835 = vmatprep.subr.bf16.mxu0 0
    %2836 = vmatpush1.bf16.msra.mxu0 0
    %2837 = vmatprep.subr.bf16.mxu0 0
    %2838 = vmatpush1.bf16.msra.mxu0 0
    %2839 = vmatprep.subr.bf16.mxu0 0
    %2840 = vmatpush1.bf16.msra.mxu0 0
    %2841 = vmatprep.mubr.bf16.mxu0 0
    %2842 = vmatmul.mubr.bf16.gmra.mrb[0].mxu0 %v2807
    %v2843 = vpop.f32.mrb[0].mxu0
    %v2844 = vadd.f32 %v2804, %v2843
    %v2845 = vpop.f32.mrb[0].mxu0
    %v2846 = vpop.f32.mrb[0].mxu0
    %v2847 = vadd.f32 %v2804, %v2846
    %v2848 = vpop.f32.mrb[0].mxu0
    %2849 = vdwg.mxu0
    %v2850 = vadd.f32 %v2720, %v2844
    %v2851 = vadd.f32 %v2721, %v2847
    %s2852 = scalar_lea.vmem %s12, 1
    %v2853 = vld [vmem:[%s2852] sm:$0x1]
    %s2854 = scalar_lea.vmem %s13, 1
    %v2855 = vld [vmem:[%s2854] sm:$0x1]
    %v2856 = vsel %vm135, %v2850, 0.0
    %2857 = vadd.xlane.f32.xlu0 %v2856
    %v2858 = vpop.xlane.xlu0 %2857
    %v2859 = vsel %vm135, %v2851, 0.0
    %2860 = vadd.xlane.f32.xlu0 %v2859
    %v2861 = vpop.xlane.xlu0 %2860
    %v2862 = vmul.f32 %v2858, %v1289
    %v2863 = vmul.f32 %v2861, %v1289
    %v2864 = vsub.f32 %v2850, %v2862
    %v2865 = vsub.f32 %v2851, %v2863
    %v2866 = vmul.f32 %v2864, %v2864
    %v2867 = vmul.f32 %v2865, %v2865
    %v2868 = vsel %vm135, %v2866, 0.0
    %2869 = vadd.xlane.f32.xlu0 %v2868
    %v2870 = vpop.xlane.xlu0 %2869
    %v2871 = vsel %vm135, %v2867, 0.0
    %2872 = vadd.xlane.f32.xlu0 %v2871
    %v2873 = vpop.xlane.xlu0 %2872
    %v2874 = vmul.f32 %v2870, %v1289
    %v2875 = vmul.f32 %v2873, %v1289
    %v2876 = vadd.f32 %v2874, 1e-05
    %v2877 = vadd.f32 %v2875, 1e-05
    %v2878 = vrsqrt.pop %v2876
    %v2879 = vrsqrt.pop %v2877
    %v2880 = vmul.f32 %v2864, %v2878
    %v2881 = vmul.f32 %v2865, %v2879
    %v2883 = vlaneseq
    %v2884 = vshrl.u32 %v2883, 7
    %v2885 = vsub.s32 0, %v2884
    %v2886 = vrot.slane %v2853, %v2885
    %v2888 = vmul.f32 %v2880, %v2886
    %v2889 = vmul.f32 %v2881, %v2886
    %v2891 = vlaneseq
    %v2892 = vshrl.u32 %v2891, 7
    %v2893 = vsub.s32 0, %v2892
    %v2894 = vrot.slane %v2855, %v2893
    %v2896 = vadd.f32 %v2888, %v2894
    %v2897 = vadd.f32 %v2889, %v2894
    %v2898 = vsel %vm135, %v2896, 0.0
    %v2899 = vrot.slane %v2898, 4
    %v2900 = vadd.f32 %v2898, %v2899
    %v2901 = vrot.slane %v2900, 2
    %v2902 = vadd.f32 %v2900, %v2901
    %v2903 = vrot.slane %v2902, 1
    %v2904 = vadd.f32 %v2902, %v2903
    %v2905 = vsel %vm135, %v2897, 0.0
    %v2906 = vrot.slane %v2905, 4
    %v2907 = vadd.f32 %v2905, %v2906
    %v2908 = vrot.slane %v2907, 2
    %v2909 = vadd.f32 %v2907, %v2908
    %v2910 = vrot.slane %v2909, 1
    %v2911 = vadd.f32 %v2909, %v2910
    %vm2914 = vcmask 1041409
    %v2915 = vsel %vm2914, %v1510, %v1503
    %v2919 = vsel %vm2914, %v2911, %v2904
    %2920 = vrot.lane.b32.xlu0 %v2919, 32
    %v2921 = vpop.permute.xlu0 %2920
    %v2923 = vsel %vm135, %v2915, %v2921
    %v2924 = vld [vmem:[#allocation7] sm:$0xff]
    %v2925 = vld [vmem:[#allocation7 + $0x8] sm:$0xff]
    %v2926 = vld [vmem:[#allocation7 + $0x10] sm:$0xff]
    %v2927 = vld [vmem:[#allocation7 + $0x18] sm:$0xff]
    %v2928 = vld [vmem:[#allocation7 + $0x20] sm:$0xff]
    %v2929 = vld [vmem:[#allocation7 + $0x28] sm:$0xff]
    %v2930 = vld [vmem:[#allocation7 + $0x30] sm:$0xff]
    %v2931 = vld [vmem:[#allocation7 + $0x38] sm:$0xff]
    %v2932 = vpack.c.bf16 %v2923, %v2923
    %v2933 = vpack.c.bf16 %v2925, %v2924
    %v2934 = vpack.c.bf16 %v2927, %v2926
    %v2935 = vpack.c.bf16 %v2929, %v2928
    %v2936 = vpack.c.bf16 %v2931, %v2930
    %v2937 = vld [vmem:[%s15] sm:$0x1]
    %v2939 = vlaneseq
    %v2940 = vshrl.u32 %v2939, 7
    %v2941 = vsub.s32 0, %v2940
    %v2942 = vrot.slane %v2937, %v2941
    %v2945 = vsel %vm1406, %v2932, 0
    %2947 = vmatprep.subr.bf16.mxu0 0
    %2948 = vmatpush1.bf16.msra.mxu0 %v2933
    %2949 = vmatprep.subr.bf16.mxu0 0
    %2950 = vmatpush1.bf16.msra.mxu0 %v2934
    %2951 = vmatprep.subr.bf16.mxu0 0
    %2952 = vmatpush1.bf16.msra.mxu0 %v2935
    %2953 = vmatprep.subr.bf16.mxu0 0
    %2954 = vmatpush1.bf16.msra.mxu0 %v2936
    %2955 = vmatprep.subr.bf16.mxu0 0
    %2956 = vmatpush1.bf16.msra.mxu0 0
    %2957 = vmatprep.subr.bf16.mxu0 0
    %2958 = vmatpush1.bf16.msra.mxu0 0
    %2959 = vmatprep.subr.bf16.mxu0 0
    %2960 = vmatpush1.bf16.msra.mxu0 0
    %2961 = vmatprep.subr.bf16.mxu0 0
    %2962 = vmatpush1.bf16.msra.mxu0 0
    %2963 = vmatprep.subr.bf16.mxu0 0
    %2964 = vmatpush1.bf16.msra.mxu0 0
    %2965 = vmatprep.subr.bf16.mxu0 0
    %2966 = vmatpush1.bf16.msra.mxu0 0
    %2967 = vmatprep.subr.bf16.mxu0 0
    %2968 = vmatpush1.bf16.msra.mxu0 0
    %2969 = vmatprep.subr.bf16.mxu0 0
    %2970 = vmatpush1.bf16.msra.mxu0 0
    %2971 = vmatprep.subr.bf16.mxu0 0
    %2972 = vmatpush1.bf16.msra.mxu0 0
    %2973 = vmatprep.subr.bf16.mxu0 0
    %2974 = vmatpush1.bf16.msra.mxu0 0
    %2975 = vmatprep.subr.bf16.mxu0 0
    %2976 = vmatpush1.bf16.msra.mxu0 0
    %2977 = vmatprep.subr.bf16.mxu0 0
    %2978 = vmatpush1.bf16.msra.mxu0 0
    %2979 = vmatprep.mubr.bf16.mxu0 0
    %2980 = vmatmul.mubr.bf16.gmra.mrb[0].mxu0 %v2945
    %v2981 = vpop.f32.mrb[0].mxu0
    %v2982 = vadd.f32 %v2942, %v2981
    %v2983 = vpop.f32.mrb[0].mxu0
    %v2984 = vpop.f32.mrb[0].mxu0
    %v2985 = vpop.f32.mrb[0].mxu0
    %2986 = vdwg.mxu0
    %v2987 = vmax.f32 %v2982, 0.0
    %v2988 = vld [vmem:[%s16] sm:$0xff]
    %v2989 = vld [vmem:[%s16 + $0x8] sm:$0xff]
    %v2990 = vld [vmem:[%s16 + $0x10] sm:$0xff]
    %v2991 = vld [vmem:[%s16 + $0x18] sm:$0xff]
    %v2992 = vld [vmem:[%s16 + $0x20] sm:$0xff]
    %v2993 = vld [vmem:[%s16 + $0x28] sm:$0xff]
    %v2994 = vld [vmem:[%s16 + $0x30] sm:$0xff]
    %v2995 = vld [vmem:[%s16 + $0x38] sm:$0xff]
    %v2996 = vpack.c.bf16 %v2987, %v2987
    %v2997 = vpack.c.bf16 %v2989, %v2988
    %v2998 = vpack.c.bf16 %v2991, %v2990
    %v2999 = vpack.c.bf16 %v2993, %v2992
    %v3000 = vpack.c.bf16 %v2995, %v2994
    %v3001 = vld [vmem:[%s17] sm:$0x1]
    %v3003 = vlaneseq
    %v3004 = vshrl.u32 %v3003, 7
    %v3005 = vsub.s32 0, %v3004
    %v3006 = vrot.slane %v3001, %v3005
    %v3009 = vsel %vm1406, %v2996, 0
    %3011 = vmatprep.subr.bf16.mxu0 0
    %3012 = vmatpush1.bf16.msra.mxu0 %v2997
    %3013 = vmatprep.subr.bf16.mxu0 0
    %3014 = vmatpush1.bf16.msra.mxu0 %v2998
    %3015 = vmatprep.subr.bf16.mxu0 0
    %3016 = vmatpush1.bf16.msra.mxu0 %v2999
    %3017 = vmatprep.subr.bf16.mxu0 0
    %3018 = vmatpush1.bf16.msra.mxu0 %v3000
    %3019 = vmatprep.subr.bf16.mxu0 0
    %3020 = vmatpush1.bf16.msra.mxu0 0
    %3021 = vmatprep.subr.bf16.mxu0 0
    %3022 = vmatpush1.bf16.msra.mxu0 0
    %3023 = vmatprep.subr.bf16.mxu0 0
    %3024 = vmatpush1.bf16.msra.mxu0 0
    %3025 = vmatprep.subr.bf16.mxu0 0
    %3026 = vmatpush1.bf16.msra.mxu0 0
    %3027 = vmatprep.subr.bf16.mxu0 0
    %3028 = vmatpush1.bf16.msra.mxu0 0
    %3029 = vmatprep.subr.bf16.mxu0 0
    %3030 = vmatpush1.bf16.msra.mxu0 0
    %3031 = vmatprep.subr.bf16.mxu0 0
    %3032 = vmatpush1.bf16.msra.mxu0 0
    %3033 = vmatprep.subr.bf16.mxu0 0
    %3034 = vmatpush1.bf16.msra.mxu0 0
    %3035 = vmatprep.subr.bf16.mxu0 0
    %3036 = vmatpush1.bf16.msra.mxu0 0
    %3037 = vmatprep.subr.bf16.mxu0 0
    %3038 = vmatpush1.bf16.msra.mxu0 0
    %3039 = vmatprep.subr.bf16.mxu0 0
    %3040 = vmatpush1.bf16.msra.mxu0 0
    %3041 = vmatprep.subr.bf16.mxu0 0
    %3042 = vmatpush1.bf16.msra.mxu0 0
    %3043 = vmatprep.mubr.bf16.mxu0 0
    %3044 = vmatmul.mubr.bf16.gmra.mrb[0].mxu0 %v3009
    %v3045 = vpop.f32.mrb[0].mxu0
    %v3046 = vadd.f32 %v3006, %v3045
    %v3047 = vpop.f32.mrb[0].mxu0
    %v3048 = vpop.f32.mrb[0].mxu0
    %v3049 = vpop.f32.mrb[0].mxu0
    %3050 = vdwg.mxu0
    %vm3051 = vcmask 58368
    %3052 = vst.msk [vmem:[#allocation8] sm:$0x3] %vm3051, %v3046
    // Predicated region
    $region86: #{global_transform_v2_forward.1} parent=1 // pred_check
      _
    $region87: #{global_transform_v2_forward.1} parent=1 // pred_check_branch
      %3054 = sbr.rel (0) target = $region89
    $region88: #{global_transform_v2_forward.1} parent=1 // pred_region
      %s3056 = ssub.s32 32, 32
      %3057 = vsyncadd [#allocation4], %s3056
      %s3059 = sshll.u32 [#allocation8], 4
      %s3060 = int_to_ptr.vmem [resolvable:$true] %s3059
      %3062 = dma.vmem_to_hbm [thread:$0]  %s3060, 32, %s18, [#allocation4]
    $region89: #{global_transform_v2_forward.1} parent=1 // pred_fallthru
      _
    // Predicated region
    $region90: #{global_transform_v2_forward.1} parent=1 // pred_check
      _
    $region91: #{global_transform_v2_forward.1} parent=1 // pred_check_branch
      %3064 = sbr.rel (0) target = $region93
    $region92: #{global_transform_v2_forward.1} parent=1 // pred_region
      %3065 = dma.done [#allocation4], 32
    $region93: #{global_transform_v2_forward.1} parent=1 // pred_fallthru
      _
    %3066 = vsyncpa [#allocation3], 1
    %3067 = vsyncpa [#allocation6], 1
    %3068 = vsyncpa [#allocation4], 1

</llo_original>
